<compile_context>
chip_gen: v7x
topology: tpu7x:2x2x1
jax: 0.10.0
libtpu: 0.0.40
codegen_flags: <defaults>
</compile_context>

<pallas_src>
import math

import numpy as np
import jax
import jax.numpy as jnp
from jax.experimental import pallas as pl
from jax.experimental.pallas import tpu as pltpu

NEG_INF = -1e9   # large finite negative: avoids NaN for fully-masked rows


# --------------------------------------------------------------------------
# Shared helpers
# --------------------------------------------------------------------------
def _layer_norm(x, gamma, beta, eps=1e-5):
    mu = jnp.mean(x, axis=-1, keepdims=True)
    xc = x - mu
    var = jnp.mean(xc * xc, axis=-1, keepdims=True)
    return xc * jax.lax.rsqrt(var + eps) * gamma + beta


# --------------------------------------------------------------------------
# Pallas kernel: full TransformerEncoder + fused classifier heads
# --------------------------------------------------------------------------
def make_encoder_kernel(Bb, S, D, H, Cp):
    """grid = (nb, L).  Carried activation lives in a VMEM scratch (resident
    across the layer axis); the HBM output is the fused classifier logits,
    written once on the last layer."""
    hd = D // H
    dn_score = (((2,), (2,)), ((0,), (0,)))   # (Bb,S,hd) x (Bb,S,hd) -> (Bb,S,S)
    dn_pv = (((2,), (1,)), ((0,), (0,)))      # (Bb,S,S)  x (Bb,S,hd) -> (Bb,S,hd)

    def kernel(src_ref, pad_ref, causal_ref,
               wqkv_ref, bqkv_ref, wo_ref, ob_ref,
               n1w_ref, n1b_ref, n2w_ref, n2b_ref,
               l1w_ref, l1b_ref, l2w_ref, l2b_ref,
               encw_ref, encb_ref, clsw_ref, clsb_ref,
               out_ref, act_ref):
        l = pl.program_id(1)
        last = pl.num_programs(1) - 1

        # Initialize the carried activation from the embedded source.
        @pl.when(l == 0)
        def _():
            act_ref[...] = src_ref[...]

        x = act_ref[...]                                      # (Bb, S, D) f32

        # ---------------- self attention ------------------------------------
        # fused QKV projection: one K=D, N=3D MXU call (scale folded into Wq,bq)
        x2 = x.reshape(Bb * S, D).astype(jnp.bfloat16)
        qkv = jnp.dot(x2, wqkv_ref[0],
                      preferred_element_type=jnp.float32) + bqkv_ref[0]
        qkv = qkv.reshape(Bb, S, 3 * D)                       # (Bb, S, 3D) f32

        # causal + key-padding additive bias (layer-invariant causal input)
        bias = causal_ref[...] + pad_ref[...]                 # (Bb, S, S) f32

        ctx = []
        for h in range(H):                                    # static loop over heads
            qh = qkv[:, :, h * hd:(h + 1) * hd]
            kh = qkv[:, :, D + h * hd:D + (h + 1) * hd]
            vh = qkv[:, :, 2 * D + h * hd:2 * D + (h + 1) * hd]

            s = jax.lax.dot_general(qh.astype(jnp.bfloat16), kh.astype(jnp.bfloat16),
                                    dn_score, preferred_element_type=jnp.float32)
            s = s + bias
            # softmax in f32; divide goes to the EUP via approximate reciprocal
            m = jnp.max(s, axis=-1, keepdims=True)
            p = jnp.exp(s - m)
            denom = jnp.sum(p, axis=-1, keepdims=True)
            p = p * pl.reciprocal(denom, approx=True)

            ctx.append(jax.lax.dot_general(p.astype(jnp.bfloat16),
                                           vh.astype(jnp.bfloat16),
                                           dn_pv, preferred_element_type=jnp.float32))

        # concat heads -> single K=D out-projection
        ctx = jnp.concatenate(ctx, axis=-1)                   # (Bb, S, D) f32
        attn = jnp.dot(ctx.reshape(Bb * S, D).astype(jnp.bfloat16), wo_ref[0],
                       preferred_element_type=jnp.float32) + ob_ref[0]
        x = _layer_norm(x + attn.reshape(Bb, S, D), n1w_ref[0], n1b_ref[0])

        # ---------------- feed forward (relu) -------------------------------
        xf = x.reshape(Bb * S, D).astype(jnp.bfloat16)
        h1 = jnp.dot(xf, l1w_ref[0], preferred_element_type=jnp.float32) + l1b_ref[0]
        h1 = jnp.maximum(h1, 0.0)
        h2 = jnp.dot(h1.astype(jnp.bfloat16), l2w_ref[0],
                     preferred_element_type=jnp.float32) + l2b_ref[0]
        x = _layer_norm(x + h2.reshape(Bb, S, D), n2w_ref[0], n2b_ref[0])

        # intermediate layers: keep the activation in VMEM scratch only
        @pl.when(l < last)
        def _():
            act_ref[...] = x

        # last layer: final encoder LayerNorm + fused classifier, single store
        @pl.when(l == last)
        def _():
            xn = _layer_norm(x, encw_ref[...], encb_ref[...])
            logits = jnp.dot(xn.reshape(Bb * S, D).astype(jnp.bfloat16),
                             clsw_ref[...],
                             preferred_element_type=jnp.float32) + clsb_ref[...]
            out_ref[...] = logits.reshape(Bb, S, Cp)

    return kernel


def encoder_pallas(kp, src, pad_bias, causal_bias, n_head, *, batch_block=None):
    """src: (B, S, D) f32; pad_bias: (B, 1, S) additive f32 (0 / NEG_INF);
    causal_bias: (1, S, S) additive f32.  Returns fused logits (B, S, Cp)."""
    B, S, D = src.shape
    L = kp["wqkvT"].shape[0]
    Hff = kp["l1wT"].shape[2]
    Cp = kp["cls_wT"].shape[1]
    H = n_head
    assert D % H == 0
    Bb = B if batch_block is None else batch_block   # v7x: pass B//2 (2 TensorCores)
    assert B % Bb == 0
    nb = B // Bb

    kernel = make_encoder_kernel(Bb, S, D, H, Cp)

    def wmap3(bb, l): return (l, 0, 0)
    def cmap2(bb, l): return (0, 0)
    def cmap3(bb, l): return (0, 0, 0)

    grid_spec = pltpu.PrefetchScalarGridSpec(
        num_scalar_prefetch=0,
        grid=(nb, L),
        in_specs=[
            pl.BlockSpec((Bb, S, D), lambda bb, l: (bb, 0, 0)),   # embedded src
            pl.BlockSpec((Bb, 1, S), lambda bb, l: (bb, 0, 0)),   # pad bias
            pl.BlockSpec((1, S, S), cmap3),                       # causal bias (once)
            pl.BlockSpec((1, D, 3 * D), wmap3),                   # W_qkv^T (bf16, q scaled)
            pl.BlockSpec((1, 1, 3 * D), wmap3),                   # b_qkv   (q scaled)
            pl.BlockSpec((1, D, D), wmap3),                       # Wo^T (bf16)
            pl.BlockSpec((1, 1, D), wmap3),                       # out_proj b
            pl.BlockSpec((1, 1, D), wmap3),                       # norm1 w
            pl.BlockSpec((1, 1, D), wmap3),                       # norm1 b
            pl.BlockSpec((1, 1, D), wmap3),                       # norm2 w
            pl.BlockSpec((1, 1, D), wmap3),                       # norm2 b
            pl.BlockSpec((1, D, Hff), wmap3),                     # lin1 W^T (bf16)
            pl.BlockSpec((1, 1, Hff), wmap3),                     # lin1 b
            pl.BlockSpec((1, Hff, D), wmap3),                     # lin2 W^T (bf16)
            pl.BlockSpec((1, 1, D), wmap3),                       # lin2 b
            pl.BlockSpec((1, D), cmap2),                          # enc norm w (once)
            pl.BlockSpec((1, D), cmap2),                          # enc norm b (once)
            pl.BlockSpec((D, Cp), cmap2),                         # fused classifier W^T
            pl.BlockSpec((1, Cp), cmap2),                         # fused classifier b
        ],
        out_specs=pl.BlockSpec((Bb, S, Cp), lambda bb, l: (bb, 0, 0)),
        scratch_shapes=[pltpu.VMEM((Bb, S, D), jnp.float32)],     # carried activation
    )
    return pl.pallas_call(
        kernel,
        out_shape=jax.ShapeDtypeStruct((B, S, Cp), jnp.float32),
        grid_spec=grid_spec,
        compiler_params=pltpu.CompilerParams(
            dimension_semantics=("parallel", "arbitrary")),
    )(src, pad_bias, causal_bias,
      kp["wqkvT"], kp["bqkv"], kp["woT"], kp["ob"],
      kp["n1w"], kp["n1b"], kp["n2w"], kp["n2b"],
      kp["l1wT"], kp["l1b"], kp["l2wT"], kp["l2b"],
      kp["encw"], kp["encb"], kp["cls_wT"], kp["cls_b"])


# --------------------------------------------------------------------------
# Parameters (deterministic synthetic init)
# --------------------------------------------------------------------------
def _xavier(key, shape):
    fan_out, fan_in = shape[-2], shape[-1]
    a = math.sqrt(6.0 / (fan_in + fan_out))
    return jax.random.uniform(key, shape, jnp.float32, minval=-a, maxval=a)


def init_params(key, *, n_syscall, n_category, n_process, n_hidden, n_layer,
                max_len, dim_sys, dim_entry, dim_ret, dim_proc, dim_pid,
                dim_tid, dim_order, dim_time):
    D = sum((dim_sys, dim_entry, dim_ret, dim_proc, dim_pid, dim_tid,
             dim_order, dim_time))
    L, Hff = n_layer, n_hidden
    ks = iter(jax.random.split(key, 32))
    p = {}
    # embedding tables (approximation of the undisclosed Embedding module)
    p["emb_call"] = _xavier(next(ks), (n_syscall, dim_sys))
    p["emb_entry"] = _xavier(next(ks), (2, dim_entry))
    p["emb_ret"] = _xavier(next(ks), (2, dim_ret))
    p["emb_proc"] = _xavier(next(ks), (n_process, dim_proc))
    p["emb_pid"] = _xavier(next(ks), (n_process, dim_pid))
    p["emb_tid"] = _xavier(next(ks), (n_process, dim_tid))
    p["emb_order"] = _xavier(next(ks), (max_len, dim_order))
    p["time_w"] = _xavier(next(ks), (1, dim_time))
    # encoder layers, stacked with a leading layer axis
    p["in_proj_w"] = _xavier(next(ks), (L, 3 * D, D))
    p["in_proj_b"] = 0.02 * jax.random.normal(next(ks), (L, 1, 3 * D), jnp.float32)
    p["out_proj_w"] = _xavier(next(ks), (L, D, D))
    p["out_proj_b"] = 0.02 * jax.random.normal(next(ks), (L, 1, D), jnp.float32)
    p["norm1_w"] = jnp.ones((L, 1, D), jnp.float32)
    p["norm1_b"] = jnp.zeros((L, 1, D), jnp.float32)
    p["norm2_w"] = jnp.ones((L, 1, D), jnp.float32)
    p["norm2_b"] = jnp.zeros((L, 1, D), jnp.float32)
    p["lin1_w"] = _xavier(next(ks), (L, Hff, D))
    p["lin1_b"] = 0.02 * jax.random.normal(next(ks), (L, 1, Hff), jnp.float32)
    p["lin2_w"] = _xavier(next(ks), (L, D, Hff))
    p["lin2_b"] = 0.02 * jax.random.normal(next(ks), (L, 1, D), jnp.float32)
    # final encoder LayerNorm (tfixup=False)
    p["enc_norm_w"] = jnp.ones((1, D), jnp.float32)
    p["enc_norm_b"] = jnp.zeros((1, D), jnp.float32)
    # classifier heads
    p["cls_w"] = _xavier(next(ks), (n_syscall, D))
    p["cls_b"] = 0.02 * jax.random.normal(next(ks), (n_syscall,), jnp.float32)
    p["cls_lat_w"] = _xavier(next(ks), (n_category, D))     # ordinal_latency=False
    p["cls_lat_b"] = 0.02 * jax.random.normal(next(ks), (n_category,), jnp.float32)
    return p


def prepare_kernel_params(p, n_head):
    """One-time rearrangement of params into kernel-ready layouts (fused QKV
    with the 1/sqrt(hd) scale folded into the q block, transposed bf16 matmul
    weights, zero-padded fused classifier).  Done once, not per forward."""
    L, threeD, D = p["in_proj_w"].shape
    H = n_head
    assert D % H == 0
    hd = D // H
    scale = 1.0 / math.sqrt(hd)
    qkv_scale = jnp.concatenate([jnp.full((D,), scale, jnp.float32),
                                 jnp.ones((2 * D,), jnp.float32)])

    kp = {}
    # fused QKV: W^T laid out (L, D, 3D); q columns pre-scaled by 1/sqrt(hd)
    wqkvT = jnp.transpose(p["in_proj_w"], (0, 2, 1))
    kp["wqkvT"] = (wqkvT * qkv_scale[None, None, :]).astype(jnp.bfloat16)
    kp["bqkv"] = p["in_proj_b"] * qkv_scale[None, None, :]          # (L, 1, 3D) f32
    # out projection: concat-heads layout == PyTorch layout, just transposed
    kp["woT"] = jnp.transpose(p["out_proj_w"], (0, 2, 1)).astype(jnp.bfloat16)
    kp["ob"] = p["out_proj_b"]
    kp["n1w"], kp["n1b"] = p["norm1_w"], p["norm1_b"]
    kp["n2w"], kp["n2b"] = p["norm2_w"], p["norm2_b"]
    kp["l1wT"] = jnp.transpose(p["lin1_w"], (0, 2, 1)).astype(jnp.bfloat16)
    kp["l1b"] = p["lin1_b"]
    kp["l2wT"] = jnp.transpose(p["lin2_w"], (0, 2, 1)).astype(jnp.bfloat16)
    kp["l2b"] = p["lin2_b"]
    kp["encw"], kp["encb"] = p["enc_norm_w"], p["enc_norm_b"]
    # fused classifier heads, output dim padded to a multiple of 128 (lane-dense)
    C = p["cls_w"].shape[0] + p["cls_lat_w"].shape[0]
    Cp = ((C + 127) // 128) * 128
    w = jnp.concatenate([p["cls_w"], p["cls_lat_w"]], axis=0).T      # (D, C)
    kp["cls_wT"] = jnp.pad(w, ((0, 0), (0, Cp - C))).astype(jnp.bfloat16)
    b = jnp.concatenate([p["cls_b"], p["cls_lat_b"]], axis=0)
    kp["cls_b"] = jnp.pad(b, (0, Cp - C))[None, :]
    kp["n_event"] = int(p["cls_w"].shape[0])
    kp["n_lat"] = int(p["cls_lat_w"].shape[0])
    return kp


# --------------------------------------------------------------------------
# Forward (glue: embedding lookups, masks, output split)
# --------------------------------------------------------------------------
def embed(p, call, entry, ret, time, proc, pid, tid):
    B, S = call.shape
    order = jnp.broadcast_to(p["emb_order"][jnp.arange(S)][None],
                             (B, S, p["emb_order"].shape[1]))
    feats = [
        p["emb_call"][call],
        p["emb_entry"][entry],
        p["emb_ret"][ret],
        p["emb_proc"][proc],
        p["emb_pid"][pid],
        p["emb_tid"][tid],
        order,
        time[..., None] * p["time_w"][0][None, None, :],
    ]
    return jnp.concatenate(feats, axis=-1).astype(jnp.float32)


def transformer_forward(p, kp, call, entry, time, proc, pid, tid, ret,
                        pad_mask, n_head, *, batch_block=None):
    src = embed(p, call, entry, ret, time, proc, pid, tid)             # (B, S, D)
    B, S, D = src.shape
    pad_bias = jnp.where(pad_mask, NEG_INF, 0.0).astype(jnp.float32)[:, None, :]
    i = jnp.arange(S)[:, None]
    j = jnp.arange(S)[None, :]
    causal_bias = jnp.where(j > i, NEG_INF, 0.0).astype(jnp.float32)[None]  # (1,S,S)

    logits = encoder_pallas(kp, src, pad_bias, causal_bias, n_head,
                            batch_block=batch_block)                   # (B, S, Cp)
    n_event, n_lat = kp["n_event"], kp["n_lat"]
    out = logits[:, :, :n_event]
    out_lat = logits[:, :, n_event:n_event + n_lat]
    return out, out_lat


# --------------------------------------------------------------------------
# Pure-JAX f32 reference (for validation)
# --------------------------------------------------------------------------
def reference_forward(p, call, entry, time, proc, pid, tid, ret, pad_mask,
                      n_head):
    src = embed(p, call, entry, ret, time, proc, pid, tid)
    B, S, D = src.shape
    H, hd = n_head, D // n_head
    i = jnp.arange(S)[:, None]
    j = jnp.arange(S)[None, :]
    mask = jnp.where(j > i, -jnp.inf, 0.0).astype(jnp.float32)
    pad_add = jnp.where(pad_mask, -jnp.inf, 0.0)
    x = src
    L = p["in_proj_w"].shape[0]
    for l in range(L):
        qkv = x @ p["in_proj_w"][l].T + p["in_proj_b"][l, 0]
        q, k, v = qkv[..., :D], qkv[..., D:2 * D], qkv[..., 2 * D:]
        q = q.reshape(B, S, H, hd)
        k = k.reshape(B, S, H, hd)
        v = v.reshape(B, S, H, hd)
        s = jnp.einsum("bqhd,bkhd->bhqk", q, k) / math.sqrt(hd)
        s = s + mask[None, None] + pad_add[:, None, None, :]
        pw = jax.nn.softmax(s, axis=-1)
        attn = jnp.einsum("bhqk,bkhd->bqhd", pw, v).reshape(B, S, D)
        attn = attn @ p["out_proj_w"][l].T + p["out_proj_b"][l, 0]
        x = _layer_norm(x + attn, p["norm1_w"][l, 0], p["norm1_b"][l, 0])
        ff = jax.nn.relu(x @ p["lin1_w"][l].T + p["lin1_b"][l, 0])
        ff = ff @ p["lin2_w"][l].T + p["lin2_b"][l, 0]
        x = _layer_norm(x + ff, p["norm2_w"][l, 0], p["norm2_b"][l, 0])
    x = _layer_norm(x, p["enc_norm_w"][0], p["enc_norm_b"][0])
    out = x @ p["cls_w"].T + p["cls_b"]
    out_lat = x @ p["cls_lat_w"].T + p["cls_lat_b"]
    return out, out_lat


# --------------------------------------------------------------------------
if __name__ == "__main__":
    key = jax.random.PRNGKey(0)
    B, S = 2, 8
    n_syscall, n_category, n_process = 16, 5, 6
    n_head, n_hidden, n_layer = 4, 64, 2
    dims = dict(dim_sys=8, dim_entry=4, dim_ret=4, dim_proc=4,
                dim_pid=4, dim_tid=4, dim_order=2, dim_time=2)

    pkey, dkey = jax.random.split(key)
    params = init_params(pkey, n_syscall=n_syscall, n_category=n_category,
                         n_process=n_process, n_hidden=n_hidden,
                         n_layer=n_layer, max_len=S, **dims)
    kparams = prepare_kernel_params(params, n_head)

    ks = jax.random.split(dkey, 7)
    call = jax.random.randint(ks[0], (B, S), 0, n_syscall)
    entry = jax.random.randint(ks[1], (B, S), 0, 2)
    ret = jax.random.randint(ks[2], (B, S), 0, 2)
    proc = jax.random.randint(ks[3], (B, S), 0, n_process)
    pid = jax.random.randint(ks[4], (B, S), 0, n_process)
    tid = jax.random.randint(ks[5], (B, S), 0, n_process)
    time = jax.random.uniform(ks[6], (B, S), jnp.float32)
    pad_mask = jnp.zeros((B, S), dtype=bool)

    out, out_lat = transformer_forward(params, kparams, call, entry, time,
                                       proc, pid, tid, ret, pad_mask, n_head)
    jax.block_until_ready((out, out_lat))

    ref_out, ref_lat = reference_forward(params, call, entry, time, proc, pid,
                                         tid, ret, pad_mask, n_head)
    # bf16 matmuls + approx reciprocal -> relaxed tolerance vs the f32 reference
    np.testing.assert_allclose(np.asarray(out), np.asarray(ref_out),
                               rtol=5e-2, atol=5e-2)
    np.testing.assert_allclose(np.asarray(out_lat), np.asarray(ref_lat),
                               rtol=5e-2, atol=5e-2)
    print("KERNEL_OK")
</pallas_src>

<mosaic_0001>
module attributes {stable_mosaic.version = 11 : i64} {
  func.func @kernel(%arg0: i32, %arg1: i32, %arg2: memref<2x8x32xf32, #tpu.memory_space<vmem>>, %arg3: memref<2x1x8xf32, #tpu.memory_space<vmem>>, %arg4: memref<1x8x8xf32, #tpu.memory_space<vmem>>, %arg5: memref<1x32x96xbf16, #tpu.memory_space<vmem>>, %arg6: memref<1x1x96xf32, #tpu.memory_space<vmem>>, %arg7: memref<1x32x32xbf16, #tpu.memory_space<vmem>>, %arg8: memref<1x1x32xf32, #tpu.memory_space<vmem>>, %arg9: memref<1x1x32xf32, #tpu.memory_space<vmem>>, %arg10: memref<1x1x32xf32, #tpu.memory_space<vmem>>, %arg11: memref<1x1x32xf32, #tpu.memory_space<vmem>>, %arg12: memref<1x1x32xf32, #tpu.memory_space<vmem>>, %arg13: memref<1x32x64xbf16, #tpu.memory_space<vmem>>, %arg14: memref<1x1x64xf32, #tpu.memory_space<vmem>>, %arg15: memref<1x64x32xbf16, #tpu.memory_space<vmem>>, %arg16: memref<1x1x32xf32, #tpu.memory_space<vmem>>, %arg17: memref<1x32xf32, #tpu.memory_space<vmem>>, %arg18: memref<1x32xf32, #tpu.memory_space<vmem>>, %arg19: memref<32x128xbf16, #tpu.memory_space<vmem>>, %arg20: memref<1x128xf32, #tpu.memory_space<vmem>>, %arg21: memref<2x8x128xf32, #tpu.memory_space<vmem>>, %arg22: memref<2x8x32xf32, #tpu.memory_space<vmem>>) attributes {dimension_semantics = [#tpu.dimension_semantics<parallel>, #tpu.dimension_semantics<arbitrary>], iteration_bounds = array<i64: 1, 2>, scalar_prefetch = 0 : i64, scratch_operands = 1 : i64, tpu.core_type = #tpu.core_type<tc>, window_params = [{transform_indices = @transform_0, window_bounds = array<i64: 2, 8, 32>}, {transform_indices = @transform_1, window_bounds = array<i64: 2, 1, 8>}, {pipeline_mode = #tpu.pipeline_mode<synchronous>, transform_indices = @transform_2, window_bounds = array<i64: 1, 8, 8>}, {transform_indices = @transform_3, window_bounds = array<i64: 1, 32, 96>}, {transform_indices = @transform_4, window_bounds = array<i64: 1, 1, 96>}, {transform_indices = @transform_5, window_bounds = array<i64: 1, 32, 32>}, {transform_indices = @transform_6, window_bounds = array<i64: 1, 1, 32>}, {transform_indices = @transform_7, window_bounds = array<i64: 1, 1, 32>}, {transform_indices = @transform_8, window_bounds = array<i64: 1, 1, 32>}, {transform_indices = @transform_9, window_bounds = array<i64: 1, 1, 32>}, {transform_indices = @transform_10, window_bounds = array<i64: 1, 1, 32>}, {transform_indices = @transform_11, window_bounds = array<i64: 1, 32, 64>}, {transform_indices = @transform_12, window_bounds = array<i64: 1, 1, 64>}, {transform_indices = @transform_13, window_bounds = array<i64: 1, 64, 32>}, {transform_indices = @transform_14, window_bounds = array<i64: 1, 1, 32>}, {pipeline_mode = #tpu.pipeline_mode<synchronous>, transform_indices = @transform_15, window_bounds = array<i64: 1, 32>}, {pipeline_mode = #tpu.pipeline_mode<synchronous>, transform_indices = @transform_16, window_bounds = array<i64: 1, 32>}, {pipeline_mode = #tpu.pipeline_mode<synchronous>, transform_indices = @transform_17, window_bounds = array<i64: 32, 128>}, {pipeline_mode = #tpu.pipeline_mode<synchronous>, transform_indices = @transform_18, window_bounds = array<i64: 1, 128>}, {transform_indices = @transform_19, window_bounds = array<i64: 2, 8, 128>}]} {
    %c0_i32 = arith.constant 0 : i32
    %0 = arith.cmpi eq, %arg1, %c0_i32 : i32
    %1 = arith.extui %0 : i1 to i32
    %c0_i32_0 = arith.constant 0 : i32
    %2 = arith.cmpi ne, %1, %c0_i32_0 : i32
    scf.if %2 {
      %c0_78 = arith.constant 0 : index
      %c0_79 = arith.constant 0 : index
      %c0_80 = arith.constant 0 : index
      %190 = vector.load %arg2[%c0_78, %c0_79, %c0_80] : memref<2x8x32xf32, #tpu.memory_space<vmem>>, vector<2x8x32xf32>
      %c0_81 = arith.constant 0 : index
      %c0_82 = arith.constant 0 : index
      %c0_83 = arith.constant 0 : index
      %191 = vector.load %arg22[%c0_81, %c0_82, %c0_83] : memref<2x8x32xf32, #tpu.memory_space<vmem>>, vector<2x8x32xf32>
      tpu.vector_store %arg22[%c0_81, %c0_82, %c0_83], %190 {strides = array<i32>} : memref<2x8x32xf32, #tpu.memory_space<vmem>>, vector<2x8x32xf32>,
    } else {
    }
    %c0 = arith.constant 0 : index
    %c0_1 = arith.constant 0 : index
    %c0_2 = arith.constant 0 : index
    %3 = vector.load %arg22[%c0, %c0_1, %c0_2] : memref<2x8x32xf32, #tpu.memory_space<vmem>>, vector<2x8x32xf32>
    %4 = vector.shape_cast %3 : vector<2x8x32xf32> to vector<16x32xf32>
    %5 = arith.truncf %4 : vector<16x32xf32> to vector<16x32xbf16>
    %c0_3 = arith.constant 0 : index
    %c0_4 = arith.constant 0 : index
    %c0_5 = arith.constant 0 : index
    %6 = vector.load %arg5[%c0_3, %c0_4, %c0_5] : memref<1x32x96xbf16, #tpu.memory_space<vmem>>, vector<1x32x96xbf16>
    %7 = vector.shape_cast %6 : vector<1x32x96xbf16> to vector<32x96xbf16>
    %cst = arith.constant dense<0.000000e+00> : vector<16x96xf32>
    %8 = tpu.matmul %5, %7, %cst {dimension_numbers = #tpu.dot_dimension_numbers<[1], [0], [0], [1], [0, 0, 1, 1], [], []>} : vector<16x32xbf16>, vector<32x96xbf16>, vector<16x96xf32> -> vector<16x96xf32>
    %c0_6 = arith.constant 0 : index
    %c0_7 = arith.constant 0 : index
    %c0_8 = arith.constant 0 : index
    %9 = vector.load %arg6[%c0_6, %c0_7, %c0_8] : memref<1x1x96xf32, #tpu.memory_space<vmem>>, vector<1x1x96xf32>
    %10 = vector.shape_cast %9 : vector<1x1x96xf32> to vector<1x96xf32>
    %11 = vector.broadcast %10 : vector<1x96xf32> to vector<16x96xf32>
    %12 = arith.addf %8, %11 : vector<16x96xf32>
    %13 = vector.shape_cast %12 : vector<16x96xf32> to vector<2x8x96xf32>
    %c0_9 = arith.constant 0 : index
    %c0_10 = arith.constant 0 : index
    %c0_11 = arith.constant 0 : index
    %14 = vector.load %arg4[%c0_9, %c0_10, %c0_11] : memref<1x8x8xf32, #tpu.memory_space<vmem>>, vector<1x8x8xf32>
    %c0_12 = arith.constant 0 : index
    %c0_13 = arith.constant 0 : index
    %c0_14 = arith.constant 0 : index
    %15 = vector.load %arg3[%c0_12, %c0_13, %c0_14] : memref<2x1x8xf32, #tpu.memory_space<vmem>>, vector<2x1x8xf32>
    %16 = vector.broadcast %14 : vector<1x8x8xf32> to vector<2x8x8xf32>
    %17 = vector.broadcast %15 : vector<2x1x8xf32> to vector<2x8x8xf32>
    %18 = arith.addf %16, %17 : vector<2x8x8xf32>
    %19 = vector.extract_strided_slice %13 {offsets = [0, 0, 0], sizes = [2, 8, 8], strides = [1, 1, 1]} : vector<2x8x96xf32> to vector<2x8x8xf32>
    %20 = vector.extract_strided_slice %13 {offsets = [0, 0, 32], sizes = [2, 8, 8], strides = [1, 1, 1]} : vector<2x8x96xf32> to vector<2x8x8xf32>
    %21 = vector.extract_strided_slice %13 {offsets = [0, 0, 64], sizes = [2, 8, 8], strides = [1, 1, 1]} : vector<2x8x96xf32> to vector<2x8x8xf32>
    %22 = arith.truncf %19 : vector<2x8x8xf32> to vector<2x8x8xbf16>
    %23 = arith.truncf %20 : vector<2x8x8xf32> to vector<2x8x8xbf16>
    %cst_15 = arith.constant dense<0.000000e+00> : vector<2x8x8xf32>
    %24 = tpu.matmul %22, %23, %cst_15 {dimension_numbers = #tpu.dot_dimension_numbers<[2], [2], [1], [1], [0, 0, 0, 1, 1, 1], [0], [0]>} : vector<2x8x8xbf16>, vector<2x8x8xbf16>, vector<2x8x8xf32> -> vector<2x8x8xf32>
    %25 = arith.addf %24, %18 : vector<2x8x8xf32>
    %cst_16 = arith.constant dense<0xFF800000> : vector<2x8xf32>
    %26 = vector.multi_reduction <maximumf>, %25, %cst_16 [2] : vector<2x8x8xf32> to vector<2x8xf32>
    %27 = vector.shape_cast %26 : vector<2x8xf32> to vector<2x8x1xf32>
    %28 = vector.broadcast %27 : vector<2x8x1xf32> to vector<2x8x8xf32>
    %29 = arith.subf %25, %28 : vector<2x8x8xf32>
    %30 = math.exp %29 : vector<2x8x8xf32>
    %cst_17 = arith.constant dense<0.000000e+00> : vector<2x8xf32>
    %31 = vector.multi_reduction <add>, %30, %cst_17 [2] : vector<2x8x8xf32> to vector<2x8xf32>
    %32 = vector.shape_cast %31 : vector<2x8xf32> to vector<2x8x1xf32>
    %33 = tpu.reciprocal %32 {approx = true} : vector<2x8x1xf32> -> vector<2x8x1xf32>
    %34 = vector.broadcast %33 : vector<2x8x1xf32> to vector<2x8x8xf32>
    %35 = arith.mulf %30, %34 : vector<2x8x8xf32>
    %36 = arith.truncf %35 : vector<2x8x8xf32> to vector<2x8x8xbf16>
    %37 = arith.truncf %21 : vector<2x8x8xf32> to vector<2x8x8xbf16>
    %cst_18 = arith.constant dense<0.000000e+00> : vector<2x8x8xf32>
    %38 = tpu.matmul %36, %37, %cst_18 {dimension_numbers = #tpu.dot_dimension_numbers<[2], [1], [1], [2], [0, 0, 0, 1, 1, 2], [0], [0]>} : vector<2x8x8xbf16>, vector<2x8x8xbf16>, vector<2x8x8xf32> -> vector<2x8x8xf32>
    %39 = vector.extract_strided_slice %13 {offsets = [0, 0, 8], sizes = [2, 8, 8], strides = [1, 1, 1]} : vector<2x8x96xf32> to vector<2x8x8xf32>
    %40 = vector.extract_strided_slice %13 {offsets = [0, 0, 40], sizes = [2, 8, 8], strides = [1, 1, 1]} : vector<2x8x96xf32> to vector<2x8x8xf32>
    %41 = vector.extract_strided_slice %13 {offsets = [0, 0, 72], sizes = [2, 8, 8], strides = [1, 1, 1]} : vector<2x8x96xf32> to vector<2x8x8xf32>
    %42 = arith.truncf %39 : vector<2x8x8xf32> to vector<2x8x8xbf16>
    %43 = arith.truncf %40 : vector<2x8x8xf32> to vector<2x8x8xbf16>
    %cst_19 = arith.constant dense<0.000000e+00> : vector<2x8x8xf32>
    %44 = tpu.matmul %42, %43, %cst_19 {dimension_numbers = #tpu.dot_dimension_numbers<[2], [2], [1], [1], [0, 0, 0, 1, 1, 1], [0], [0]>} : vector<2x8x8xbf16>, vector<2x8x8xbf16>, vector<2x8x8xf32> -> vector<2x8x8xf32>
    %45 = arith.addf %44, %18 : vector<2x8x8xf32>
    %cst_20 = arith.constant dense<0xFF800000> : vector<2x8xf32>
    %46 = vector.multi_reduction <maximumf>, %45, %cst_20 [2] : vector<2x8x8xf32> to vector<2x8xf32>
    %47 = vector.shape_cast %46 : vector<2x8xf32> to vector<2x8x1xf32>
    %48 = vector.broadcast %47 : vector<2x8x1xf32> to vector<2x8x8xf32>
    %49 = arith.subf %45, %48 : vector<2x8x8xf32>
    %50 = math.exp %49 : vector<2x8x8xf32>
    %cst_21 = arith.constant dense<0.000000e+00> : vector<2x8xf32>
    %51 = vector.multi_reduction <add>, %50, %cst_21 [2] : vector<2x8x8xf32> to vector<2x8xf32>
    %52 = vector.shape_cast %51 : vector<2x8xf32> to vector<2x8x1xf32>
    %53 = tpu.reciprocal %52 {approx = true} : vector<2x8x1xf32> -> vector<2x8x1xf32>
    %54 = vector.broadcast %53 : vector<2x8x1xf32> to vector<2x8x8xf32>
    %55 = arith.mulf %50, %54 : vector<2x8x8xf32>
    %56 = arith.truncf %55 : vector<2x8x8xf32> to vector<2x8x8xbf16>
    %57 = arith.truncf %41 : vector<2x8x8xf32> to vector<2x8x8xbf16>
    %cst_22 = arith.constant dense<0.000000e+00> : vector<2x8x8xf32>
    %58 = tpu.matmul %56, %57, %cst_22 {dimension_numbers = #tpu.dot_dimension_numbers<[2], [1], [1], [2], [0, 0, 0, 1, 1, 2], [0], [0]>} : vector<2x8x8xbf16>, vector<2x8x8xbf16>, vector<2x8x8xf32> -> vector<2x8x8xf32>
    %59 = vector.extract_strided_slice %13 {offsets = [0, 0, 16], sizes = [2, 8, 8], strides = [1, 1, 1]} : vector<2x8x96xf32> to vector<2x8x8xf32>
    %60 = vector.extract_strided_slice %13 {offsets = [0, 0, 48], sizes = [2, 8, 8], strides = [1, 1, 1]} : vector<2x8x96xf32> to vector<2x8x8xf32>
    %61 = vector.extract_strided_slice %13 {offsets = [0, 0, 80], sizes = [2, 8, 8], strides = [1, 1, 1]} : vector<2x8x96xf32> to vector<2x8x8xf32>
    %62 = arith.truncf %59 : vector<2x8x8xf32> to vector<2x8x8xbf16>
    %63 = arith.truncf %60 : vector<2x8x8xf32> to vector<2x8x8xbf16>
    %cst_23 = arith.constant dense<0.000000e+00> : vector<2x8x8xf32>
    %64 = tpu.matmul %62, %63, %cst_23 {dimension_numbers = #tpu.dot_dimension_numbers<[2], [2], [1], [1], [0, 0, 0, 1, 1, 1], [0], [0]>} : vector<2x8x8xbf16>, vector<2x8x8xbf16>, vector<2x8x8xf32> -> vector<2x8x8xf32>
    %65 = arith.addf %64, %18 : vector<2x8x8xf32>
    %cst_24 = arith.constant dense<0xFF800000> : vector<2x8xf32>
    %66 = vector.multi_reduction <maximumf>, %65, %cst_24 [2] : vector<2x8x8xf32> to vector<2x8xf32>
    %67 = vector.shape_cast %66 : vector<2x8xf32> to vector<2x8x1xf32>
    %68 = vector.broadcast %67 : vector<2x8x1xf32> to vector<2x8x8xf32>
    %69 = arith.subf %65, %68 : vector<2x8x8xf32>
    %70 = math.exp %69 : vector<2x8x8xf32>
    %cst_25 = arith.constant dense<0.000000e+00> : vector<2x8xf32>
    %71 = vector.multi_reduction <add>, %70, %cst_25 [2] : vector<2x8x8xf32> to vector<2x8xf32>
    %72 = vector.shape_cast %71 : vector<2x8xf32> to vector<2x8x1xf32>
    %73 = tpu.reciprocal %72 {approx = true} : vector<2x8x1xf32> -> vector<2x8x1xf32>
    %74 = vector.broadcast %73 : vector<2x8x1xf32> to vector<2x8x8xf32>
    %75 = arith.mulf %70, %74 : vector<2x8x8xf32>
    %76 = arith.truncf %75 : vector<2x8x8xf32> to vector<2x8x8xbf16>
    %77 = arith.truncf %61 : vector<2x8x8xf32> to vector<2x8x8xbf16>
    %cst_26 = arith.constant dense<0.000000e+00> : vector<2x8x8xf32>
    %78 = tpu.matmul %76, %77, %cst_26 {dimension_numbers = #tpu.dot_dimension_numbers<[2], [1], [1], [2], [0, 0, 0, 1, 1, 2], [0], [0]>} : vector<2x8x8xbf16>, vector<2x8x8xbf16>, vector<2x8x8xf32> -> vector<2x8x8xf32>
    %79 = vector.extract_strided_slice %13 {offsets = [0, 0, 24], sizes = [2, 8, 8], strides = [1, 1, 1]} : vector<2x8x96xf32> to vector<2x8x8xf32>
    %80 = vector.extract_strided_slice %13 {offsets = [0, 0, 56], sizes = [2, 8, 8], strides = [1, 1, 1]} : vector<2x8x96xf32> to vector<2x8x8xf32>
    %81 = vector.extract_strided_slice %13 {offsets = [0, 0, 88], sizes = [2, 8, 8], strides = [1, 1, 1]} : vector<2x8x96xf32> to vector<2x8x8xf32>
    %82 = arith.truncf %79 : vector<2x8x8xf32> to vector<2x8x8xbf16>
    %83 = arith.truncf %80 : vector<2x8x8xf32> to vector<2x8x8xbf16>
    %cst_27 = arith.constant dense<0.000000e+00> : vector<2x8x8xf32>
    %84 = tpu.matmul %82, %83, %cst_27 {dimension_numbers = #tpu.dot_dimension_numbers<[2], [2], [1], [1], [0, 0, 0, 1, 1, 1], [0], [0]>} : vector<2x8x8xbf16>, vector<2x8x8xbf16>, vector<2x8x8xf32> -> vector<2x8x8xf32>
    %85 = arith.addf %84, %18 : vector<2x8x8xf32>
    %cst_28 = arith.constant dense<0xFF800000> : vector<2x8xf32>
    %86 = vector.multi_reduction <maximumf>, %85, %cst_28 [2] : vector<2x8x8xf32> to vector<2x8xf32>
    %87 = vector.shape_cast %86 : vector<2x8xf32> to vector<2x8x1xf32>
    %88 = vector.broadcast %87 : vector<2x8x1xf32> to vector<2x8x8xf32>
    %89 = arith.subf %85, %88 : vector<2x8x8xf32>
    %90 = math.exp %89 : vector<2x8x8xf32>
    %cst_29 = arith.constant dense<0.000000e+00> : vector<2x8xf32>
    %91 = vector.multi_reduction <add>, %90, %cst_29 [2] : vector<2x8x8xf32> to vector<2x8xf32>
    %92 = vector.shape_cast %91 : vector<2x8xf32> to vector<2x8x1xf32>
    %93 = tpu.reciprocal %92 {approx = true} : vector<2x8x1xf32> -> vector<2x8x1xf32>
    %94 = vector.broadcast %93 : vector<2x8x1xf32> to vector<2x8x8xf32>
    %95 = arith.mulf %90, %94 : vector<2x8x8xf32>
    %96 = arith.truncf %95 : vector<2x8x8xf32> to vector<2x8x8xbf16>
    %97 = arith.truncf %81 : vector<2x8x8xf32> to vector<2x8x8xbf16>
    %cst_30 = arith.constant dense<0.000000e+00> : vector<2x8x8xf32>
    %98 = tpu.matmul %96, %97, %cst_30 {dimension_numbers = #tpu.dot_dimension_numbers<[2], [1], [1], [2], [0, 0, 0, 1, 1, 2], [0], [0]>} : vector<2x8x8xbf16>, vector<2x8x8xbf16>, vector<2x8x8xf32> -> vector<2x8x8xf32>
    %99 = tpu.concatenate %38, %58, %78, %98 in 2 : vector<2x8x8xf32>, vector<2x8x8xf32>, vector<2x8x8xf32>, vector<2x8x8xf32> -> vector<2x8x32xf32>
    %100 = vector.shape_cast %99 : vector<2x8x32xf32> to vector<16x32xf32>
    %101 = arith.truncf %100 : vector<16x32xf32> to vector<16x32xbf16>
    %c0_31 = arith.constant 0 : index
    %c0_32 = arith.constant 0 : index
    %c0_33 = arith.constant 0 : index
    %102 = vector.load %arg7[%c0_31, %c0_32, %c0_33] : memref<1x32x32xbf16, #tpu.memory_space<vmem>>, vector<1x32x32xbf16>
    %103 = vector.shape_cast %102 : vector<1x32x32xbf16> to vector<32x32xbf16>
    %cst_34 = arith.constant dense<0.000000e+00> : vector<16x32xf32>
    %104 = tpu.matmul %101, %103, %cst_34 {dimension_numbers = #tpu.dot_dimension_numbers<[1], [0], [0], [1], [0, 0, 1, 1], [], []>} : vector<16x32xbf16>, vector<32x32xbf16>, vector<16x32xf32> -> vector<16x32xf32>
    %c0_35 = arith.constant 0 : index
    %c0_36 = arith.constant 0 : index
    %c0_37 = arith.constant 0 : index
    %105 = vector.load %arg8[%c0_35, %c0_36, %c0_37] : memref<1x1x32xf32, #tpu.memory_space<vmem>>, vector<1x1x32xf32>
    %106 = vector.shape_cast %105 : vector<1x1x32xf32> to vector<1x32xf32>
    %107 = vector.broadcast %106 : vector<1x32xf32> to vector<16x32xf32>
    %108 = arith.addf %104, %107 : vector<16x32xf32>
    %109 = vector.shape_cast %108 : vector<16x32xf32> to vector<2x8x32xf32>
    %110 = arith.addf %3, %109 : vector<2x8x32xf32>
    %c0_38 = arith.constant 0 : index
    %c0_39 = arith.constant 0 : index
    %c0_40 = arith.constant 0 : index
    %111 = vector.load %arg9[%c0_38, %c0_39, %c0_40] : memref<1x1x32xf32, #tpu.memory_space<vmem>>, vector<1x1x32xf32>
    %112 = vector.shape_cast %111 : vector<1x1x32xf32> to vector<1x32xf32>
    %c0_41 = arith.constant 0 : index
    %c0_42 = arith.constant 0 : index
    %c0_43 = arith.constant 0 : index
    %113 = vector.load %arg10[%c0_41, %c0_42, %c0_43] : memref<1x1x32xf32, #tpu.memory_space<vmem>>, vector<1x1x32xf32>
    %114 = vector.shape_cast %113 : vector<1x1x32xf32> to vector<1x32xf32>
    %cst_44 = arith.constant dense<0.000000e+00> : vector<2x8xf32>
    %115 = vector.multi_reduction <add>, %110, %cst_44 [2] : vector<2x8x32xf32> to vector<2x8xf32>
    %116 = vector.shape_cast %115 : vector<2x8xf32> to vector<2x8x1xf32>
    %cst_45 = arith.constant 3.200000e+01 : f32
    %117 = vector.broadcast %cst_45 : f32 to vector<2x8x1xf32>
    %118 = arith.divf %116, %117 : vector<2x8x1xf32>
    %119 = vector.broadcast %118 : vector<2x8x1xf32> to vector<2x8x32xf32>
    %120 = arith.subf %110, %119 : vector<2x8x32xf32>
    %121 = arith.mulf %120, %120 : vector<2x8x32xf32>
    %cst_46 = arith.constant dense<0.000000e+00> : vector<2x8xf32>
    %122 = vector.multi_reduction <add>, %121, %cst_46 [2] : vector<2x8x32xf32> to vector<2x8xf32>
    %123 = vector.shape_cast %122 : vector<2x8xf32> to vector<2x8x1xf32>
    %cst_47 = arith.constant 3.200000e+01 : f32
    %124 = vector.broadcast %cst_47 : f32 to vector<2x8x1xf32>
    %125 = arith.divf %123, %124 : vector<2x8x1xf32>
    %cst_48 = arith.constant 9.99999974E-6 : f32
    %126 = vector.broadcast %cst_48 : f32 to vector<2x8x1xf32>
    %127 = arith.addf %125, %126 : vector<2x8x1xf32>
    %128 = math.rsqrt %127 : vector<2x8x1xf32>
    %129 = vector.broadcast %128 : vector<2x8x1xf32> to vector<2x8x32xf32>
    %130 = arith.mulf %120, %129 : vector<2x8x32xf32>
    %131 = vector.shape_cast %112 : vector<1x32xf32> to vector<1x1x32xf32>
    %132 = vector.broadcast %131 : vector<1x1x32xf32> to vector<2x8x32xf32>
    %133 = arith.mulf %130, %132 : vector<2x8x32xf32>
    %134 = vector.shape_cast %114 : vector<1x32xf32> to vector<1x1x32xf32>
    %135 = vector.broadcast %134 : vector<1x1x32xf32> to vector<2x8x32xf32>
    %136 = arith.addf %133, %135 : vector<2x8x32xf32>
    %137 = vector.shape_cast %136 : vector<2x8x32xf32> to vector<16x32xf32>
    %138 = arith.truncf %137 : vector<16x32xf32> to vector<16x32xbf16>
    %c0_49 = arith.constant 0 : index
    %c0_50 = arith.constant 0 : index
    %c0_51 = arith.constant 0 : index
    %139 = vector.load %arg13[%c0_49, %c0_50, %c0_51] : memref<1x32x64xbf16, #tpu.memory_space<vmem>>, vector<1x32x64xbf16>
    %140 = vector.shape_cast %139 : vector<1x32x64xbf16> to vector<32x64xbf16>
    %cst_52 = arith.constant dense<0.000000e+00> : vector<16x64xf32>
    %141 = tpu.matmul %138, %140, %cst_52 {dimension_numbers = #tpu.dot_dimension_numbers<[1], [0], [0], [1], [0, 0, 1, 1], [], []>} : vector<16x32xbf16>, vector<32x64xbf16>, vector<16x64xf32> -> vector<16x64xf32>
    %c0_53 = arith.constant 0 : index
    %c0_54 = arith.constant 0 : index
    %c0_55 = arith.constant 0 : index
    %142 = vector.load %arg14[%c0_53, %c0_54, %c0_55] : memref<1x1x64xf32, #tpu.memory_space<vmem>>, vector<1x1x64xf32>
    %143 = vector.shape_cast %142 : vector<1x1x64xf32> to vector<1x64xf32>
    %144 = vector.broadcast %143 : vector<1x64xf32> to vector<16x64xf32>
    %145 = arith.addf %141, %144 : vector<16x64xf32>
    %cst_56 = arith.constant 0.000000e+00 : f32
    %146 = vector.broadcast %cst_56 : f32 to vector<16x64xf32>
    %147 = arith.maximumf %145, %146 : vector<16x64xf32>
    %148 = arith.truncf %147 : vector<16x64xf32> to vector<16x64xbf16>
    %c0_57 = arith.constant 0 : index
    %c0_58 = arith.constant 0 : index
    %c0_59 = arith.constant 0 : index
    %149 = vector.load %arg15[%c0_57, %c0_58, %c0_59] : memref<1x64x32xbf16, #tpu.memory_space<vmem>>, vector<1x64x32xbf16>
    %150 = vector.shape_cast %149 : vector<1x64x32xbf16> to vector<64x32xbf16>
    %cst_60 = arith.constant dense<0.000000e+00> : vector<16x32xf32>
    %151 = tpu.matmul %148, %150, %cst_60 {dimension_numbers = #tpu.dot_dimension_numbers<[1], [0], [0], [1], [0, 0, 1, 1], [], []>} : vector<16x64xbf16>, vector<64x32xbf16>, vector<16x32xf32> -> vector<16x32xf32>
    %c0_61 = arith.constant 0 : index
    %c0_62 = arith.constant 0 : index
    %c0_63 = arith.constant 0 : index
    %152 = vector.load %arg16[%c0_61, %c0_62, %c0_63] : memref<1x1x32xf32, #tpu.memory_space<vmem>>, vector<1x1x32xf32>
    %153 = vector.shape_cast %152 : vector<1x1x32xf32> to vector<1x32xf32>
    %154 = vector.broadcast %153 : vector<1x32xf32> to vector<16x32xf32>
    %155 = arith.addf %151, %154 : vector<16x32xf32>
    %156 = vector.shape_cast %155 : vector<16x32xf32> to vector<2x8x32xf32>
    %157 = arith.addf %136, %156 : vector<2x8x32xf32>
    %c0_64 = arith.constant 0 : index
    %c0_65 = arith.constant 0 : index
    %c0_66 = arith.constant 0 : index
    %158 = vector.load %arg11[%c0_64, %c0_65, %c0_66] : memref<1x1x32xf32, #tpu.memory_space<vmem>>, vector<1x1x32xf32>
    %159 = vector.shape_cast %158 : vector<1x1x32xf32> to vector<1x32xf32>
    %c0_67 = arith.constant 0 : index
    %c0_68 = arith.constant 0 : index
    %c0_69 = arith.constant 0 : index
    %160 = vector.load %arg12[%c0_67, %c0_68, %c0_69] : memref<1x1x32xf32, #tpu.memory_space<vmem>>, vector<1x1x32xf32>
    %161 = vector.shape_cast %160 : vector<1x1x32xf32> to vector<1x32xf32>
    %cst_70 = arith.constant dense<0.000000e+00> : vector<2x8xf32>
    %162 = vector.multi_reduction <add>, %157, %cst_70 [2] : vector<2x8x32xf32> to vector<2x8xf32>
    %163 = vector.shape_cast %162 : vector<2x8xf32> to vector<2x8x1xf32>
    %cst_71 = arith.constant 3.200000e+01 : f32
    %164 = vector.broadcast %cst_71 : f32 to vector<2x8x1xf32>
    %165 = arith.divf %163, %164 : vector<2x8x1xf32>
    %166 = vector.broadcast %165 : vector<2x8x1xf32> to vector<2x8x32xf32>
    %167 = arith.subf %157, %166 : vector<2x8x32xf32>
    %168 = arith.mulf %167, %167 : vector<2x8x32xf32>
    %cst_72 = arith.constant dense<0.000000e+00> : vector<2x8xf32>
    %169 = vector.multi_reduction <add>, %168, %cst_72 [2] : vector<2x8x32xf32> to vector<2x8xf32>
    %170 = vector.shape_cast %169 : vector<2x8xf32> to vector<2x8x1xf32>
    %cst_73 = arith.constant 3.200000e+01 : f32
    %171 = vector.broadcast %cst_73 : f32 to vector<2x8x1xf32>
    %172 = arith.divf %170, %171 : vector<2x8x1xf32>
    %cst_74 = arith.constant 9.99999974E-6 : f32
    %173 = vector.broadcast %cst_74 : f32 to vector<2x8x1xf32>
    %174 = arith.addf %172, %173 : vector<2x8x1xf32>
    %175 = math.rsqrt %174 : vector<2x8x1xf32>
    %176 = vector.broadcast %175 : vector<2x8x1xf32> to vector<2x8x32xf32>
    %177 = arith.mulf %167, %176 : vector<2x8x32xf32>
    %178 = vector.shape_cast %159 : vector<1x32xf32> to vector<1x1x32xf32>
    %179 = vector.broadcast %178 : vector<1x1x32xf32> to vector<2x8x32xf32>
    %180 = arith.mulf %177, %179 : vector<2x8x32xf32>
    %181 = vector.shape_cast %161 : vector<1x32xf32> to vector<1x1x32xf32>
    %182 = vector.broadcast %181 : vector<1x1x32xf32> to vector<2x8x32xf32>
    %183 = arith.addf %180, %182 : vector<2x8x32xf32>
    %c1_i32 = arith.constant 1 : i32
    %184 = arith.cmpi slt, %arg1, %c1_i32 : i32
    %185 = arith.extui %184 : i1 to i32
    %c0_i32_75 = arith.constant 0 : i32
    %186 = arith.cmpi ne, %185, %c0_i32_75 : i32
    scf.if %186 {
      %c0_78 = arith.constant 0 : index
      %c0_79 = arith.constant 0 : index
      %c0_80 = arith.constant 0 : index
      %190 = vector.load %arg22[%c0_78, %c0_79, %c0_80] : memref<2x8x32xf32, #tpu.memory_space<vmem>>, vector<2x8x32xf32>
      tpu.vector_store %arg22[%c0_78, %c0_79, %c0_80], %183 {strides = array<i32>} : memref<2x8x32xf32, #tpu.memory_space<vmem>>, vector<2x8x32xf32>,
    } else {
    }
    %c1_i32_76 = arith.constant 1 : i32
    %187 = arith.cmpi eq, %arg1, %c1_i32_76 : i32
    %188 = arith.extui %187 : i1 to i32
    %c0_i32_77 = arith.constant 0 : i32
    %189 = arith.cmpi ne, %188, %c0_i32_77 : i32
    scf.if %189 {
      %c0_78 = arith.constant 0 : index
      %c0_79 = arith.constant 0 : index
      %190 = vector.load %arg17[%c0_78, %c0_79] : memref<1x32xf32, #tpu.memory_space<vmem>>, vector<1x32xf32>
      %c0_80 = arith.constant 0 : index
      %c0_81 = arith.constant 0 : index
      %191 = vector.load %arg18[%c0_80, %c0_81] : memref<1x32xf32, #tpu.memory_space<vmem>>, vector<1x32xf32>
      %cst_82 = arith.constant dense<0.000000e+00> : vector<2x8xf32>
      %192 = vector.multi_reduction <add>, %183, %cst_82 [2] : vector<2x8x32xf32> to vector<2x8xf32>
      %193 = vector.shape_cast %192 : vector<2x8xf32> to vector<2x8x1xf32>
      %cst_83 = arith.constant 3.200000e+01 : f32
      %194 = vector.broadcast %cst_83 : f32 to vector<2x8x1xf32>
      %195 = arith.divf %193, %194 : vector<2x8x1xf32>
      %196 = vector.broadcast %195 : vector<2x8x1xf32> to vector<2x8x32xf32>
      %197 = arith.subf %183, %196 : vector<2x8x32xf32>
      %198 = arith.mulf %197, %197 : vector<2x8x32xf32>
      %cst_84 = arith.constant dense<0.000000e+00> : vector<2x8xf32>
      %199 = vector.multi_reduction <add>, %198, %cst_84 [2] : vector<2x8x32xf32> to vector<2x8xf32>
      %200 = vector.shape_cast %199 : vector<2x8xf32> to vector<2x8x1xf32>
      %cst_85 = arith.constant 3.200000e+01 : f32
      %201 = vector.broadcast %cst_85 : f32 to vector<2x8x1xf32>
      %202 = arith.divf %200, %201 : vector<2x8x1xf32>
      %cst_86 = arith.constant 9.99999974E-6 : f32
      %203 = vector.broadcast %cst_86 : f32 to vector<2x8x1xf32>
      %204 = arith.addf %202, %203 : vector<2x8x1xf32>
      %205 = math.rsqrt %204 : vector<2x8x1xf32>
      %206 = vector.broadcast %205 : vector<2x8x1xf32> to vector<2x8x32xf32>
      %207 = arith.mulf %197, %206 : vector<2x8x32xf32>
      %208 = vector.shape_cast %190 : vector<1x32xf32> to vector<1x1x32xf32>
      %209 = vector.broadcast %208 : vector<1x1x32xf32> to vector<2x8x32xf32>
      %210 = arith.mulf %207, %209 : vector<2x8x32xf32>
      %211 = vector.shape_cast %191 : vector<1x32xf32> to vector<1x1x32xf32>
      %212 = vector.broadcast %211 : vector<1x1x32xf32> to vector<2x8x32xf32>
      %213 = arith.addf %210, %212 : vector<2x8x32xf32>
      %214 = vector.shape_cast %213 : vector<2x8x32xf32> to vector<16x32xf32>
      %215 = arith.truncf %214 : vector<16x32xf32> to vector<16x32xbf16>
      %c0_87 = arith.constant 0 : index
      %c0_88 = arith.constant 0 : index
      %216 = vector.load %arg19[%c0_87, %c0_88] : memref<32x128xbf16, #tpu.memory_space<vmem>>, vector<32x128xbf16>
      %cst_89 = arith.constant dense<0.000000e+00> : vector<16x128xf32>
      %217 = tpu.matmul %215, %216, %cst_89 {dimension_numbers = #tpu.dot_dimension_numbers<[1], [0], [0], [1], [0, 0, 1, 1], [], []>} : vector<16x32xbf16>, vector<32x128xbf16>, vector<16x128xf32> -> vector<16x128xf32>
      %c0_90 = arith.constant 0 : index
      %c0_91 = arith.constant 0 : index
      %218 = vector.load %arg20[%c0_90, %c0_91] : memref<1x128xf32, #tpu.memory_space<vmem>>, vector<1x128xf32>
      %219 = vector.broadcast %218 : vector<1x128xf32> to vector<16x128xf32>
      %220 = arith.addf %217, %219 : vector<16x128xf32>
      %221 = vector.shape_cast %220 : vector<16x128xf32> to vector<2x8x128xf32>
      %c0_92 = arith.constant 0 : index
      %c0_93 = arith.constant 0 : index
      %c0_94 = arith.constant 0 : index
      %222 = vector.load %arg21[%c0_92, %c0_93, %c0_94] : memref<2x8x128xf32, #tpu.memory_space<vmem>>, vector<2x8x128xf32>
      tpu.vector_store %arg21[%c0_92, %c0_93, %c0_94], %221 {strides = array<i32>} : memref<2x8x128xf32, #tpu.memory_space<vmem>>, vector<2x8x128xf32>,
    } else {
    }
    return
  }
  func.func @transform_0(%arg0: i32, %arg1: i32) -> (i32, i32, i32) {
    %c0_i32 = arith.constant 0 : i32
    %c0_i32_0 = arith.constant 0 : i32
    %c0_i32_1 = arith.constant 0 : i32
    return %arg0, %c0_i32, %c0_i32_0 : i32, i32, i32
  }
  func.func @transform_1(%arg0: i32, %arg1: i32) -> (i32, i32, i32) {
    %c0_i32 = arith.constant 0 : i32
    %c0_i32_0 = arith.constant 0 : i32
    %c0_i32_1 = arith.constant 0 : i32
    return %arg0, %c0_i32, %c0_i32_0 : i32, i32, i32
  }
  func.func @transform_2(%arg0: i32, %arg1: i32) -> (i32, i32, i32) {
    %c0_i32 = arith.constant 0 : i32
    %c0_i32_0 = arith.constant 0 : i32
    %c0_i32_1 = arith.constant 0 : i32
    %c0_i32_2 = arith.constant 0 : i32
    return %c0_i32, %c0_i32_0, %c0_i32_1 : i32, i32, i32
  }
  func.func @transform_3(%arg0: i32, %arg1: i32) -> (i32, i32, i32) {
    %c0_i32 = arith.constant 0 : i32
    %c0_i32_0 = arith.constant 0 : i32
    %c0_i32_1 = arith.constant 0 : i32
    return %arg1, %c0_i32, %c0_i32_0 : i32, i32, i32
  }
  func.func @transform_4(%arg0: i32, %arg1: i32) -> (i32, i32, i32) {
    %c0_i32 = arith.constant 0 : i32
    %c0_i32_0 = arith.constant 0 : i32
    %c0_i32_1 = arith.constant 0 : i32
    return %arg1, %c0_i32, %c0_i32_0 : i32, i32, i32
  }
  func.func @transform_5(%arg0: i32, %arg1: i32) -> (i32, i32, i32) {
    %c0_i32 = arith.constant 0 : i32
    %c0_i32_0 = arith.constant 0 : i32
    %c0_i32_1 = arith.constant 0 : i32
    return %arg1, %c0_i32, %c0_i32_0 : i32, i32, i32
  }
  func.func @transform_6(%arg0: i32, %arg1: i32) -> (i32, i32, i32) {
    %c0_i32 = arith.constant 0 : i32
    %c0_i32_0 = arith.constant 0 : i32
    %c0_i32_1 = arith.constant 0 : i32
    return %arg1, %c0_i32, %c0_i32_0 : i32, i32, i32
  }
  func.func @transform_7(%arg0: i32, %arg1: i32) -> (i32, i32, i32) {
    %c0_i32 = arith.constant 0 : i32
    %c0_i32_0 = arith.constant 0 : i32
    %c0_i32_1 = arith.constant 0 : i32
    return %arg1, %c0_i32, %c0_i32_0 : i32, i32, i32
  }
  func.func @transform_8(%arg0: i32, %arg1: i32) -> (i32, i32, i32) {
    %c0_i32 = arith.constant 0 : i32
    %c0_i32_0 = arith.constant 0 : i32
    %c0_i32_1 = arith.constant 0 : i32
    return %arg1, %c0_i32, %c0_i32_0 : i32, i32, i32
  }
  func.func @transform_9(%arg0: i32, %arg1: i32) -> (i32, i32, i32) {
    %c0_i32 = arith.constant 0 : i32
    %c0_i32_0 = arith.constant 0 : i32
    %c0_i32_1 = arith.constant 0 : i32
    return %arg1, %c0_i32, %c0_i32_0 : i32, i32, i32
  }
  func.func @transform_10(%arg0: i32, %arg1: i32) -> (i32, i32, i32) {
    %c0_i32 = arith.constant 0 : i32
    %c0_i32_0 = arith.constant 0 : i32
    %c0_i32_1 = arith.constant 0 : i32
    return %arg1, %c0_i32, %c0_i32_0 : i32, i32, i32
  }
  func.func @transform_11(%arg0: i32, %arg1: i32) -> (i32, i32, i32) {
    %c0_i32 = arith.constant 0 : i32
    %c0_i32_0 = arith.constant 0 : i32
    %c0_i32_1 = arith.constant 0 : i32
    return %arg1, %c0_i32, %c0_i32_0 : i32, i32, i32
  }
  func.func @transform_12(%arg0: i32, %arg1: i32) -> (i32, i32, i32) {
    %c0_i32 = arith.constant 0 : i32
    %c0_i32_0 = arith.constant 0 : i32
    %c0_i32_1 = arith.constant 0 : i32
    return %arg1, %c0_i32, %c0_i32_0 : i32, i32, i32
  }
  func.func @transform_13(%arg0: i32, %arg1: i32) -> (i32, i32, i32) {
    %c0_i32 = arith.constant 0 : i32
    %c0_i32_0 = arith.constant 0 : i32
    %c0_i32_1 = arith.constant 0 : i32
    return %arg1, %c0_i32, %c0_i32_0 : i32, i32, i32
  }
  func.func @transform_14(%arg0: i32, %arg1: i32) -> (i32, i32, i32) {
    %c0_i32 = arith.constant 0 : i32
    %c0_i32_0 = arith.constant 0 : i32
    %c0_i32_1 = arith.constant 0 : i32
    return %arg1, %c0_i32, %c0_i32_0 : i32, i32, i32
  }
  func.func @transform_15(%arg0: i32, %arg1: i32) -> (i32, i32) {
    %c0_i32 = arith.constant 0 : i32
    %c0_i32_0 = arith.constant 0 : i32
    %c0_i32_1 = arith.constant 0 : i32
    return %c0_i32, %c0_i32_0 : i32, i32
  }
  func.func @transform_16(%arg0: i32, %arg1: i32) -> (i32, i32) {
    %c0_i32 = arith.constant 0 : i32
    %c0_i32_0 = arith.constant 0 : i32
    %c0_i32_1 = arith.constant 0 : i32
    return %c0_i32, %c0_i32_0 : i32, i32
  }
  func.func @transform_17(%arg0: i32, %arg1: i32) -> (i32, i32) {
    %c0_i32 = arith.constant 0 : i32
    %c0_i32_0 = arith.constant 0 : i32
    %c0_i32_1 = arith.constant 0 : i32
    return %c0_i32, %c0_i32_0 : i32, i32
  }
  func.func @transform_18(%arg0: i32, %arg1: i32) -> (i32, i32) {
    %c0_i32 = arith.constant 0 : i32
    %c0_i32_0 = arith.constant 0 : i32
    %c0_i32_1 = arith.constant 0 : i32
    return %c0_i32, %c0_i32_0 : i32, i32
  }
  func.func @transform_19(%arg0: i32, %arg1: i32) -> (i32, i32, i32) {
    %c0_i32 = arith.constant 0 : i32
    %c0_i32_0 = arith.constant 0 : i32
    %c0_i32_1 = arith.constant 0 : i32
    return %arg0, %c0_i32, %c0_i32_0 : i32, i32, i32
  }
}

</mosaic_0001>

<llo_original>
// kernel: tpu_custom_call.1
$region0: #{tpu_custom_call.1}
  #allocation0 [shape = 'u32[]', space=smem, size = 0x4, offset = 0x4, fixed_abs, tag = 'smem constant byte address 0x4 - core index']
  #allocation1 [shape = 'u32[144,128]{1,0:T(1,128)}', space=vmem, size = 0x12000, scoped, tag = 'internal scratch']
  #allocation2 [shape = 'f32[2,8,32]{2,1,0:T(8,128)}', space=vmem, size = 0x2000, scoped, tag = 'scratch operand']
  %s0 = inlined_call_operand.hbm [shape: f32[2,8,32], index: 0, kind: input, shape index: {}]
  %s1 = inlined_call_operand.hbm [shape: f32[2,1,8], index: 1, kind: input, shape index: {}]
  %s2 = inlined_call_operand.hbm [shape: f32[1,8,8], index: 2, kind: input, shape index: {}]
  %s3 = inlined_call_operand.vmem [shape: bf16[2,32,96], index: 3, kind: input, shape index: {}]
  %s4 = inlined_call_operand.hbm [shape: f32[2,1,96], index: 4, kind: input, shape index: {}]
  %s5 = inlined_call_operand.vmem [shape: bf16[2,32,32], index: 5, kind: input, shape index: {}]
  %s6 = inlined_call_operand.hbm [shape: f32[2,1,32], index: 6, kind: input, shape index: {}]
  %s7 = inlined_call_operand.hbm [shape: f32[2,1,32], index: 7, kind: input, shape index: {}]
  %s8 = inlined_call_operand.hbm [shape: f32[2,1,32], index: 8, kind: input, shape index: {}]
  %s9 = inlined_call_operand.hbm [shape: f32[2,1,32], index: 9, kind: input, shape index: {}]
  %s10 = inlined_call_operand.hbm [shape: f32[2,1,32], index: 10, kind: input, shape index: {}]
  %s11 = inlined_call_operand.vmem [shape: bf16[2,32,64], index: 11, kind: input, shape index: {}]
  %s12 = inlined_call_operand.hbm [shape: f32[2,1,64], index: 12, kind: input, shape index: {}]
  %s13 = inlined_call_operand.vmem [shape: bf16[2,64,32], index: 13, kind: input, shape index: {}]
  %s14 = inlined_call_operand.vmem [shape: f32[2,1,32], index: 14, kind: input, shape index: {}]
  %s15 = inlined_call_operand.vmem [shape: f32[1,32], index: 15, kind: input, shape index: {}]
  %s16 = inlined_call_operand.vmem [shape: f32[1,32], index: 16, kind: input, shape index: {}]
  %s17 = inlined_call_operand.vmem [shape: bf16[32,128], index: 17, kind: input, shape index: {}]
  %s18 = inlined_call_operand.vmem [shape: f32[1,128], index: 18, kind: input, shape index: {}]
  %s19 = inlined_call_operand.hbm [shape: f32[2,8,128], index: 19, kind: output, shape index: {}]
  %s20 = sld [smem:[#allocation0]]
  $region161: #{tpu_custom_call.1} parent=0
    _
  %s22 = ssub.s32 1, %s20
  %s23 = scalar_select 0, %s22, %s20
  $region1: #{tpu_custom_call.1} parent=0
    #allocation3 [shape = 'u8[8192]{0}', space=vmem, size = 0x2000, scoped, tag = 'input window, operand 0, single buffered']
    #allocation4 [shape = 's32[2]{0}', space=sflag, size = 0x8, scoped, tag = 'scoped memory for tpu_custom_call.1']
    #allocation5 [shape = 's32[2]{0}', space=sflag, size = 0x8, scoped, tag = 'scoped memory for tpu_custom_call.1']
    #allocation6 [shape = 'u8[1024]{0}', space=vmem, size = 0x400, scoped, tag = 'input window, operand 1, single buffered']
    #allocation7 [shape = 's32[1]{0}', space=sflag, size = 0x4, scoped, tag = 'scoped memory for tpu_custom_call.1']
    #allocation8 [shape = 'u8[4096]{0}', space=vmem, size = 0x1000, scoped, tag = 'input window, operand 2, single buffered']
    #allocation9 [shape = 'u8[1024]{0}', space=vmem, size = 0x400, scoped, tag = 'input window, operand 4']
    #allocation10 [shape = 's32[2]{0}', space=sflag, size = 0x8, scoped, tag = 'scoped memory for tpu_custom_call.1']
    #allocation11 [shape = 'u8[1024]{0}', space=vmem, size = 0x400, scoped, tag = 'input window, operand 6']
    #allocation12 [shape = 'u8[1024]{0}', space=vmem, size = 0x400, scoped, tag = 'input window, operand 7']
    #allocation13 [shape = 's32[2]{0}', space=sflag, size = 0x8, scoped, tag = 'scoped memory for tpu_custom_call.1']
    #allocation14 [shape = 'u8[1024]{0}', space=vmem, size = 0x400, scoped, tag = 'input window, operand 8']
    #allocation15 [shape = 'u8[1024]{0}', space=vmem, size = 0x400, scoped, tag = 'input window, operand 9']
    #allocation16 [shape = 's32[2]{0}', space=sflag, size = 0x8, scoped, tag = 'scoped memory for tpu_custom_call.1']
    #allocation17 [shape = 'u8[1024]{0}', space=vmem, size = 0x400, scoped, tag = 'input window, operand 10']
    #allocation18 [shape = 'u8[1024]{0}', space=vmem, size = 0x400, scoped, tag = 'input window, operand 12']
    #allocation19 [shape = 's32[2]{0}', space=sflag, size = 0x8, scoped, tag = 'scoped memory for tpu_custom_call.1']
    #allocation20 [shape = 'u8[8192]{0}', space=vmem, size = 0x2000, scoped, tag = 'output window, operand 0, single buffered']
    %24 = vsyncpa [#allocation4], 0
    %25 = vsyncpa [#allocation7], 0
    %26 = vsyncpa [#allocation10], 0
    %s27 = scalar_lea.sflag [#allocation10], 1
    %28 = vsyncpa %s27, 0
    %29 = vsyncpa [#allocation13], 0
    %s30 = scalar_lea.sflag [#allocation13], 1
    %31 = vsyncpa %s30, 0
    %32 = vsyncpa [#allocation16], 0
    %s33 = scalar_lea.sflag [#allocation16], 1
    %34 = vsyncpa %s33, 0
    %35 = vsyncpa [#allocation19], 0
    %s36 = scalar_lea.sflag [#allocation19], 1
    %37 = vsyncpa %s36, 0
    %38 = vsyncpa [#allocation5], 0
    loop: start=0, step=1, limit=4
    $region2: #{tpu_custom_call.1} parent=1 // loop_pre_header
      _
    $region3: #{tpu_custom_call.1} parent=1 // loop_header
      %s40 = sphi 0, %s44
      %p41 = scmp.ge.s32.totalorder %s40, 4
      %s47 = sphi 0, %s59
      %s48 = sphi 0, %s55
      %s49 = sphi 0, %s47
      %s50 = sphi 0, %s48
      %s51 = sphi 0, %s49
      %s52 = sphi 0, %s50
      %s62 = sphi 0, %s64
      %s65 = sphi 0, %s62
      %s66 = sphi 0, %s65
      %s82 = sphi 0, %s66
      %s88 = sphi 0, %s90
      %s91 = sphi 0, %s88
      %s92 = sphi 0, %s91
      %s108 = sphi 0, %s92
      %s112 = sphi 0, %s112
      %s114 = sphi 0, %s112
      %s115 = sphi 0, %s114
      %s129 = sphi 0, %s115
      %s135 = sphi 0, %s137
      %s138 = sphi 0, %s135
      %s139 = sphi 0, %s138
      %s155 = sphi 0, %s139
      %s161 = sphi 0, %s163
      %s164 = sphi 0, %s161
      %s165 = sphi 0, %s164
      %s181 = sphi 0, %s165
      %s187 = sphi 0, %s189
      %s190 = sphi 0, %s187
      %s191 = sphi 0, %s190
      %s207 = sphi 0, %s191
      %s213 = sphi 0, %s215
      %s216 = sphi 0, %s213
      %s217 = sphi 0, %s216
      %s233 = sphi 0, %s217
      %s239 = sphi 0, %s241
      %s242 = sphi 0, %s239
      %s243 = sphi 0, %s242
      %s259 = sphi 0, %s243
      %s265 = sphi 0, %s267
      %s268 = sphi 0, %s265
      %s269 = sphi 0, %s268
      %s285 = sphi 0, %s269
      %s291 = sphi 0, %s293
      %s294 = sphi 0, %s291
      %s295 = sphi 0, %s294
      %s311 = sphi 0, %s295
      %s317 = sphi 0, %s319
      %s320 = sphi 0, %s317
      %s321 = sphi 0, %s320
      %s337 = sphi 0, %s321
      %s343 = sphi 0, %s345
      %s346 = sphi 0, %s343
      %s347 = sphi 0, %s346
      %s363 = sphi 0, %s347
      %s369 = sphi 0, %s371
      %s372 = sphi 0, %s369
      %s373 = sphi 0, %s372
      %s389 = sphi 0, %s373
      %s395 = sphi 0, %s397
      %s398 = sphi 0, %s395
      %s399 = sphi 0, %s398
      %s415 = sphi 0, %s399
      %s421 = sphi 0, %s423
      %s424 = sphi 0, %s421
      %s425 = sphi 0, %s424
      %s441 = sphi 0, %s425
      %s445 = sphi 0, %s445
      %s447 = sphi 0, %s445
      %s448 = sphi 0, %s447
      %s462 = sphi 0, %s448
      %s466 = sphi 0, %s466
      %s468 = sphi 0, %s466
      %s469 = sphi 0, %s468
      %s483 = sphi 0, %s469
      %s487 = sphi 0, %s487
      %s489 = sphi 0, %s487
      %s490 = sphi 0, %s489
      %s504 = sphi 0, %s490
      %s508 = sphi 0, %s508
      %s510 = sphi 0, %s508
      %s511 = sphi 0, %s510
      %s525 = sphi 0, %s511
      %s531 = sphi 0, %s533
      %s534 = sphi 0, %s531
      %s535 = sphi 0, %s534
      %s551 = sphi 0, %s535
    $region4: #{tpu_custom_call.1} parent=1 // loop_header_branch
      %43 = sbr.rel (%p41) target = $region8
    $region5: #{tpu_custom_call.1} parent=1 // loop_body
      %s45 = ssub.s32 %s40, 1
      %s46 = ssub.s32 %s40, 2
      %s53 = sadd.s32 1, %s48
      %p54 = scmp.ge.s32.totalorder %s53, 2
      %s55 = scalar_select %p54, 0, %s53
      %s56 = sadd.s32 1, %s47
      %s57 = scalar_select %p54, %s56, %s47
      %p58 = scmp.ge.s32.totalorder %s57, 1
      %s59 = scalar_select %p58, 0, %s57
      %s60 = ssub.s32 %s47, %s59
      %p61 = scmp.eq.s32.totalorder %s60, 0
      %s63 = sadd.s32 %s62, 1
      %s64 = scalar_select %p61, %s62, %s63
      %p67 = pneg %p61
      %p68 = scmp.eq.s32.totalorder %s40, 1
      %p69 = por %p67, %p68
      %p70 = scmp.ne.s32.totalorder %s62, %s65
      %p71 = scmp.eq.s32.totalorder %s40, 0
      %p72 = por %p70, %p71
      %p73 = scmp.ne.s32.totalorder %s62, %s65
      %p74 = scmp.eq.s32.totalorder %s45, 1
      %p75 = por %p73, %p74
      %p76 = scmp.ne.s32.totalorder %s65, %s66
      %p77 = scmp.eq.s32.totalorder %s45, 0
      %p78 = por %p76, %p77
      %p79 = scmp.ne.s32.totalorder %s65, %s66
      %p80 = scmp.eq.s32.totalorder %s46, 1
      %p81 = por %p79, %p80
      %p83 = scmp.ne.s32.totalorder %s66, %s82
      %p84 = scmp.eq.s32.totalorder %s46, 0
      %p85 = por %p83, %p84
      %s86 = ssub.s32 %s47, %s59
      %p87 = scmp.eq.s32.totalorder %s86, 0
      %s89 = sadd.s32 %s88, 1
      %s90 = scalar_select %p87, %s88, %s89
      %p93 = pneg %p87
      %p94 = scmp.eq.s32.totalorder %s40, 1
      %p95 = por %p93, %p94
      %p96 = scmp.ne.s32.totalorder %s88, %s91
      %p97 = scmp.eq.s32.totalorder %s40, 0
      %p98 = por %p96, %p97
      %p99 = scmp.ne.s32.totalorder %s88, %s91
      %p100 = scmp.eq.s32.totalorder %s45, 1
      %p101 = por %p99, %p100
      %p102 = scmp.ne.s32.totalorder %s91, %s92
      %p103 = scmp.eq.s32.totalorder %s45, 0
      %p104 = por %p102, %p103
      %p105 = scmp.ne.s32.totalorder %s91, %s92
      %p106 = scmp.eq.s32.totalorder %s46, 1
      %p107 = por %p105, %p106
      %p109 = scmp.ne.s32.totalorder %s92, %s108
      %p110 = scmp.eq.s32.totalorder %s46, 0
      %p111 = por %p109, %p110
      %s113 = sadd.s32 %s112, 1
      %p116 = scmp.eq.s32.totalorder %s40, 1
      %p117 = scmp.ne.s32.totalorder %s112, %s114
      %p118 = scmp.eq.s32.totalorder %s40, 0
      %p119 = por %p117, %p118
      %p120 = scmp.ne.s32.totalorder %s112, %s114
      %p121 = scmp.eq.s32.totalorder %s45, 1
      %p122 = por %p120, %p121
      %p123 = scmp.ne.s32.totalorder %s114, %s115
      %p124 = scmp.eq.s32.totalorder %s45, 0
      %p125 = por %p123, %p124
      %p126 = scmp.ne.s32.totalorder %s114, %s115
      %p127 = scmp.eq.s32.totalorder %s46, 1
      %p128 = por %p126, %p127
      %p130 = scmp.ne.s32.totalorder %s115, %s129
      %p131 = scmp.eq.s32.totalorder %s46, 0
      %p132 = por %p130, %p131
      %s133 = ssub.s32 %s48, %s55
      %p134 = scmp.eq.s32.totalorder %s133, 0
      %s136 = sadd.s32 %s135, 1
      %s137 = scalar_select %p134, %s135, %s136
      %p140 = pneg %p134
      %p141 = scmp.eq.s32.totalorder %s40, 1
      %p142 = por %p140, %p141
      %p143 = scmp.ne.s32.totalorder %s135, %s138
      %p144 = scmp.eq.s32.totalorder %s40, 0
      %p145 = por %p143, %p144
      %p146 = scmp.ne.s32.totalorder %s135, %s138
      %p147 = scmp.eq.s32.totalorder %s45, 1
      %p148 = por %p146, %p147
      %p149 = scmp.ne.s32.totalorder %s138, %s139
      %p150 = scmp.eq.s32.totalorder %s45, 0
      %p151 = por %p149, %p150
      %p152 = scmp.ne.s32.totalorder %s138, %s139
      %p153 = scmp.eq.s32.totalorder %s46, 1
      %p154 = por %p152, %p153
      %p156 = scmp.ne.s32.totalorder %s139, %s155
      %p157 = scmp.eq.s32.totalorder %s46, 0
      %p158 = por %p156, %p157
      %s159 = ssub.s32 %s48, %s55
      %p160 = scmp.eq.s32.totalorder %s159, 0
      %s162 = sadd.s32 %s161, 1
      %s163 = scalar_select %p160, %s161, %s162
      %p166 = pneg %p160
      %p167 = scmp.eq.s32.totalorder %s40, 1
      %p168 = por %p166, %p167
      %p169 = scmp.ne.s32.totalorder %s161, %s164
      %p170 = scmp.eq.s32.totalorder %s40, 0
      %p171 = por %p169, %p170
      %p172 = scmp.ne.s32.totalorder %s161, %s164
      %p173 = scmp.eq.s32.totalorder %s45, 1
      %p174 = por %p172, %p173
      %p175 = scmp.ne.s32.totalorder %s164, %s165
      %p176 = scmp.eq.s32.totalorder %s45, 0
      %p177 = por %p175, %p176
      %p178 = scmp.ne.s32.totalorder %s164, %s165
      %p179 = scmp.eq.s32.totalorder %s46, 1
      %p180 = por %p178, %p179
      %p182 = scmp.ne.s32.totalorder %s165, %s181
      %p183 = scmp.eq.s32.totalorder %s46, 0
      %p184 = por %p182, %p183
      %s185 = ssub.s32 %s48, %s55
      %p186 = scmp.eq.s32.totalorder %s185, 0
      %s188 = sadd.s32 %s187, 1
      %s189 = scalar_select %p186, %s187, %s188
      %p192 = pneg %p186
      %p193 = scmp.eq.s32.totalorder %s40, 1
      %p194 = por %p192, %p193
      %p195 = scmp.ne.s32.totalorder %s187, %s190
      %p196 = scmp.eq.s32.totalorder %s40, 0
      %p197 = por %p195, %p196
      %p198 = scmp.ne.s32.totalorder %s187, %s190
      %p199 = scmp.eq.s32.totalorder %s45, 1
      %p200 = por %p198, %p199
      %p201 = scmp.ne.s32.totalorder %s190, %s191
      %p202 = scmp.eq.s32.totalorder %s45, 0
      %p203 = por %p201, %p202
      %p204 = scmp.ne.s32.totalorder %s190, %s191
      %p205 = scmp.eq.s32.totalorder %s46, 1
      %p206 = por %p204, %p205
      %p208 = scmp.ne.s32.totalorder %s191, %s207
      %p209 = scmp.eq.s32.totalorder %s46, 0
      %p210 = por %p208, %p209
      %s211 = ssub.s32 %s48, %s55
      %p212 = scmp.eq.s32.totalorder %s211, 0
      %s214 = sadd.s32 %s213, 1
      %s215 = scalar_select %p212, %s213, %s214
      %p218 = pneg %p212
      %p219 = scmp.eq.s32.totalorder %s40, 1
      %p220 = por %p218, %p219
      %p221 = scmp.ne.s32.totalorder %s213, %s216
      %p222 = scmp.eq.s32.totalorder %s40, 0
      %p223 = por %p221, %p222
      %p224 = scmp.ne.s32.totalorder %s213, %s216
      %p225 = scmp.eq.s32.totalorder %s45, 1
      %p226 = por %p224, %p225
      %p227 = scmp.ne.s32.totalorder %s216, %s217
      %p228 = scmp.eq.s32.totalorder %s45, 0
      %p229 = por %p227, %p228
      %p230 = scmp.ne.s32.totalorder %s216, %s217
      %p231 = scmp.eq.s32.totalorder %s46, 1
      %p232 = por %p230, %p231
      %p234 = scmp.ne.s32.totalorder %s217, %s233
      %p235 = scmp.eq.s32.totalorder %s46, 0
      %p236 = por %p234, %p235
      %s237 = ssub.s32 %s48, %s55
      %p238 = scmp.eq.s32.totalorder %s237, 0
      %s240 = sadd.s32 %s239, 1
      %s241 = scalar_select %p238, %s239, %s240
      %p244 = pneg %p238
      %p245 = scmp.eq.s32.totalorder %s40, 1
      %p246 = por %p244, %p245
      %p247 = scmp.ne.s32.totalorder %s239, %s242
      %p248 = scmp.eq.s32.totalorder %s40, 0
      %p249 = por %p247, %p248
      %p250 = scmp.ne.s32.totalorder %s239, %s242
      %p251 = scmp.eq.s32.totalorder %s45, 1
      %p252 = por %p250, %p251
      %p253 = scmp.ne.s32.totalorder %s242, %s243
      %p254 = scmp.eq.s32.totalorder %s45, 0
      %p255 = por %p253, %p254
      %p256 = scmp.ne.s32.totalorder %s242, %s243
      %p257 = scmp.eq.s32.totalorder %s46, 1
      %p258 = por %p256, %p257
      %p260 = scmp.ne.s32.totalorder %s243, %s259
      %p261 = scmp.eq.s32.totalorder %s46, 0
      %p262 = por %p260, %p261
      %s263 = ssub.s32 %s48, %s55
      %p264 = scmp.eq.s32.totalorder %s263, 0
      %s266 = sadd.s32 %s265, 1
      %s267 = scalar_select %p264, %s265, %s266
      %p270 = pneg %p264
      %p271 = scmp.eq.s32.totalorder %s40, 1
      %p272 = por %p270, %p271
      %p273 = scmp.ne.s32.totalorder %s265, %s268
      %p274 = scmp.eq.s32.totalorder %s40, 0
      %p275 = por %p273, %p274
      %p276 = scmp.ne.s32.totalorder %s265, %s268
      %p277 = scmp.eq.s32.totalorder %s45, 1
      %p278 = por %p276, %p277
      %p279 = scmp.ne.s32.totalorder %s268, %s269
      %p280 = scmp.eq.s32.totalorder %s45, 0
      %p281 = por %p279, %p280
      %p282 = scmp.ne.s32.totalorder %s268, %s269
      %p283 = scmp.eq.s32.totalorder %s46, 1
      %p284 = por %p282, %p283
      %p286 = scmp.ne.s32.totalorder %s269, %s285
      %p287 = scmp.eq.s32.totalorder %s46, 0
      %p288 = por %p286, %p287
      %s289 = ssub.s32 %s48, %s55
      %p290 = scmp.eq.s32.totalorder %s289, 0
      %s292 = sadd.s32 %s291, 1
      %s293 = scalar_select %p290, %s291, %s292
      %p296 = pneg %p290
      %p297 = scmp.eq.s32.totalorder %s40, 1
      %p298 = por %p296, %p297
      %p299 = scmp.ne.s32.totalorder %s291, %s294
      %p300 = scmp.eq.s32.totalorder %s40, 0
      %p301 = por %p299, %p300
      %p302 = scmp.ne.s32.totalorder %s291, %s294
      %p303 = scmp.eq.s32.totalorder %s45, 1
      %p304 = por %p302, %p303
      %p305 = scmp.ne.s32.totalorder %s294, %s295
      %p306 = scmp.eq.s32.totalorder %s45, 0
      %p307 = por %p305, %p306
      %p308 = scmp.ne.s32.totalorder %s294, %s295
      %p309 = scmp.eq.s32.totalorder %s46, 1
      %p310 = por %p308, %p309
      %p312 = scmp.ne.s32.totalorder %s295, %s311
      %p313 = scmp.eq.s32.totalorder %s46, 0
      %p314 = por %p312, %p313
      %s315 = ssub.s32 %s48, %s55
      %p316 = scmp.eq.s32.totalorder %s315, 0
      %s318 = sadd.s32 %s317, 1
      %s319 = scalar_select %p316, %s317, %s318
      %p322 = pneg %p316
      %p323 = scmp.eq.s32.totalorder %s40, 1
      %p324 = por %p322, %p323
      %p325 = scmp.ne.s32.totalorder %s317, %s320
      %p326 = scmp.eq.s32.totalorder %s40, 0
      %p327 = por %p325, %p326
      %p328 = scmp.ne.s32.totalorder %s317, %s320
      %p329 = scmp.eq.s32.totalorder %s45, 1
      %p330 = por %p328, %p329
      %p331 = scmp.ne.s32.totalorder %s320, %s321
      %p332 = scmp.eq.s32.totalorder %s45, 0
      %p333 = por %p331, %p332
      %p334 = scmp.ne.s32.totalorder %s320, %s321
      %p335 = scmp.eq.s32.totalorder %s46, 1
      %p336 = por %p334, %p335
      %p338 = scmp.ne.s32.totalorder %s321, %s337
      %p339 = scmp.eq.s32.totalorder %s46, 0
      %p340 = por %p338, %p339
      %s341 = ssub.s32 %s48, %s55
      %p342 = scmp.eq.s32.totalorder %s341, 0
      %s344 = sadd.s32 %s343, 1
      %s345 = scalar_select %p342, %s343, %s344
      %p348 = pneg %p342
      %p349 = scmp.eq.s32.totalorder %s40, 1
      %p350 = por %p348, %p349
      %p351 = scmp.ne.s32.totalorder %s343, %s346
      %p352 = scmp.eq.s32.totalorder %s40, 0
      %p353 = por %p351, %p352
      %p354 = scmp.ne.s32.totalorder %s343, %s346
      %p355 = scmp.eq.s32.totalorder %s45, 1
      %p356 = por %p354, %p355
      %p357 = scmp.ne.s32.totalorder %s346, %s347
      %p358 = scmp.eq.s32.totalorder %s45, 0
      %p359 = por %p357, %p358
      %p360 = scmp.ne.s32.totalorder %s346, %s347
      %p361 = scmp.eq.s32.totalorder %s46, 1
      %p362 = por %p360, %p361
      %p364 = scmp.ne.s32.totalorder %s347, %s363
      %p365 = scmp.eq.s32.totalorder %s46, 0
      %p366 = por %p364, %p365
      %s367 = ssub.s32 %s48, %s55
      %p368 = scmp.eq.s32.totalorder %s367, 0
      %s370 = sadd.s32 %s369, 1
      %s371 = scalar_select %p368, %s369, %s370
      %p374 = pneg %p368
      %p375 = scmp.eq.s32.totalorder %s40, 1
      %p376 = por %p374, %p375
      %p377 = scmp.ne.s32.totalorder %s369, %s372
      %p378 = scmp.eq.s32.totalorder %s40, 0
      %p379 = por %p377, %p378
      %p380 = scmp.ne.s32.totalorder %s369, %s372
      %p381 = scmp.eq.s32.totalorder %s45, 1
      %p382 = por %p380, %p381
      %p383 = scmp.ne.s32.totalorder %s372, %s373
      %p384 = scmp.eq.s32.totalorder %s45, 0
      %p385 = por %p383, %p384
      %p386 = scmp.ne.s32.totalorder %s372, %s373
      %p387 = scmp.eq.s32.totalorder %s46, 1
      %p388 = por %p386, %p387
      %p390 = scmp.ne.s32.totalorder %s373, %s389
      %p391 = scmp.eq.s32.totalorder %s46, 0
      %p392 = por %p390, %p391
      %s393 = ssub.s32 %s48, %s55
      %p394 = scmp.eq.s32.totalorder %s393, 0
      %s396 = sadd.s32 %s395, 1
      %s397 = scalar_select %p394, %s395, %s396
      %p400 = pneg %p394
      %p401 = scmp.eq.s32.totalorder %s40, 1
      %p402 = por %p400, %p401
      %p403 = scmp.ne.s32.totalorder %s395, %s398
      %p404 = scmp.eq.s32.totalorder %s40, 0
      %p405 = por %p403, %p404
      %p406 = scmp.ne.s32.totalorder %s395, %s398
      %p407 = scmp.eq.s32.totalorder %s45, 1
      %p408 = por %p406, %p407
      %p409 = scmp.ne.s32.totalorder %s398, %s399
      %p410 = scmp.eq.s32.totalorder %s45, 0
      %p411 = por %p409, %p410
      %p412 = scmp.ne.s32.totalorder %s398, %s399
      %p413 = scmp.eq.s32.totalorder %s46, 1
      %p414 = por %p412, %p413
      %p416 = scmp.ne.s32.totalorder %s399, %s415
      %p417 = scmp.eq.s32.totalorder %s46, 0
      %p418 = por %p416, %p417
      %s419 = ssub.s32 %s48, %s55
      %p420 = scmp.eq.s32.totalorder %s419, 0
      %s422 = sadd.s32 %s421, 1
      %s423 = scalar_select %p420, %s421, %s422
      %p426 = pneg %p420
      %p427 = scmp.eq.s32.totalorder %s40, 1
      %p428 = por %p426, %p427
      %p429 = scmp.ne.s32.totalorder %s421, %s424
      %p430 = scmp.eq.s32.totalorder %s40, 0
      %p431 = por %p429, %p430
      %p432 = scmp.ne.s32.totalorder %s421, %s424
      %p433 = scmp.eq.s32.totalorder %s45, 1
      %p434 = por %p432, %p433
      %p435 = scmp.ne.s32.totalorder %s424, %s425
      %p436 = scmp.eq.s32.totalorder %s45, 0
      %p437 = por %p435, %p436
      %p438 = scmp.ne.s32.totalorder %s424, %s425
      %p439 = scmp.eq.s32.totalorder %s46, 1
      %p440 = por %p438, %p439
      %p442 = scmp.ne.s32.totalorder %s425, %s441
      %p443 = scmp.eq.s32.totalorder %s46, 0
      %p444 = por %p442, %p443
      %s446 = sadd.s32 %s445, 1
      %p449 = scmp.eq.s32.totalorder %s40, 1
      %p450 = scmp.ne.s32.totalorder %s445, %s447
      %p451 = scmp.eq.s32.totalorder %s40, 0
      %p452 = por %p450, %p451
      %p453 = scmp.ne.s32.totalorder %s445, %s447
      %p454 = scmp.eq.s32.totalorder %s45, 1
      %p455 = por %p453, %p454
      %p456 = scmp.ne.s32.totalorder %s447, %s448
      %p457 = scmp.eq.s32.totalorder %s45, 0
      %p458 = por %p456, %p457
      %p459 = scmp.ne.s32.totalorder %s447, %s448
      %p460 = scmp.eq.s32.totalorder %s46, 1
      %p461 = por %p459, %p460
      %p463 = scmp.ne.s32.totalorder %s448, %s462
      %p464 = scmp.eq.s32.totalorder %s46, 0
      %p465 = por %p463, %p464
      %s467 = sadd.s32 %s466, 1
      %p470 = scmp.eq.s32.totalorder %s40, 1
      %p471 = scmp.ne.s32.totalorder %s466, %s468
      %p472 = scmp.eq.s32.totalorder %s40, 0
      %p473 = por %p471, %p472
      %p474 = scmp.ne.s32.totalorder %s466, %s468
      %p475 = scmp.eq.s32.totalorder %s45, 1
      %p476 = por %p474, %p475
      %p477 = scmp.ne.s32.totalorder %s468, %s469
      %p478 = scmp.eq.s32.totalorder %s45, 0
      %p479 = por %p477, %p478
      %p480 = scmp.ne.s32.totalorder %s468, %s469
      %p481 = scmp.eq.s32.totalorder %s46, 1
      %p482 = por %p480, %p481
      %p484 = scmp.ne.s32.totalorder %s469, %s483
      %p485 = scmp.eq.s32.totalorder %s46, 0
      %p486 = por %p484, %p485
      %s488 = sadd.s32 %s487, 1
      %p491 = scmp.eq.s32.totalorder %s40, 1
      %p492 = scmp.ne.s32.totalorder %s487, %s489
      %p493 = scmp.eq.s32.totalorder %s40, 0
      %p494 = por %p492, %p493
      %p495 = scmp.ne.s32.totalorder %s487, %s489
      %p496 = scmp.eq.s32.totalorder %s45, 1
      %p497 = por %p495, %p496
      %p498 = scmp.ne.s32.totalorder %s489, %s490
      %p499 = scmp.eq.s32.totalorder %s45, 0
      %p500 = por %p498, %p499
      %p501 = scmp.ne.s32.totalorder %s489, %s490
      %p502 = scmp.eq.s32.totalorder %s46, 1
      %p503 = por %p501, %p502
      %p505 = scmp.ne.s32.totalorder %s490, %s504
      %p506 = scmp.eq.s32.totalorder %s46, 0
      %p507 = por %p505, %p506
      %s509 = sadd.s32 %s508, 1
      %p512 = scmp.eq.s32.totalorder %s40, 1
      %p513 = scmp.ne.s32.totalorder %s508, %s510
      %p514 = scmp.eq.s32.totalorder %s40, 0
      %p515 = por %p513, %p514
      %p516 = scmp.ne.s32.totalorder %s508, %s510
      %p517 = scmp.eq.s32.totalorder %s45, 1
      %p518 = por %p516, %p517
      %p519 = scmp.ne.s32.totalorder %s510, %s511
      %p520 = scmp.eq.s32.totalorder %s45, 0
      %p521 = por %p519, %p520
      %p522 = scmp.ne.s32.totalorder %s510, %s511
      %p523 = scmp.eq.s32.totalorder %s46, 1
      %p524 = por %p522, %p523
      %p526 = scmp.ne.s32.totalorder %s511, %s525
      %p527 = scmp.eq.s32.totalorder %s46, 0
      %p528 = por %p526, %p527
      %s529 = ssub.s32 %s47, %s59
      %p530 = scmp.eq.s32.totalorder %s529, 0
      %s532 = sadd.s32 %s531, 1
      %s533 = scalar_select %p530, %s531, %s532
      %p536 = pneg %p530
      %p537 = scmp.eq.s32.totalorder %s40, 1
      %p538 = por %p536, %p537
      %p539 = scmp.ne.s32.totalorder %s531, %s534
      %p540 = scmp.eq.s32.totalorder %s40, 0
      %p541 = por %p539, %p540
      %p542 = scmp.ne.s32.totalorder %s531, %s534
      %p543 = scmp.eq.s32.totalorder %s45, 1
      %p544 = por %p542, %p543
      %p545 = scmp.ne.s32.totalorder %s534, %s535
      %p546 = scmp.eq.s32.totalorder %s45, 0
      %p547 = por %p545, %p546
      %p548 = scmp.ne.s32.totalorder %s534, %s535
      %p549 = scmp.eq.s32.totalorder %s46, 1
      %p550 = por %p548, %p549
      %p552 = scmp.ne.s32.totalorder %s535, %s551
      %p553 = scmp.eq.s32.totalorder %s46, 0
      %p554 = por %p552, %p553
      %p555 = scmp.le.s32.totalorder 1, %s40
      %p556 = scmp.lt.s32.totalorder %s40, 3
      %p557 = pnand %p555, %p556
      %p558 = pneg %p557
      // Predicated region
      $region9: #{tpu_custom_call.1} parent=5 // pred_check
        _
      $region10: #{tpu_custom_call.1} parent=5 // pred_check_branch
        %560 = sbr.rel (%p557) target = $region12
      $region11: #{tpu_custom_call.1} parent=5 // pred_region
        %s561 = ssub.s32 %s40, 1
        // Predicated region
        $region13: #{tpu_custom_call.1} parent=11 // pred_check
          %p562 = pneg %p78
        $region14: #{tpu_custom_call.1} parent=11 // pred_check_branch
          %564 = sbr.rel (%p562) target = $region16
        $region15: #{tpu_custom_call.1} parent=11 // pred_region
          %s565 = smul.u32 2, %s49
          %s567 = ssub.s32 256, 256
          %568 = vsyncadd [#allocation4], %s567
          %s569 = smul.addr %s565, 128
          %s570 = scalar_lea.hbm %s0, %s569
          %s571 = sshll.u32 [#allocation3], 4
          %s572 = int_to_ptr.vmem [resolvable:$true] %s571
          %577 = dma.hbm_to_vmem [thread:$0]  %s570, 256, %s572, [#allocation4], 128, 128, 8
        $region16: #{tpu_custom_call.1} parent=11 // pred_fallthru
          _
        // Predicated region
        $region17: #{tpu_custom_call.1} parent=11 // pred_check
          %p578 = pneg %p104
        $region18: #{tpu_custom_call.1} parent=11 // pred_check_branch
          %580 = sbr.rel (%p578) target = $region20
        $region19: #{tpu_custom_call.1} parent=11 // pred_region
          %s581 = smul.u32 2, %s49
          %s583 = ssub.s32 32, 32
          %584 = vsyncadd [#allocation7], %s583
          %s585 = smul.addr %s581, 16
          %s586 = scalar_lea.hbm %s1, %s585
          %s587 = sshll.u32 [#allocation6], 4
          %s588 = int_to_ptr.vmem [resolvable:$true] %s587
          %593 = dma.hbm_to_vmem [thread:$0]  %s586, 32, %s588, [#allocation7], 16, 16, 1
        $region20: #{tpu_custom_call.1} parent=11 // pred_fallthru
          _
        // Predicated region
        $region21: #{tpu_custom_call.1} parent=11 // pred_check
          %p594 = pneg %p125
        $region22: #{tpu_custom_call.1} parent=11 // pred_check_branch
          %596 = sbr.rel (%p594) target = $region24
        $region23: #{tpu_custom_call.1} parent=11 // pred_region
          %s598 = ssub.s32 128, 128
          %599 = vsyncadd [#allocation7], %s598
          %s601 = sshll.u32 [#allocation8], 4
          %s602 = int_to_ptr.vmem [resolvable:$true] %s601
          %604 = dma.hbm_to_vmem [thread:$0]  %s2, 128, %s602, [#allocation7]
        $region24: #{tpu_custom_call.1} parent=11 // pred_fallthru
          _
        // Predicated region
        $region25: #{tpu_custom_call.1} parent=11 // pred_check
          %p605 = pneg %p458
        $region26: #{tpu_custom_call.1} parent=11 // pred_check_branch
          %607 = sbr.rel (%p605) target = $region28
        $region27: #{tpu_custom_call.1} parent=11 // pred_region
          _
        $region28: #{tpu_custom_call.1} parent=11 // pred_fallthru
          _
        // Predicated region
        $region29: #{tpu_custom_call.1} parent=11 // pred_check
          %p608 = pneg %p479
        $region30: #{tpu_custom_call.1} parent=11 // pred_check_branch
          %610 = sbr.rel (%p608) target = $region32
        $region31: #{tpu_custom_call.1} parent=11 // pred_region
          _
        $region32: #{tpu_custom_call.1} parent=11 // pred_fallthru
          _
        // Predicated region
        $region33: #{tpu_custom_call.1} parent=11 // pred_check
          %p611 = pneg %p500
        $region34: #{tpu_custom_call.1} parent=11 // pred_check_branch
          %613 = sbr.rel (%p611) target = $region36
        $region35: #{tpu_custom_call.1} parent=11 // pred_region
          _
        $region36: #{tpu_custom_call.1} parent=11 // pred_fallthru
          _
        // Predicated region
        $region37: #{tpu_custom_call.1} parent=11 // pred_check
          %p614 = pneg %p521
        $region38: #{tpu_custom_call.1} parent=11 // pred_check_branch
          %616 = sbr.rel (%p614) target = $region40
        $region39: #{tpu_custom_call.1} parent=11 // pred_region
          _
        $region40: #{tpu_custom_call.1} parent=11 // pred_fallthru
          _
      $region12: #{tpu_custom_call.1} parent=5 // pred_fallthru
        _
      %p617 = scmp.lt.s32.totalorder %s40, 2
      // Predicated region
      $region41: #{tpu_custom_call.1} parent=5 // pred_check
        %p618 = pneg %p617
      $region42: #{tpu_custom_call.1} parent=5 // pred_check_branch
        %620 = sbr.rel (%p618) target = $region44
      $region43: #{tpu_custom_call.1} parent=5 // pred_region
        // Predicated region
        $region45: #{tpu_custom_call.1} parent=43 // pred_check
          %p621 = pneg %p145
        $region46: #{tpu_custom_call.1} parent=43 // pred_check_branch
          %623 = sbr.rel (%p621) target = $region48
        $region47: #{tpu_custom_call.1} parent=43 // pred_region
          %p624 = scmp.lt.s32.totalorder %s48, 1
          %s625 = scalar_select %p624, %s48, 1
          %s626 = smul.addr %s625, 4
          %s627 = smul.addr %s626, 4
          %s628 = scalar_lea.vmem %s3, %s627
        $region48: #{tpu_custom_call.1} parent=43 // pred_fallthru
          _
        // Predicated region
        $region49: #{tpu_custom_call.1} parent=43 // pred_check
          %p629 = pneg %p171
        $region50: #{tpu_custom_call.1} parent=43 // pred_check_branch
          %631 = sbr.rel (%p629) target = $region52
        $region51: #{tpu_custom_call.1} parent=43 // pred_region
          %s632 = sand.u32 %s40, 1
          %s633 = scalar_lea.sflag [#allocation10], %s632
          %s634 = sand.u32 %s161, 1
          %s635 = scalar_lea.vmem [#allocation9], %s634
          %s637 = ssub.s32 16, 16
          %638 = vsyncadd %s633, %s637
          %s639 = smul.addr %s48, 16
          %s640 = scalar_lea.hbm %s4, %s639
          %s642 = sshll.u32 %s635, 4
          %s643 = int_to_ptr.vmem [resolvable:$true] %s642
          %645 = dma.hbm_to_vmem [thread:$0]  %s640, 16, %s643, %s633
        $region52: #{tpu_custom_call.1} parent=43 // pred_fallthru
          _
        // Predicated region
        $region53: #{tpu_custom_call.1} parent=43 // pred_check
          %p646 = pneg %p197
        $region54: #{tpu_custom_call.1} parent=43 // pred_check_branch
          %648 = sbr.rel (%p646) target = $region56
        $region55: #{tpu_custom_call.1} parent=43 // pred_region
          %p649 = scmp.lt.s32.totalorder %s48, 1
          %s650 = scalar_select %p649, %s48, 1
          %s651 = smul.addr %s650, 4
          %s652 = smul.addr %s651, 4
          %s653 = scalar_lea.vmem %s5, %s652
        $region56: #{tpu_custom_call.1} parent=43 // pred_fallthru
          _
        // Predicated region
        $region57: #{tpu_custom_call.1} parent=43 // pred_check
          %p654 = pneg %p223
        $region58: #{tpu_custom_call.1} parent=43 // pred_check_branch
          %656 = sbr.rel (%p654) target = $region60
        $region59: #{tpu_custom_call.1} parent=43 // pred_region
          %s657 = sand.u32 %s40, 1
          %s658 = scalar_lea.sflag [#allocation10], %s657
          %s659 = sand.u32 %s213, 1
          %s660 = scalar_lea.vmem [#allocation11], %s659
          %s662 = ssub.s32 16, 16
          %663 = vsyncadd %s658, %s662
          %s664 = smul.addr %s48, 16
          %s665 = scalar_lea.hbm %s6, %s664
          %s667 = sshll.u32 %s660, 4
          %s668 = int_to_ptr.vmem [resolvable:$true] %s667
          %670 = dma.hbm_to_vmem [thread:$0]  %s665, 16, %s668, %s658
        $region60: #{tpu_custom_call.1} parent=43 // pred_fallthru
          _
        // Predicated region
        $region61: #{tpu_custom_call.1} parent=43 // pred_check
          %p671 = pneg %p249
        $region62: #{tpu_custom_call.1} parent=43 // pred_check_branch
          %673 = sbr.rel (%p671) target = $region64
        $region63: #{tpu_custom_call.1} parent=43 // pred_region
          %s674 = sand.u32 %s40, 1
          %s675 = scalar_lea.sflag [#allocation13], %s674
          %s676 = sand.u32 %s239, 1
          %s677 = scalar_lea.vmem [#allocation12], %s676
          %s679 = ssub.s32 16, 16
          %680 = vsyncadd %s675, %s679
          %s681 = smul.addr %s48, 16
          %s682 = scalar_lea.hbm %s7, %s681
          %s684 = sshll.u32 %s677, 4
          %s685 = int_to_ptr.vmem [resolvable:$true] %s684
          %687 = dma.hbm_to_vmem [thread:$0]  %s682, 16, %s685, %s675
        $region64: #{tpu_custom_call.1} parent=43 // pred_fallthru
          _
        // Predicated region
        $region65: #{tpu_custom_call.1} parent=43 // pred_check
          %p688 = pneg %p275
        $region66: #{tpu_custom_call.1} parent=43 // pred_check_branch
          %690 = sbr.rel (%p688) target = $region68
        $region67: #{tpu_custom_call.1} parent=43 // pred_region
          %s691 = sand.u32 %s40, 1
          %s692 = scalar_lea.sflag [#allocation13], %s691
          %s693 = sand.u32 %s265, 1
          %s694 = scalar_lea.vmem [#allocation14], %s693
          %s696 = ssub.s32 16, 16
          %697 = vsyncadd %s692, %s696
          %s698 = smul.addr %s48, 16
          %s699 = scalar_lea.hbm %s8, %s698
          %s701 = sshll.u32 %s694, 4
          %s702 = int_to_ptr.vmem [resolvable:$true] %s701
          %704 = dma.hbm_to_vmem [thread:$0]  %s699, 16, %s702, %s692
        $region68: #{tpu_custom_call.1} parent=43 // pred_fallthru
          _
        // Predicated region
        $region69: #{tpu_custom_call.1} parent=43 // pred_check
          %p705 = pneg %p301
        $region70: #{tpu_custom_call.1} parent=43 // pred_check_branch
          %707 = sbr.rel (%p705) target = $region72
        $region71: #{tpu_custom_call.1} parent=43 // pred_region
          %s708 = sand.u32 %s40, 1
          %s709 = scalar_lea.sflag [#allocation16], %s708
          %s710 = sand.u32 %s291, 1
          %s711 = scalar_lea.vmem [#allocation15], %s710
          %s713 = ssub.s32 16, 16
          %714 = vsyncadd %s709, %s713
          %s715 = smul.addr %s48, 16
          %s716 = scalar_lea.hbm %s9, %s715
          %s718 = sshll.u32 %s711, 4
          %s719 = int_to_ptr.vmem [resolvable:$true] %s718
          %721 = dma.hbm_to_vmem [thread:$0]  %s716, 16, %s719, %s709
        $region72: #{tpu_custom_call.1} parent=43 // pred_fallthru
          _
        // Predicated region
        $region73: #{tpu_custom_call.1} parent=43 // pred_check
          %p722 = pneg %p327
        $region74: #{tpu_custom_call.1} parent=43 // pred_check_branch
          %724 = sbr.rel (%p722) target = $region76
        $region75: #{tpu_custom_call.1} parent=43 // pred_region
          %s725 = sand.u32 %s40, 1
          %s726 = scalar_lea.sflag [#allocation16], %s725
          %s727 = sand.u32 %s317, 1
          %s728 = scalar_lea.vmem [#allocation17], %s727
          %s730 = ssub.s32 16, 16
          %731 = vsyncadd %s726, %s730
          %s732 = smul.addr %s48, 16
          %s733 = scalar_lea.hbm %s10, %s732
          %s735 = sshll.u32 %s728, 4
          %s736 = int_to_ptr.vmem [resolvable:$true] %s735
          %738 = dma.hbm_to_vmem [thread:$0]  %s733, 16, %s736, %s726
        $region76: #{tpu_custom_call.1} parent=43 // pred_fallthru
          _
        // Predicated region
        $region77: #{tpu_custom_call.1} parent=43 // pred_check
          %p739 = pneg %p353
        $region78: #{tpu_custom_call.1} parent=43 // pred_check_branch
          %741 = sbr.rel (%p739) target = $region80
        $region79: #{tpu_custom_call.1} parent=43 // pred_region
          %p742 = scmp.lt.s32.totalorder %s48, 1
          %s743 = scalar_select %p742, %s48, 1
          %s744 = smul.addr %s743, 4
          %s745 = smul.addr %s744, 4
          %s746 = scalar_lea.vmem %s11, %s745
        $region80: #{tpu_custom_call.1} parent=43 // pred_fallthru
          _
        // Predicated region
        $region81: #{tpu_custom_call.1} parent=43 // pred_check
          %p747 = pneg %p379
        $region82: #{tpu_custom_call.1} parent=43 // pred_check_branch
          %749 = sbr.rel (%p747) target = $region84
        $region83: #{tpu_custom_call.1} parent=43 // pred_region
          %s750 = sand.u32 %s369, 1
          %s751 = scalar_lea.sflag [#allocation19], %s750
          %s752 = sand.u32 %s369, 1
          %s753 = scalar_lea.vmem [#allocation18], %s752
          %s755 = ssub.s32 16, 16
          %756 = vsyncadd %s751, %s755
          %s757 = smul.addr %s48, 16
          %s758 = scalar_lea.hbm %s12, %s757
          %s760 = sshll.u32 %s753, 4
          %s761 = int_to_ptr.vmem [resolvable:$true] %s760
          %763 = dma.hbm_to_vmem [thread:$0]  %s758, 16, %s761, %s751
        $region84: #{tpu_custom_call.1} parent=43 // pred_fallthru
          _
        // Predicated region
        $region85: #{tpu_custom_call.1} parent=43 // pred_check
          %p764 = pneg %p405
        $region86: #{tpu_custom_call.1} parent=43 // pred_check_branch
          %766 = sbr.rel (%p764) target = $region88
        $region87: #{tpu_custom_call.1} parent=43 // pred_region
          %p767 = scmp.lt.s32.totalorder %s48, 1
          %s768 = scalar_select %p767, %s48, 1
          %s769 = smul.addr %s768, 8
          %s770 = smul.addr %s769, 4
          %s771 = scalar_lea.vmem %s13, %s770
        $region88: #{tpu_custom_call.1} parent=43 // pred_fallthru
          _
        // Predicated region
        $region89: #{tpu_custom_call.1} parent=43 // pred_check
          %p772 = pneg %p431
        $region90: #{tpu_custom_call.1} parent=43 // pred_check_branch
          %774 = sbr.rel (%p772) target = $region92
        $region91: #{tpu_custom_call.1} parent=43 // pred_region
          %p775 = scmp.lt.s32.totalorder %s48, 1
          %s776 = scalar_select %p775, %s48, 1
          %s777 = scalar_lea.vmem %s14, %s776
        $region92: #{tpu_custom_call.1} parent=43 // pred_fallthru
          _
      $region44: #{tpu_custom_call.1} parent=5 // pred_fallthru
        _
      %p778 = scmp.le.s32.totalorder 1, %s40
      %p779 = scmp.lt.s32.totalorder %s40, 3
      %p780 = pnand %p778, %p779
      %p781 = pneg %p780
      // Predicated region
      $region93: #{tpu_custom_call.1} parent=5 // pred_check
        _
      $region94: #{tpu_custom_call.1} parent=5 // pred_check_branch
        %783 = sbr.rel (%p780) target = $region96
      $region95: #{tpu_custom_call.1} parent=5 // pred_region
        %s784 = ssub.s32 %s40, 1
        // Predicated region
        $region97: #{tpu_custom_call.1} parent=95 // pred_check
          %p785 = pneg %p78
        $region98: #{tpu_custom_call.1} parent=95 // pred_check_branch
          %787 = sbr.rel (%p785) target = $region100
        $region99: #{tpu_custom_call.1} parent=95 // pred_region
          %788 = dma.done [#allocation4], 256
        $region100: #{tpu_custom_call.1} parent=95 // pred_fallthru
          _
        // Predicated region
        $region101: #{tpu_custom_call.1} parent=95 // pred_check
          %p789 = pneg %p104
        $region102: #{tpu_custom_call.1} parent=95 // pred_check_branch
          %791 = sbr.rel (%p789) target = $region104
        $region103: #{tpu_custom_call.1} parent=95 // pred_region
          %792 = dma.done [#allocation7], 32
        $region104: #{tpu_custom_call.1} parent=95 // pred_fallthru
          _
        // Predicated region
        $region105: #{tpu_custom_call.1} parent=95 // pred_check
          %p793 = pneg %p125
        $region106: #{tpu_custom_call.1} parent=95 // pred_check_branch
          %795 = sbr.rel (%p793) target = $region108
        $region107: #{tpu_custom_call.1} parent=95 // pred_region
          %796 = dma.done [#allocation7], 128
        $region108: #{tpu_custom_call.1} parent=95 // pred_fallthru
          _
        %s797 = sand.u32 %s45, 1
        %s798 = scalar_lea.sflag [#allocation10], %s797
        %s799 = sand.u32 %s164, 1
        %s800 = scalar_lea.vmem [#allocation9], %s799
        // Predicated region
        $region109: #{tpu_custom_call.1} parent=95 // pred_check
          %p801 = pneg %p177
        $region110: #{tpu_custom_call.1} parent=95 // pred_check_branch
          %803 = sbr.rel (%p801) target = $region112
        $region111: #{tpu_custom_call.1} parent=95 // pred_region
          %804 = dma.done %s798, 16
        $region112: #{tpu_custom_call.1} parent=95 // pred_fallthru
          _
        %s805 = sand.u32 %s45, 1
        %s806 = scalar_lea.sflag [#allocation10], %s805
        %s807 = sand.u32 %s216, 1
        %s808 = scalar_lea.vmem [#allocation11], %s807
        // Predicated region
        $region113: #{tpu_custom_call.1} parent=95 // pred_check
          %p809 = pneg %p229
        $region114: #{tpu_custom_call.1} parent=95 // pred_check_branch
          %811 = sbr.rel (%p809) target = $region116
        $region115: #{tpu_custom_call.1} parent=95 // pred_region
          %812 = dma.done %s806, 16
        $region116: #{tpu_custom_call.1} parent=95 // pred_fallthru
          _
        %s813 = sand.u32 %s45, 1
        %s814 = scalar_lea.sflag [#allocation13], %s813
        %s815 = sand.u32 %s242, 1
        %s816 = scalar_lea.vmem [#allocation12], %s815
        // Predicated region
        $region117: #{tpu_custom_call.1} parent=95 // pred_check
          %p817 = pneg %p255
        $region118: #{tpu_custom_call.1} parent=95 // pred_check_branch
          %819 = sbr.rel (%p817) target = $region120
        $region119: #{tpu_custom_call.1} parent=95 // pred_region
          %820 = dma.done %s814, 16
        $region120: #{tpu_custom_call.1} parent=95 // pred_fallthru
          _
        %s821 = sand.u32 %s45, 1
        %s822 = scalar_lea.sflag [#allocation13], %s821
        %s823 = sand.u32 %s268, 1
        %s824 = scalar_lea.vmem [#allocation14], %s823
        // Predicated region
        $region121: #{tpu_custom_call.1} parent=95 // pred_check
          %p825 = pneg %p281
        $region122: #{tpu_custom_call.1} parent=95 // pred_check_branch
          %827 = sbr.rel (%p825) target = $region124
        $region123: #{tpu_custom_call.1} parent=95 // pred_region
          %828 = dma.done %s822, 16
        $region124: #{tpu_custom_call.1} parent=95 // pred_fallthru
          _
        %s829 = sand.u32 %s45, 1
        %s830 = scalar_lea.sflag [#allocation16], %s829
        %s831 = sand.u32 %s294, 1
        %s832 = scalar_lea.vmem [#allocation15], %s831
        // Predicated region
        $region125: #{tpu_custom_call.1} parent=95 // pred_check
          %p833 = pneg %p307
        $region126: #{tpu_custom_call.1} parent=95 // pred_check_branch
          %835 = sbr.rel (%p833) target = $region128
        $region127: #{tpu_custom_call.1} parent=95 // pred_region
          %836 = dma.done %s830, 16
        $region128: #{tpu_custom_call.1} parent=95 // pred_fallthru
          _
        %s837 = sand.u32 %s45, 1
        %s838 = scalar_lea.sflag [#allocation16], %s837
        %s839 = sand.u32 %s320, 1
        %s840 = scalar_lea.vmem [#allocation17], %s839
        // Predicated region
        $region129: #{tpu_custom_call.1} parent=95 // pred_check
          %p841 = pneg %p333
        $region130: #{tpu_custom_call.1} parent=95 // pred_check_branch
          %843 = sbr.rel (%p841) target = $region132
        $region131: #{tpu_custom_call.1} parent=95 // pred_region
          %844 = dma.done %s838, 16
        $region132: #{tpu_custom_call.1} parent=95 // pred_fallthru
          _
        %s845 = sand.u32 %s372, 1
        %s846 = scalar_lea.sflag [#allocation19], %s845
        %s847 = sand.u32 %s372, 1
        %s848 = scalar_lea.vmem [#allocation18], %s847
        // Predicated region
        $region133: #{tpu_custom_call.1} parent=95 // pred_check
          %p849 = pneg %p385
        $region134: #{tpu_custom_call.1} parent=95 // pred_check_branch
          %851 = sbr.rel (%p849) target = $region136
        $region135: #{tpu_custom_call.1} parent=95 // pred_region
          %852 = dma.done %s846, 16
        $region136: #{tpu_custom_call.1} parent=95 // pred_fallthru
          _
        %p853 = pneg %p78
        %p854 = pneg %p75
        %p855 = pneg %p104
        %p856 = pneg %p101
        %p857 = pneg %p125
        %p858 = pneg %p122
        %p859 = scmp.lt.s32.totalorder %s50, 1
        %s860 = scalar_select %p859, %s50, 1
        %s861 = smul.addr %s860, 4
        %s862 = smul.addr %s861, 4
        %s863 = scalar_lea.vmem %s3, %s862
        %p864 = pneg %p151
        %p865 = pneg %p148
        %s866 = sand.u32 %s45, 1
        %s867 = scalar_lea.sflag [#allocation10], %s866
        %s868 = sand.u32 %s164, 1
        %s869 = scalar_lea.vmem [#allocation9], %s868
        %p870 = pneg %p177
        %p871 = pneg %p174
        %p872 = scmp.lt.s32.totalorder %s50, 1
        %s873 = scalar_select %p872, %s50, 1
        %s874 = smul.addr %s873, 4
        %s875 = smul.addr %s874, 4
        %s876 = scalar_lea.vmem %s5, %s875
        %p877 = pneg %p203
        %p878 = pneg %p200
        %s879 = sand.u32 %s45, 1
        %s880 = scalar_lea.sflag [#allocation10], %s879
        %s881 = sand.u32 %s216, 1
        %s882 = scalar_lea.vmem [#allocation11], %s881
        %p883 = pneg %p229
        %p884 = pneg %p226
        %s885 = sand.u32 %s45, 1
        %s886 = scalar_lea.sflag [#allocation13], %s885
        %s887 = sand.u32 %s242, 1
        %s888 = scalar_lea.vmem [#allocation12], %s887
        %p889 = pneg %p255
        %p890 = pneg %p252
        %s891 = sand.u32 %s45, 1
        %s892 = scalar_lea.sflag [#allocation13], %s891
        %s893 = sand.u32 %s268, 1
        %s894 = scalar_lea.vmem [#allocation14], %s893
        %p895 = pneg %p281
        %p896 = pneg %p278
        %s897 = sand.u32 %s45, 1
        %s898 = scalar_lea.sflag [#allocation16], %s897
        %s899 = sand.u32 %s294, 1
        %s900 = scalar_lea.vmem [#allocation15], %s899
        %p901 = pneg %p307
        %p902 = pneg %p304
        %s903 = sand.u32 %s45, 1
        %s904 = scalar_lea.sflag [#allocation16], %s903
        %s905 = sand.u32 %s320, 1
        %s906 = scalar_lea.vmem [#allocation17], %s905
        %p907 = pneg %p333
        %p908 = pneg %p330
        %p909 = scmp.lt.s32.totalorder %s50, 1
        %s910 = scalar_select %p909, %s50, 1
        %s911 = smul.addr %s910, 4
        %s912 = smul.addr %s911, 4
        %s913 = scalar_lea.vmem %s11, %s912
        %p914 = pneg %p359
        %p915 = pneg %p356
        %s916 = sand.u32 %s372, 1
        %s917 = scalar_lea.sflag [#allocation19], %s916
        %s918 = sand.u32 %s372, 1
        %s919 = scalar_lea.vmem [#allocation18], %s918
        %p920 = pneg %p385
        %p921 = pneg %p382
        %p922 = scmp.lt.s32.totalorder %s50, 1
        %s923 = scalar_select %p922, %s50, 1
        %s924 = smul.addr %s923, 8
        %s925 = smul.addr %s924, 4
        %s926 = scalar_lea.vmem %s13, %s925
        %p927 = pneg %p411
        %p928 = pneg %p408
        %p929 = scmp.lt.s32.totalorder %s50, 1
        %s930 = scalar_select %p929, %s50, 1
        %s931 = scalar_lea.vmem %s14, %s930
        %p932 = pneg %p437
        %p933 = pneg %p434
        %p934 = pneg %p458
        %p935 = pneg %p455
        %p936 = pneg %p479
        %p937 = pneg %p476
        %p938 = pneg %p500
        %p939 = pneg %p497
        %p940 = pneg %p521
        %p941 = pneg %p518
        %p942 = pneg %p547
        %p943 = pneg %p544
        %s944 = smul.u32 2, %s49
        %s945 = smul.u32 2, %s49
        %p946 = scmp.lt.s32.totalorder %s50, 1
        %s947 = scalar_select %p946, %s50, 1
        %s948 = smul.addr %s947, 4
        %s949 = smul.addr %s948, 4
        %s950 = scalar_lea.vmem %s3, %s949
        %p951 = scmp.lt.s32.totalorder %s50, 1
        %s952 = scalar_select %p951, %s50, 1
        %s953 = smul.addr %s952, 4
        %s954 = smul.addr %s953, 4
        %s955 = scalar_lea.vmem %s5, %s954
        %p956 = scmp.lt.s32.totalorder %s50, 1
        %s957 = scalar_select %p956, %s50, 1
        %s958 = smul.addr %s957, 4
        %s959 = smul.addr %s958, 4
        %s960 = scalar_lea.vmem %s11, %s959
        %p961 = scmp.lt.s32.totalorder %s50, 1
        %s962 = scalar_select %p961, %s50, 1
        %s963 = smul.addr %s962, 8
        %s964 = smul.addr %s963, 4
        %s965 = scalar_lea.vmem %s13, %s964
        %p966 = scmp.lt.s32.totalorder %s50, 1
        %s967 = scalar_select %p966, %s50, 1
        %s968 = scalar_lea.vmem %s14, %s967
        %s969 = smul.u32 2, %s49
        %p971 = scmp.eq.s32.totalorder %s50, 0
        // Predicated region
        $region137: #{tpu_custom_call.1} parent=95 // pred_check
          %p972 = pneg %p971
        $region138: #{tpu_custom_call.1} parent=95 // pred_check_branch
          %974 = sbr.rel (%p972) target = $region140
        $region139: #{tpu_custom_call.1} parent=95 // pred_region
          %v975 = vld [vmem:[#allocation3] sm:$0xff]
          %v976 = vld [vmem:[#allocation3 + $0x8] sm:$0xff]
          %vm977 = vcmask 261120
          %978 = vst.msk [vmem:[#allocation2] sm:$0xff] %vm977, %v975
          %979 = vst.msk [vmem:[#allocation2 + $0x8] sm:$0xff] %vm977, %v976
        $region140: #{tpu_custom_call.1} parent=95 // pred_fallthru
          _
        %v980 = vld [vmem:[#allocation2] sm:$0xff]
        %v981 = vld [vmem:[#allocation2 + $0x8] sm:$0xff]
        %v982 = vpack.c.bf16 %v981, %v980
        %v983 = vld [vmem:[%s950] sm:$0xf]
        %v984 = vld [vmem:[%s950 + $0x4] sm:$0xf]
        %v985 = vld [vmem:[%s950 + $0x8] sm:$0xf]
        %v986 = vld [vmem:[%s950 + $0xc] sm:$0xf]
        %v987 = vld [vmem:[%s800] sm:$0x1]
        %v989 = vlaneseq
        %v990 = vshrl.u32 %v989, 7
        %v991 = vsub.s32 0, %v990
        %v992 = vrot.slane %v987, %v991
        %v998 = vunpack.c.l.b16 %v983
        %v999 = vunpack.c.l.b16 %v984
        %v1000 = vunpack.c.l.b16 %v985
        %v1001 = vunpack.c.l.b16 %v986
        %v1002 = vpack.c.b16 %v999, %v998
        %v1003 = vpack.c.b16 %v1001, %v1000
        %vm1006 = vcmask 261120
        %v1008 = vsel %vm1006, %v982, 0
        %1010 = vmatprep.subr.bf16.mxu0 0
        %1011 = vmatpush1.bf16.msra.mxu0 %v1002
        %1012 = vmatprep.subr.bf16.mxu0 0
        %1013 = vmatpush1.bf16.msra.mxu0 %v1003
        %1014 = vmatprep.subr.bf16.mxu0 0
        %1015 = vmatpush1.bf16.msra.mxu0 0
        %1016 = vmatprep.subr.bf16.mxu0 0
        %1017 = vmatpush1.bf16.msra.mxu0 0
        %1018 = vmatprep.subr.bf16.mxu0 0
        %1019 = vmatpush1.bf16.msra.mxu0 0
        %1020 = vmatprep.subr.bf16.mxu0 0
        %1021 = vmatpush1.bf16.msra.mxu0 0
        %1022 = vmatprep.subr.bf16.mxu0 0
        %1023 = vmatpush1.bf16.msra.mxu0 0
        %1024 = vmatprep.subr.bf16.mxu0 0
        %1025 = vmatpush1.bf16.msra.mxu0 0
        %1026 = vmatprep.subr.bf16.mxu0 0
        %1027 = vmatpush1.bf16.msra.mxu0 0
        %1028 = vmatprep.subr.bf16.mxu0 0
        %1029 = vmatpush1.bf16.msra.mxu0 0
        %1030 = vmatprep.subr.bf16.mxu0 0
        %1031 = vmatpush1.bf16.msra.mxu0 0
        %1032 = vmatprep.subr.bf16.mxu0 0
        %1033 = vmatpush1.bf16.msra.mxu0 0
        %1034 = vmatprep.subr.bf16.mxu0 0
        %1035 = vmatpush1.bf16.msra.mxu0 0
        %1036 = vmatprep.subr.bf16.mxu0 0
        %1037 = vmatpush1.bf16.msra.mxu0 0
        %1038 = vmatprep.subr.bf16.mxu0 0
        %1039 = vmatpush1.bf16.msra.mxu0 0
        %1040 = vmatprep.subr.bf16.mxu0 0
        %1041 = vmatpush1.bf16.msra.mxu0 0
        %1042 = vmatprep.mubr.bf16.mxu0 0
        %1043 = vmatmul.mubr.bf16.gmra.mrb[0].mxu0 %v1008
        %v1044 = vpop.f32.mrb[0].mxu0
        %v1045 = vadd.f32 %v992, %v1044
        %v1046 = vpop.f32.mrb[0].mxu0
        %v1047 = vpop.f32.mrb[0].mxu0
        %v1048 = vadd.f32 %v992, %v1047
        %v1049 = vpop.f32.mrb[0].mxu0
        %1050 = vdwg.mxu0
        %v1051 = vld [vmem:[#allocation8] sm:$0xff]
        %v1052 = vld [vmem:[#allocation6] sm:$0x1]
        %v1053 = vld [vmem:[#allocation6 + $0x1] sm:$0x1]
        %v1056 = vlaneseq
        %v1057 = vshrl.u32 %v1056, 7
        %v1058 = vsub.s32 0, %v1057
        %v1059 = vrot.slane %v1052, %v1058
        %v1060 = vlaneseq
        %v1061 = vshrl.u32 %v1060, 7
        %v1062 = vsub.s32 0, %v1061
        %v1063 = vrot.slane %v1053, %v1062
        %v1066 = vadd.f32 %v1051, %v1059
        %v1067 = vadd.f32 %v1051, %v1063
        %v1068 = vpack.c.bf16 %v1045, %v1045
        %v1069 = vpack.c.bf16 %v1048, %v1048
        %1071 = vrot.lane.b32.xlu0 %v1068, 96
        %v1072 = vpop.permute.xlu0 %1071
        %vm1073 = vcmask 64512
        %v1075 = vsel %vm1073, %v1068, 0
        %v1078 = vsel %vm1073, %v1072, 0
        %1080 = vmatprep.subr.bf16.mxu0 0
        %1081 = vmatpush1.bf16.xpose.msra.mxu0 %v1078
        %1082 = vmatprep.subr.bf16.mxu0 0
        %1083 = vmatpush1.bf16.xpose.msra.mxu0 0
        %1084 = vmatprep.subr.bf16.mxu0 0
        %1085 = vmatpush1.bf16.xpose.msra.mxu0 0
        %1086 = vmatprep.subr.bf16.mxu0 0
        %1087 = vmatpush1.bf16.xpose.msra.mxu0 0
        %1088 = vmatprep.subr.bf16.mxu0 0
        %1089 = vmatpush1.bf16.xpose.msra.mxu0 0
        %1090 = vmatprep.subr.bf16.mxu0 0
        %1091 = vmatpush1.bf16.xpose.msra.mxu0 0
        %1092 = vmatprep.subr.bf16.mxu0 0
        %1093 = vmatpush1.bf16.xpose.msra.mxu0 0
        %1094 = vmatprep.subr.bf16.mxu0 0
        %1095 = vmatpush1.bf16.xpose.msra.mxu0 0
        %1096 = vmatprep.subr.bf16.mxu0 0
        %1097 = vmatpush1.bf16.xpose.msra.mxu0 0
        %1098 = vmatprep.subr.bf16.mxu0 0
        %1099 = vmatpush1.bf16.xpose.msra.mxu0 0
        %1100 = vmatprep.subr.bf16.mxu0 0
        %1101 = vmatpush1.bf16.xpose.msra.mxu0 0
        %1102 = vmatprep.subr.bf16.mxu0 0
        %1103 = vmatpush1.bf16.xpose.msra.mxu0 0
        %1104 = vmatprep.subr.bf16.mxu0 0
        %1105 = vmatpush1.bf16.xpose.msra.mxu0 0
        %1106 = vmatprep.subr.bf16.mxu0 0
        %1107 = vmatpush1.bf16.xpose.msra.mxu0 0
        %1108 = vmatprep.subr.bf16.mxu0 0
        %1109 = vmatpush1.bf16.xpose.msra.mxu0 0
        %1110 = vmatprep.subr.bf16.mxu0 0
        %1111 = vmatpush1.bf16.xpose.msra.mxu0 0
        %1112 = vmatprep.mubr.bf16.mxu0 0
        %1113 = vmatmul.mubr.bf16.gmra.mrb[0].mxu0 %v1075
        %v1114 = vpop.f32.mrb[0].mxu0
        %v1115 = vadd.f32 %v1066, %v1114
        %v1116 = vpop.f32.mrb[0].mxu0
        %v1117 = vpop.f32.mrb[0].mxu0
        %v1118 = vpop.f32.mrb[0].mxu0
        %1119 = vdwg.mxu0
        %1121 = vrot.lane.b32.xlu0 %v1069, 96
        %v1122 = vpop.permute.xlu0 %1121
        %v1124 = vsel %vm1073, %v1069, 0
        %v1127 = vsel %vm1073, %v1122, 0
        %1129 = vmatprep.subr.bf16.mxu0 0
        %1130 = vmatpush1.bf16.xpose.msra.mxu0 %v1127
        %1131 = vmatprep.subr.bf16.mxu0 0
        %1132 = vmatpush1.bf16.xpose.msra.mxu0 0
        %1133 = vmatprep.subr.bf16.mxu0 0
        %1134 = vmatpush1.bf16.xpose.msra.mxu0 0
        %1135 = vmatprep.subr.bf16.mxu0 0
        %1136 = vmatpush1.bf16.xpose.msra.mxu0 0
        %1137 = vmatprep.subr.bf16.mxu0 0
        %1138 = vmatpush1.bf16.xpose.msra.mxu0 0
        %1139 = vmatprep.subr.bf16.mxu0 0
        %1140 = vmatpush1.bf16.xpose.msra.mxu0 0
        %1141 = vmatprep.subr.bf16.mxu0 0
        %1142 = vmatpush1.bf16.xpose.msra.mxu0 0
        %1143 = vmatprep.subr.bf16.mxu0 0
        %1144 = vmatpush1.bf16.xpose.msra.mxu0 0
        %1145 = vmatprep.subr.bf16.mxu0 0
        %1146 = vmatpush1.bf16.xpose.msra.mxu0 0
        %1147 = vmatprep.subr.bf16.mxu0 0
        %1148 = vmatpush1.bf16.xpose.msra.mxu0 0
        %1149 = vmatprep.subr.bf16.mxu0 0
        %1150 = vmatpush1.bf16.xpose.msra.mxu0 0
        %1151 = vmatprep.subr.bf16.mxu0 0
        %1152 = vmatpush1.bf16.xpose.msra.mxu0 0
        %1153 = vmatprep.subr.bf16.mxu0 0
        %1154 = vmatpush1.bf16.xpose.msra.mxu0 0
        %1155 = vmatprep.subr.bf16.mxu0 0
        %1156 = vmatpush1.bf16.xpose.msra.mxu0 0
        %1157 = vmatprep.subr.bf16.mxu0 0
        %1158 = vmatpush1.bf16.xpose.msra.mxu0 0
        %1159 = vmatprep.subr.bf16.mxu0 0
        %1160 = vmatpush1.bf16.xpose.msra.mxu0 0
        %1161 = vmatprep.mubr.bf16.mxu0 0
        %1162 = vmatmul.mubr.bf16.gmra.mrb[0].mxu0 %v1124
        %v1163 = vpop.f32.mrb[0].mxu0
        %v1164 = vadd.f32 %v1067, %v1163
        %v1165 = vpop.f32.mrb[0].mxu0
        %v1166 = vpop.f32.mrb[0].mxu0
        %v1167 = vpop.f32.mrb[0].mxu0
        %1168 = vdwg.mxu0
        %v1169 = vsel %vm1073, %v1115, -inf
        %1170 = vmax.xlane.f32.xlu0 %v1169
        %v1171 = vpop.xlane.xlu0 %1170
        %v1172 = vsel %vm1073, %v1164, -inf
        %1173 = vmax.xlane.f32.xlu0 %v1172
        %v1174 = vpop.xlane.xlu0 %1173
        %v1175 = vsub.f32 %v1115, %v1171
        %v1176 = vsub.f32 %v1164, %v1174
        %v1177 = vmul.f32 %v1175, 1.442695
        %v1178 = vpow.pop %v1177
        %v1179 = vmul.f32 %v1176, 1.442695
        %v1180 = vpow.pop %v1179
        %v1181 = vsel %vm1073, %v1178, 0.0
        %1182 = vadd.xlane.f32.xlu0 %v1181
        %v1183 = vpop.xlane.xlu0 %1182
        %v1184 = vsel %vm1073, %v1180, 0.0
        %1185 = vadd.xlane.f32.xlu0 %v1184
        %v1186 = vpop.xlane.xlu0 %1185
        %v1187 = vrcp.pop %v1183
        %v1188 = vrcp.pop %v1186
        %v1189 = vmul.f32 %v1178, %v1187
        %v1190 = vmul.f32 %v1180, %v1188
        %v1191 = vpack.c.bf16 %v1189, %v1189
        %v1192 = vpack.c.bf16 %v1190, %v1190
        %1193 = vrot.lane.b32.xlu0 %v1068, 64
        %v1194 = vpop.permute.xlu0 %1193
        %v1196 = vsel %vm1073, %v1191, 0
        %vm1198 = vcmask 1043456
        %v1200 = vsel %vm1198, %v1194, 0
        %1202 = vmatprep.subr.bf16.mxu0 0
        %1203 = vmatpush1.bf16.msra.mxu0 %v1200
        %1204 = vmatprep.subr.bf16.mxu0 0
        %1205 = vmatpush1.bf16.msra.mxu0 0
        %1206 = vmatprep.subr.bf16.mxu0 0
        %1207 = vmatpush1.bf16.msra.mxu0 0
        %1208 = vmatprep.subr.bf16.mxu0 0
        %1209 = vmatpush1.bf16.msra.mxu0 0
        %1210 = vmatprep.subr.bf16.mxu0 0
        %1211 = vmatpush1.bf16.msra.mxu0 0
        %1212 = vmatprep.subr.bf16.mxu0 0
        %1213 = vmatpush1.bf16.msra.mxu0 0
        %1214 = vmatprep.subr.bf16.mxu0 0
        %1215 = vmatpush1.bf16.msra.mxu0 0
        %1216 = vmatprep.subr.bf16.mxu0 0
        %1217 = vmatpush1.bf16.msra.mxu0 0
        %1218 = vmatprep.subr.bf16.mxu0 0
        %1219 = vmatpush1.bf16.msra.mxu0 0
        %1220 = vmatprep.subr.bf16.mxu0 0
        %1221 = vmatpush1.bf16.msra.mxu0 0
        %1222 = vmatprep.subr.bf16.mxu0 0
        %1223 = vmatpush1.bf16.msra.mxu0 0
        %1224 = vmatprep.subr.bf16.mxu0 0
        %1225 = vmatpush1.bf16.msra.mxu0 0
        %1226 = vmatprep.subr.bf16.mxu0 0
        %1227 = vmatpush1.bf16.msra.mxu0 0
        %1228 = vmatprep.subr.bf16.mxu0 0
        %1229 = vmatpush1.bf16.msra.mxu0 0
        %1230 = vmatprep.subr.bf16.mxu0 0
        %1231 = vmatpush1.bf16.msra.mxu0 0
        %1232 = vmatprep.subr.bf16.mxu0 0
        %1233 = vmatpush1.bf16.msra.mxu0 0
        %1234 = vmatprep.mubr.bf16.mxu0 0
        %1235 = vmatmul.mubr.bf16.gmra.mrb[0].mxu0 %v1196
        %v1236 = vpop.f32.mrb[0].mxu0
        %v1237 = vadd.f32 0.0, %v1236
        %v1238 = vpop.f32.mrb[0].mxu0
        %v1239 = vpop.f32.mrb[0].mxu0
        %v1240 = vpop.f32.mrb[0].mxu0
        %1241 = vdwg.mxu0
        %1242 = vrot.lane.b32.xlu0 %v1069, 64
        %v1243 = vpop.permute.xlu0 %1242
        %v1245 = vsel %vm1073, %v1192, 0
        %v1248 = vsel %vm1198, %v1243, 0
        %1250 = vmatprep.subr.bf16.mxu0 0
        %1251 = vmatpush1.bf16.msra.mxu0 %v1248
        %1252 = vmatprep.subr.bf16.mxu0 0
        %1253 = vmatpush1.bf16.msra.mxu0 0
        %1254 = vmatprep.subr.bf16.mxu0 0
        %1255 = vmatpush1.bf16.msra.mxu0 0
        %1256 = vmatprep.subr.bf16.mxu0 0
        %1257 = vmatpush1.bf16.msra.mxu0 0
        %1258 = vmatprep.subr.bf16.mxu0 0
        %1259 = vmatpush1.bf16.msra.mxu0 0
        %1260 = vmatprep.subr.bf16.mxu0 0
        %1261 = vmatpush1.bf16.msra.mxu0 0
        %1262 = vmatprep.subr.bf16.mxu0 0
        %1263 = vmatpush1.bf16.msra.mxu0 0
        %1264 = vmatprep.subr.bf16.mxu0 0
        %1265 = vmatpush1.bf16.msra.mxu0 0
        %1266 = vmatprep.subr.bf16.mxu0 0
        %1267 = vmatpush1.bf16.msra.mxu0 0
        %1268 = vmatprep.subr.bf16.mxu0 0
        %1269 = vmatpush1.bf16.msra.mxu0 0
        %1270 = vmatprep.subr.bf16.mxu0 0
        %1271 = vmatpush1.bf16.msra.mxu0 0
        %1272 = vmatprep.subr.bf16.mxu0 0
        %1273 = vmatpush1.bf16.msra.mxu0 0
        %1274 = vmatprep.subr.bf16.mxu0 0
        %1275 = vmatpush1.bf16.msra.mxu0 0
        %1276 = vmatprep.subr.bf16.mxu0 0
        %1277 = vmatpush1.bf16.msra.mxu0 0
        %1278 = vmatprep.subr.bf16.mxu0 0
        %1279 = vmatpush1.bf16.msra.mxu0 0
        %1280 = vmatprep.subr.bf16.mxu0 0
        %1281 = vmatpush1.bf16.msra.mxu0 0
        %1282 = vmatprep.mubr.bf16.mxu0 0
        %1283 = vmatmul.mubr.bf16.gmra.mrb[0].mxu0 %v1245
        %v1284 = vpop.f32.mrb[0].mxu0
        %v1285 = vadd.f32 0.0, %v1284
        %v1286 = vpop.f32.mrb[0].mxu0
        %v1287 = vpop.f32.mrb[0].mxu0
        %v1288 = vpop.f32.mrb[0].mxu0
        %1289 = vdwg.mxu0
        %1290 = vrot.lane.b32.xlu0 %v1068, 120
        %v1291 = vpop.permute.xlu0 %1290
        %1292 = vrot.lane.b32.xlu0 %v1068, 88
        %v1293 = vpop.permute.xlu0 %1292
        %v1295 = vsel %vm1073, %v1291, 0
        %v1298 = vsel %vm1073, %v1293, 0
        %1300 = vmatprep.subr.bf16.mxu0 0
        %1301 = vmatpush1.bf16.xpose.msra.mxu0 %v1298
        %1302 = vmatprep.subr.bf16.mxu0 0
        %1303 = vmatpush1.bf16.xpose.msra.mxu0 0
        %1304 = vmatprep.subr.bf16.mxu0 0
        %1305 = vmatpush1.bf16.xpose.msra.mxu0 0
        %1306 = vmatprep.subr.bf16.mxu0 0
        %1307 = vmatpush1.bf16.xpose.msra.mxu0 0
        %1308 = vmatprep.subr.bf16.mxu0 0
        %1309 = vmatpush1.bf16.xpose.msra.mxu0 0
        %1310 = vmatprep.subr.bf16.mxu0 0
        %1311 = vmatpush1.bf16.xpose.msra.mxu0 0
        %1312 = vmatprep.subr.bf16.mxu0 0
        %1313 = vmatpush1.bf16.xpose.msra.mxu0 0
        %1314 = vmatprep.subr.bf16.mxu0 0
        %1315 = vmatpush1.bf16.xpose.msra.mxu0 0
        %1316 = vmatprep.subr.bf16.mxu0 0
        %1317 = vmatpush1.bf16.xpose.msra.mxu0 0
        %1318 = vmatprep.subr.bf16.mxu0 0
        %1319 = vmatpush1.bf16.xpose.msra.mxu0 0
        %1320 = vmatprep.subr.bf16.mxu0 0
        %1321 = vmatpush1.bf16.xpose.msra.mxu0 0
        %1322 = vmatprep.subr.bf16.mxu0 0
        %1323 = vmatpush1.bf16.xpose.msra.mxu0 0
        %1324 = vmatprep.subr.bf16.mxu0 0
        %1325 = vmatpush1.bf16.xpose.msra.mxu0 0
        %1326 = vmatprep.subr.bf16.mxu0 0
        %1327 = vmatpush1.bf16.xpose.msra.mxu0 0
        %1328 = vmatprep.subr.bf16.mxu0 0
        %1329 = vmatpush1.bf16.xpose.msra.mxu0 0
        %1330 = vmatprep.subr.bf16.mxu0 0
        %1331 = vmatpush1.bf16.xpose.msra.mxu0 0
        %1332 = vmatprep.mubr.bf16.mxu0 0
        %1333 = vmatmul.mubr.bf16.gmra.mrb[0].mxu0 %v1295
        %v1334 = vpop.f32.mrb[0].mxu0
        %v1335 = vadd.f32 %v1066, %v1334
        %v1336 = vpop.f32.mrb[0].mxu0
        %v1337 = vpop.f32.mrb[0].mxu0
        %v1338 = vpop.f32.mrb[0].mxu0
        %1339 = vdwg.mxu0
        %1340 = vrot.lane.b32.xlu0 %v1069, 120
        %v1341 = vpop.permute.xlu0 %1340
        %1342 = vrot.lane.b32.xlu0 %v1069, 88
        %v1343 = vpop.permute.xlu0 %1342
        %v1345 = vsel %vm1073, %v1341, 0
        %v1348 = vsel %vm1073, %v1343, 0
        %1350 = vmatprep.subr.bf16.mxu0 0
        %1351 = vmatpush1.bf16.xpose.msra.mxu0 %v1348
        %1352 = vmatprep.subr.bf16.mxu0 0
        %1353 = vmatpush1.bf16.xpose.msra.mxu0 0
        %1354 = vmatprep.subr.bf16.mxu0 0
        %1355 = vmatpush1.bf16.xpose.msra.mxu0 0
        %1356 = vmatprep.subr.bf16.mxu0 0
        %1357 = vmatpush1.bf16.xpose.msra.mxu0 0
        %1358 = vmatprep.subr.bf16.mxu0 0
        %1359 = vmatpush1.bf16.xpose.msra.mxu0 0
        %1360 = vmatprep.subr.bf16.mxu0 0
        %1361 = vmatpush1.bf16.xpose.msra.mxu0 0
        %1362 = vmatprep.subr.bf16.mxu0 0
        %1363 = vmatpush1.bf16.xpose.msra.mxu0 0
        %1364 = vmatprep.subr.bf16.mxu0 0
        %1365 = vmatpush1.bf16.xpose.msra.mxu0 0
        %1366 = vmatprep.subr.bf16.mxu0 0
        %1367 = vmatpush1.bf16.xpose.msra.mxu0 0
        %1368 = vmatprep.subr.bf16.mxu0 0
        %1369 = vmatpush1.bf16.xpose.msra.mxu0 0
        %1370 = vmatprep.subr.bf16.mxu0 0
        %1371 = vmatpush1.bf16.xpose.msra.mxu0 0
        %1372 = vmatprep.subr.bf16.mxu0 0
        %1373 = vmatpush1.bf16.xpose.msra.mxu0 0
        %1374 = vmatprep.subr.bf16.mxu0 0
        %1375 = vmatpush1.bf16.xpose.msra.mxu0 0
        %1376 = vmatprep.subr.bf16.mxu0 0
        %1377 = vmatpush1.bf16.xpose.msra.mxu0 0
        %1378 = vmatprep.subr.bf16.mxu0 0
        %1379 = vmatpush1.bf16.xpose.msra.mxu0 0
        %1380 = vmatprep.subr.bf16.mxu0 0
        %1381 = vmatpush1.bf16.xpose.msra.mxu0 0
        %1382 = vmatprep.mubr.bf16.mxu0 0
        %1383 = vmatmul.mubr.bf16.gmra.mrb[0].mxu0 %v1345
        %v1384 = vpop.f32.mrb[0].mxu0
        %v1385 = vadd.f32 %v1067, %v1384
        %v1386 = vpop.f32.mrb[0].mxu0
        %v1387 = vpop.f32.mrb[0].mxu0
        %v1388 = vpop.f32.mrb[0].mxu0
        %1389 = vdwg.mxu0
        %v1390 = vsel %vm1073, %v1335, -inf
        %1391 = vmax.xlane.f32.xlu0 %v1390
        %v1392 = vpop.xlane.xlu0 %1391
        %v1393 = vsel %vm1073, %v1385, -inf
        %1394 = vmax.xlane.f32.xlu0 %v1393
        %v1395 = vpop.xlane.xlu0 %1394
        %v1396 = vsub.f32 %v1335, %v1392
        %v1397 = vsub.f32 %v1385, %v1395
        %v1398 = vmul.f32 %v1396, 1.442695
        %v1399 = vpow.pop %v1398
        %v1400 = vmul.f32 %v1397, 1.442695
        %v1401 = vpow.pop %v1400
        %v1402 = vsel %vm1073, %v1399, 0.0
        %1403 = vadd.xlane.f32.xlu0 %v1402
        %v1404 = vpop.xlane.xlu0 %1403
        %v1405 = vsel %vm1073, %v1401, 0.0
        %1406 = vadd.xlane.f32.xlu0 %v1405
        %v1407 = vpop.xlane.xlu0 %1406
        %v1408 = vrcp.pop %v1404
        %v1409 = vrcp.pop %v1407
        %v1410 = vmul.f32 %v1399, %v1408
        %v1411 = vmul.f32 %v1401, %v1409
        %v1412 = vpack.c.bf16 %v1410, %v1410
        %v1413 = vpack.c.bf16 %v1411, %v1411
        %1414 = vrot.lane.b32.xlu0 %v1068, 56
        %v1415 = vpop.permute.xlu0 %1414
        %v1417 = vsel %vm1073, %v1412, 0
        %v1420 = vsel %vm1198, %v1415, 0
        %1422 = vmatprep.subr.bf16.mxu0 0
        %1423 = vmatpush1.bf16.msra.mxu0 %v1420
        %1424 = vmatprep.subr.bf16.mxu0 0
        %1425 = vmatpush1.bf16.msra.mxu0 0
        %1426 = vmatprep.subr.bf16.mxu0 0
        %1427 = vmatpush1.bf16.msra.mxu0 0
        %1428 = vmatprep.subr.bf16.mxu0 0
        %1429 = vmatpush1.bf16.msra.mxu0 0
        %1430 = vmatprep.subr.bf16.mxu0 0
        %1431 = vmatpush1.bf16.msra.mxu0 0
        %1432 = vmatprep.subr.bf16.mxu0 0
        %1433 = vmatpush1.bf16.msra.mxu0 0
        %1434 = vmatprep.subr.bf16.mxu0 0
        %1435 = vmatpush1.bf16.msra.mxu0 0
        %1436 = vmatprep.subr.bf16.mxu0 0
        %1437 = vmatpush1.bf16.msra.mxu0 0
        %1438 = vmatprep.subr.bf16.mxu0 0
        %1439 = vmatpush1.bf16.msra.mxu0 0
        %1440 = vmatprep.subr.bf16.mxu0 0
        %1441 = vmatpush1.bf16.msra.mxu0 0
        %1442 = vmatprep.subr.bf16.mxu0 0
        %1443 = vmatpush1.bf16.msra.mxu0 0
        %1444 = vmatprep.subr.bf16.mxu0 0
        %1445 = vmatpush1.bf16.msra.mxu0 0
        %1446 = vmatprep.subr.bf16.mxu0 0
        %1447 = vmatpush1.bf16.msra.mxu0 0
        %1448 = vmatprep.subr.bf16.mxu0 0
        %1449 = vmatpush1.bf16.msra.mxu0 0
        %1450 = vmatprep.subr.bf16.mxu0 0
        %1451 = vmatpush1.bf16.msra.mxu0 0
        %1452 = vmatprep.subr.bf16.mxu0 0
        %1453 = vmatpush1.bf16.msra.mxu0 0
        %1454 = vmatprep.mubr.bf16.mxu0 0
        %1455 = vmatmul.mubr.bf16.gmra.mrb[0].mxu0 %v1417
        %v1456 = vpop.f32.mrb[0].mxu0
        %v1457 = vadd.f32 0.0, %v1456
        %v1458 = vpop.f32.mrb[0].mxu0
        %v1459 = vpop.f32.mrb[0].mxu0
        %v1460 = vpop.f32.mrb[0].mxu0
        %1461 = vdwg.mxu0
        %1462 = vrot.lane.b32.xlu0 %v1069, 56
        %v1463 = vpop.permute.xlu0 %1462
        %v1465 = vsel %vm1073, %v1413, 0
        %v1468 = vsel %vm1198, %v1463, 0
        %1470 = vmatprep.subr.bf16.mxu0 0
        %1471 = vmatpush1.bf16.msra.mxu0 %v1468
        %1472 = vmatprep.subr.bf16.mxu0 0
        %1473 = vmatpush1.bf16.msra.mxu0 0
        %1474 = vmatprep.subr.bf16.mxu0 0
        %1475 = vmatpush1.bf16.msra.mxu0 0
        %1476 = vmatprep.subr.bf16.mxu0 0
        %1477 = vmatpush1.bf16.msra.mxu0 0
        %1478 = vmatprep.subr.bf16.mxu0 0
        %1479 = vmatpush1.bf16.msra.mxu0 0
        %1480 = vmatprep.subr.bf16.mxu0 0
        %1481 = vmatpush1.bf16.msra.mxu0 0
        %1482 = vmatprep.subr.bf16.mxu0 0
        %1483 = vmatpush1.bf16.msra.mxu0 0
        %1484 = vmatprep.subr.bf16.mxu0 0
        %1485 = vmatpush1.bf16.msra.mxu0 0
        %1486 = vmatprep.subr.bf16.mxu0 0
        %1487 = vmatpush1.bf16.msra.mxu0 0
        %1488 = vmatprep.subr.bf16.mxu0 0
        %1489 = vmatpush1.bf16.msra.mxu0 0
        %1490 = vmatprep.subr.bf16.mxu0 0
        %1491 = vmatpush1.bf16.msra.mxu0 0
        %1492 = vmatprep.subr.bf16.mxu0 0
        %1493 = vmatpush1.bf16.msra.mxu0 0
        %1494 = vmatprep.subr.bf16.mxu0 0
        %1495 = vmatpush1.bf16.msra.mxu0 0
        %1496 = vmatprep.subr.bf16.mxu0 0
        %1497 = vmatpush1.bf16.msra.mxu0 0
        %1498 = vmatprep.subr.bf16.mxu0 0
        %1499 = vmatpush1.bf16.msra.mxu0 0
        %1500 = vmatprep.subr.bf16.mxu0 0
        %1501 = vmatpush1.bf16.msra.mxu0 0
        %1502 = vmatprep.mubr.bf16.mxu0 0
        %1503 = vmatmul.mubr.bf16.gmra.mrb[0].mxu0 %v1465
        %v1504 = vpop.f32.mrb[0].mxu0
        %v1505 = vadd.f32 0.0, %v1504
        %v1506 = vpop.f32.mrb[0].mxu0
        %v1507 = vpop.f32.mrb[0].mxu0
        %v1508 = vpop.f32.mrb[0].mxu0
        %1509 = vdwg.mxu0
        %1510 = vrot.lane.b32.xlu0 %v1068, 112
        %v1511 = vpop.permute.xlu0 %1510
        %1512 = vrot.lane.b32.xlu0 %v1068, 80
        %v1513 = vpop.permute.xlu0 %1512
        %v1515 = vsel %vm1073, %v1511, 0
        %v1518 = vsel %vm1073, %v1513, 0
        %1520 = vmatprep.subr.bf16.mxu0 0
        %1521 = vmatpush1.bf16.xpose.msra.mxu0 %v1518
        %1522 = vmatprep.subr.bf16.mxu0 0
        %1523 = vmatpush1.bf16.xpose.msra.mxu0 0
        %1524 = vmatprep.subr.bf16.mxu0 0
        %1525 = vmatpush1.bf16.xpose.msra.mxu0 0
        %1526 = vmatprep.subr.bf16.mxu0 0
        %1527 = vmatpush1.bf16.xpose.msra.mxu0 0
        %1528 = vmatprep.subr.bf16.mxu0 0
        %1529 = vmatpush1.bf16.xpose.msra.mxu0 0
        %1530 = vmatprep.subr.bf16.mxu0 0
        %1531 = vmatpush1.bf16.xpose.msra.mxu0 0
        %1532 = vmatprep.subr.bf16.mxu0 0
        %1533 = vmatpush1.bf16.xpose.msra.mxu0 0
        %1534 = vmatprep.subr.bf16.mxu0 0
        %1535 = vmatpush1.bf16.xpose.msra.mxu0 0
        %1536 = vmatprep.subr.bf16.mxu0 0
        %1537 = vmatpush1.bf16.xpose.msra.mxu0 0
        %1538 = vmatprep.subr.bf16.mxu0 0
        %1539 = vmatpush1.bf16.xpose.msra.mxu0 0
        %1540 = vmatprep.subr.bf16.mxu0 0
        %1541 = vmatpush1.bf16.xpose.msra.mxu0 0
        %1542 = vmatprep.subr.bf16.mxu0 0
        %1543 = vmatpush1.bf16.xpose.msra.mxu0 0
        %1544 = vmatprep.subr.bf16.mxu0 0
        %1545 = vmatpush1.bf16.xpose.msra.mxu0 0
        %1546 = vmatprep.subr.bf16.mxu0 0
        %1547 = vmatpush1.bf16.xpose.msra.mxu0 0
        %1548 = vmatprep.subr.bf16.mxu0 0
        %1549 = vmatpush1.bf16.xpose.msra.mxu0 0
        %1550 = vmatprep.subr.bf16.mxu0 0
        %1551 = vmatpush1.bf16.xpose.msra.mxu0 0
        %1552 = vmatprep.mubr.bf16.mxu0 0
        %1553 = vmatmul.mubr.bf16.gmra.mrb[0].mxu0 %v1515
        %v1554 = vpop.f32.mrb[0].mxu0
        %v1555 = vadd.f32 %v1066, %v1554
        %v1556 = vpop.f32.mrb[0].mxu0
        %v1557 = vpop.f32.mrb[0].mxu0
        %v1558 = vpop.f32.mrb[0].mxu0
        %1559 = vdwg.mxu0
        %1560 = vrot.lane.b32.xlu0 %v1069, 112
        %v1561 = vpop.permute.xlu0 %1560
        %1562 = vrot.lane.b32.xlu0 %v1069, 80
        %v1563 = vpop.permute.xlu0 %1562
        %v1565 = vsel %vm1073, %v1561, 0
        %v1568 = vsel %vm1073, %v1563, 0
        %1570 = vmatprep.subr.bf16.mxu0 0
        %1571 = vmatpush1.bf16.xpose.msra.mxu0 %v1568
        %1572 = vmatprep.subr.bf16.mxu0 0
        %1573 = vmatpush1.bf16.xpose.msra.mxu0 0
        %1574 = vmatprep.subr.bf16.mxu0 0
        %1575 = vmatpush1.bf16.xpose.msra.mxu0 0
        %1576 = vmatprep.subr.bf16.mxu0 0
        %1577 = vmatpush1.bf16.xpose.msra.mxu0 0
        %1578 = vmatprep.subr.bf16.mxu0 0
        %1579 = vmatpush1.bf16.xpose.msra.mxu0 0
        %1580 = vmatprep.subr.bf16.mxu0 0
        %1581 = vmatpush1.bf16.xpose.msra.mxu0 0
        %1582 = vmatprep.subr.bf16.mxu0 0
        %1583 = vmatpush1.bf16.xpose.msra.mxu0 0
        %1584 = vmatprep.subr.bf16.mxu0 0
        %1585 = vmatpush1.bf16.xpose.msra.mxu0 0
        %1586 = vmatprep.subr.bf16.mxu0 0
        %1587 = vmatpush1.bf16.xpose.msra.mxu0 0
        %1588 = vmatprep.subr.bf16.mxu0 0
        %1589 = vmatpush1.bf16.xpose.msra.mxu0 0
        %1590 = vmatprep.subr.bf16.mxu0 0
        %1591 = vmatpush1.bf16.xpose.msra.mxu0 0
        %1592 = vmatprep.subr.bf16.mxu0 0
        %1593 = vmatpush1.bf16.xpose.msra.mxu0 0
        %1594 = vmatprep.subr.bf16.mxu0 0
        %1595 = vmatpush1.bf16.xpose.msra.mxu0 0
        %1596 = vmatprep.subr.bf16.mxu0 0
        %1597 = vmatpush1.bf16.xpose.msra.mxu0 0
        %1598 = vmatprep.subr.bf16.mxu0 0
        %1599 = vmatpush1.bf16.xpose.msra.mxu0 0
        %1600 = vmatprep.subr.bf16.mxu0 0
        %1601 = vmatpush1.bf16.xpose.msra.mxu0 0
        %1602 = vmatprep.mubr.bf16.mxu0 0
        %1603 = vmatmul.mubr.bf16.gmra.mrb[0].mxu0 %v1565
        %v1604 = vpop.f32.mrb[0].mxu0
        %v1605 = vadd.f32 %v1067, %v1604
        %v1606 = vpop.f32.mrb[0].mxu0
        %v1607 = vpop.f32.mrb[0].mxu0
        %v1608 = vpop.f32.mrb[0].mxu0
        %1609 = vdwg.mxu0
        %v1610 = vsel %vm1073, %v1555, -inf
        %1611 = vmax.xlane.f32.xlu0 %v1610
        %v1612 = vpop.xlane.xlu0 %1611
        %v1613 = vsel %vm1073, %v1605, -inf
        %1614 = vmax.xlane.f32.xlu0 %v1613
        %v1615 = vpop.xlane.xlu0 %1614
        %v1616 = vsub.f32 %v1555, %v1612
        %v1617 = vsub.f32 %v1605, %v1615
        %v1618 = vmul.f32 %v1616, 1.442695
        %v1619 = vpow.pop %v1618
        %v1620 = vmul.f32 %v1617, 1.442695
        %v1621 = vpow.pop %v1620
        %v1622 = vsel %vm1073, %v1619, 0.0
        %1623 = vadd.xlane.f32.xlu0 %v1622
        %v1624 = vpop.xlane.xlu0 %1623
        %v1625 = vsel %vm1073, %v1621, 0.0
        %1626 = vadd.xlane.f32.xlu0 %v1625
        %v1627 = vpop.xlane.xlu0 %1626
        %v1628 = vrcp.pop %v1624
        %v1629 = vrcp.pop %v1627
        %v1630 = vmul.f32 %v1619, %v1628
        %v1631 = vmul.f32 %v1621, %v1629
        %v1632 = vpack.c.bf16 %v1630, %v1630
        %v1633 = vpack.c.bf16 %v1631, %v1631
        %1634 = vrot.lane.b32.xlu0 %v1068, 48
        %v1635 = vpop.permute.xlu0 %1634
        %v1637 = vsel %vm1073, %v1632, 0
        %v1640 = vsel %vm1198, %v1635, 0
        %1642 = vmatprep.subr.bf16.mxu0 0
        %1643 = vmatpush1.bf16.msra.mxu0 %v1640
        %1644 = vmatprep.subr.bf16.mxu0 0
        %1645 = vmatpush1.bf16.msra.mxu0 0
        %1646 = vmatprep.subr.bf16.mxu0 0
        %1647 = vmatpush1.bf16.msra.mxu0 0
        %1648 = vmatprep.subr.bf16.mxu0 0
        %1649 = vmatpush1.bf16.msra.mxu0 0
        %1650 = vmatprep.subr.bf16.mxu0 0
        %1651 = vmatpush1.bf16.msra.mxu0 0
        %1652 = vmatprep.subr.bf16.mxu0 0
        %1653 = vmatpush1.bf16.msra.mxu0 0
        %1654 = vmatprep.subr.bf16.mxu0 0
        %1655 = vmatpush1.bf16.msra.mxu0 0
        %1656 = vmatprep.subr.bf16.mxu0 0
        %1657 = vmatpush1.bf16.msra.mxu0 0
        %1658 = vmatprep.subr.bf16.mxu0 0
        %1659 = vmatpush1.bf16.msra.mxu0 0
        %1660 = vmatprep.subr.bf16.mxu0 0
        %1661 = vmatpush1.bf16.msra.mxu0 0
        %1662 = vmatprep.subr.bf16.mxu0 0
        %1663 = vmatpush1.bf16.msra.mxu0 0
        %1664 = vmatprep.subr.bf16.mxu0 0
        %1665 = vmatpush1.bf16.msra.mxu0 0
        %1666 = vmatprep.subr.bf16.mxu0 0
        %1667 = vmatpush1.bf16.msra.mxu0 0
        %1668 = vmatprep.subr.bf16.mxu0 0
        %1669 = vmatpush1.bf16.msra.mxu0 0
        %1670 = vmatprep.subr.bf16.mxu0 0
        %1671 = vmatpush1.bf16.msra.mxu0 0
        %1672 = vmatprep.subr.bf16.mxu0 0
        %1673 = vmatpush1.bf16.msra.mxu0 0
        %1674 = vmatprep.mubr.bf16.mxu0 0
        %1675 = vmatmul.mubr.bf16.gmra.mrb[0].mxu0 %v1637
        %v1676 = vpop.f32.mrb[0].mxu0
        %v1677 = vadd.f32 0.0, %v1676
        %v1678 = vpop.f32.mrb[0].mxu0
        %v1679 = vpop.f32.mrb[0].mxu0
        %v1680 = vpop.f32.mrb[0].mxu0
        %1681 = vdwg.mxu0
        %1682 = vrot.lane.b32.xlu0 %v1069, 48
        %v1683 = vpop.permute.xlu0 %1682
        %v1685 = vsel %vm1073, %v1633, 0
        %v1688 = vsel %vm1198, %v1683, 0
        %1690 = vmatprep.subr.bf16.mxu0 0
        %1691 = vmatpush1.bf16.msra.mxu0 %v1688
        %1692 = vmatprep.subr.bf16.mxu0 0
        %1693 = vmatpush1.bf16.msra.mxu0 0
        %1694 = vmatprep.subr.bf16.mxu0 0
        %1695 = vmatpush1.bf16.msra.mxu0 0
        %1696 = vmatprep.subr.bf16.mxu0 0
        %1697 = vmatpush1.bf16.msra.mxu0 0
        %1698 = vmatprep.subr.bf16.mxu0 0
        %1699 = vmatpush1.bf16.msra.mxu0 0
        %1700 = vmatprep.subr.bf16.mxu0 0
        %1701 = vmatpush1.bf16.msra.mxu0 0
        %1702 = vmatprep.subr.bf16.mxu0 0
        %1703 = vmatpush1.bf16.msra.mxu0 0
        %1704 = vmatprep.subr.bf16.mxu0 0
        %1705 = vmatpush1.bf16.msra.mxu0 0
        %1706 = vmatprep.subr.bf16.mxu0 0
        %1707 = vmatpush1.bf16.msra.mxu0 0
        %1708 = vmatprep.subr.bf16.mxu0 0
        %1709 = vmatpush1.bf16.msra.mxu0 0
        %1710 = vmatprep.subr.bf16.mxu0 0
        %1711 = vmatpush1.bf16.msra.mxu0 0
        %1712 = vmatprep.subr.bf16.mxu0 0
        %1713 = vmatpush1.bf16.msra.mxu0 0
        %1714 = vmatprep.subr.bf16.mxu0 0
        %1715 = vmatpush1.bf16.msra.mxu0 0
        %1716 = vmatprep.subr.bf16.mxu0 0
        %1717 = vmatpush1.bf16.msra.mxu0 0
        %1718 = vmatprep.subr.bf16.mxu0 0
        %1719 = vmatpush1.bf16.msra.mxu0 0
        %1720 = vmatprep.subr.bf16.mxu0 0
        %1721 = vmatpush1.bf16.msra.mxu0 0
        %1722 = vmatprep.mubr.bf16.mxu0 0
        %1723 = vmatmul.mubr.bf16.gmra.mrb[0].mxu0 %v1685
        %v1724 = vpop.f32.mrb[0].mxu0
        %v1725 = vadd.f32 0.0, %v1724
        %v1726 = vpop.f32.mrb[0].mxu0
        %v1727 = vpop.f32.mrb[0].mxu0
        %v1728 = vpop.f32.mrb[0].mxu0
        %1729 = vdwg.mxu0
        %1730 = vrot.lane.b32.xlu0 %v1068, 104
        %v1731 = vpop.permute.xlu0 %1730
        %1732 = vrot.lane.b32.xlu0 %v1068, 72
        %v1733 = vpop.permute.xlu0 %1732
        %v1735 = vsel %vm1073, %v1731, 0
        %v1738 = vsel %vm1073, %v1733, 0
        %1740 = vmatprep.subr.bf16.mxu0 0
        %1741 = vmatpush1.bf16.xpose.msra.mxu0 %v1738
        %1742 = vmatprep.subr.bf16.mxu0 0
        %1743 = vmatpush1.bf16.xpose.msra.mxu0 0
        %1744 = vmatprep.subr.bf16.mxu0 0
        %1745 = vmatpush1.bf16.xpose.msra.mxu0 0
        %1746 = vmatprep.subr.bf16.mxu0 0
        %1747 = vmatpush1.bf16.xpose.msra.mxu0 0
        %1748 = vmatprep.subr.bf16.mxu0 0
        %1749 = vmatpush1.bf16.xpose.msra.mxu0 0
        %1750 = vmatprep.subr.bf16.mxu0 0
        %1751 = vmatpush1.bf16.xpose.msra.mxu0 0
        %1752 = vmatprep.subr.bf16.mxu0 0
        %1753 = vmatpush1.bf16.xpose.msra.mxu0 0
        %1754 = vmatprep.subr.bf16.mxu0 0
        %1755 = vmatpush1.bf16.xpose.msra.mxu0 0
        %1756 = vmatprep.subr.bf16.mxu0 0
        %1757 = vmatpush1.bf16.xpose.msra.mxu0 0
        %1758 = vmatprep.subr.bf16.mxu0 0
        %1759 = vmatpush1.bf16.xpose.msra.mxu0 0
        %1760 = vmatprep.subr.bf16.mxu0 0
        %1761 = vmatpush1.bf16.xpose.msra.mxu0 0
        %1762 = vmatprep.subr.bf16.mxu0 0
        %1763 = vmatpush1.bf16.xpose.msra.mxu0 0
        %1764 = vmatprep.subr.bf16.mxu0 0
        %1765 = vmatpush1.bf16.xpose.msra.mxu0 0
        %1766 = vmatprep.subr.bf16.mxu0 0
        %1767 = vmatpush1.bf16.xpose.msra.mxu0 0
        %1768 = vmatprep.subr.bf16.mxu0 0
        %1769 = vmatpush1.bf16.xpose.msra.mxu0 0
        %1770 = vmatprep.subr.bf16.mxu0 0
        %1771 = vmatpush1.bf16.xpose.msra.mxu0 0
        %1772 = vmatprep.mubr.bf16.mxu0 0
        %1773 = vmatmul.mubr.bf16.gmra.mrb[0].mxu0 %v1735
        %v1774 = vpop.f32.mrb[0].mxu0
        %v1775 = vadd.f32 %v1066, %v1774
        %v1776 = vpop.f32.mrb[0].mxu0
        %v1777 = vpop.f32.mrb[0].mxu0
        %v1778 = vpop.f32.mrb[0].mxu0
        %1779 = vdwg.mxu0
        %1780 = vrot.lane.b32.xlu0 %v1069, 104
        %v1781 = vpop.permute.xlu0 %1780
        %1782 = vrot.lane.b32.xlu0 %v1069, 72
        %v1783 = vpop.permute.xlu0 %1782
        %v1785 = vsel %vm1073, %v1781, 0
        %v1788 = vsel %vm1073, %v1783, 0
        %1790 = vmatprep.subr.bf16.mxu0 0
        %1791 = vmatpush1.bf16.xpose.msra.mxu0 %v1788
        %1792 = vmatprep.subr.bf16.mxu0 0
        %1793 = vmatpush1.bf16.xpose.msra.mxu0 0
        %1794 = vmatprep.subr.bf16.mxu0 0
        %1795 = vmatpush1.bf16.xpose.msra.mxu0 0
        %1796 = vmatprep.subr.bf16.mxu0 0
        %1797 = vmatpush1.bf16.xpose.msra.mxu0 0
        %1798 = vmatprep.subr.bf16.mxu0 0
        %1799 = vmatpush1.bf16.xpose.msra.mxu0 0
        %1800 = vmatprep.subr.bf16.mxu0 0
        %1801 = vmatpush1.bf16.xpose.msra.mxu0 0
        %1802 = vmatprep.subr.bf16.mxu0 0
        %1803 = vmatpush1.bf16.xpose.msra.mxu0 0
        %1804 = vmatprep.subr.bf16.mxu0 0
        %1805 = vmatpush1.bf16.xpose.msra.mxu0 0
        %1806 = vmatprep.subr.bf16.mxu0 0
        %1807 = vmatpush1.bf16.xpose.msra.mxu0 0
        %1808 = vmatprep.subr.bf16.mxu0 0
        %1809 = vmatpush1.bf16.xpose.msra.mxu0 0
        %1810 = vmatprep.subr.bf16.mxu0 0
        %1811 = vmatpush1.bf16.xpose.msra.mxu0 0
        %1812 = vmatprep.subr.bf16.mxu0 0
        %1813 = vmatpush1.bf16.xpose.msra.mxu0 0
        %1814 = vmatprep.subr.bf16.mxu0 0
        %1815 = vmatpush1.bf16.xpose.msra.mxu0 0
        %1816 = vmatprep.subr.bf16.mxu0 0
        %1817 = vmatpush1.bf16.xpose.msra.mxu0 0
        %1818 = vmatprep.subr.bf16.mxu0 0
        %1819 = vmatpush1.bf16.xpose.msra.mxu0 0
        %1820 = vmatprep.subr.bf16.mxu0 0
        %1821 = vmatpush1.bf16.xpose.msra.mxu0 0
        %1822 = vmatprep.mubr.bf16.mxu0 0
        %1823 = vmatmul.mubr.bf16.gmra.mrb[0].mxu0 %v1785
        %v1824 = vpop.f32.mrb[0].mxu0
        %v1825 = vadd.f32 %v1067, %v1824
        %v1826 = vpop.f32.mrb[0].mxu0
        %v1827 = vpop.f32.mrb[0].mxu0
        %v1828 = vpop.f32.mrb[0].mxu0
        %1829 = vdwg.mxu0
        %v1830 = vsel %vm1073, %v1775, -inf
        %1831 = vmax.xlane.f32.xlu0 %v1830
        %v1832 = vpop.xlane.xlu0 %1831
        %v1833 = vsel %vm1073, %v1825, -inf
        %1834 = vmax.xlane.f32.xlu0 %v1833
        %v1835 = vpop.xlane.xlu0 %1834
        %v1836 = vsub.f32 %v1775, %v1832
        %v1837 = vsub.f32 %v1825, %v1835
        %v1838 = vmul.f32 %v1836, 1.442695
        %v1839 = vpow.pop %v1838
        %v1840 = vmul.f32 %v1837, 1.442695
        %v1841 = vpow.pop %v1840
        %v1842 = vsel %vm1073, %v1839, 0.0
        %1843 = vadd.xlane.f32.xlu0 %v1842
        %v1844 = vpop.xlane.xlu0 %1843
        %v1845 = vsel %vm1073, %v1841, 0.0
        %1846 = vadd.xlane.f32.xlu0 %v1845
        %v1847 = vpop.xlane.xlu0 %1846
        %v1848 = vrcp.pop %v1844
        %v1849 = vrcp.pop %v1847
        %v1850 = vmul.f32 %v1839, %v1848
        %v1851 = vmul.f32 %v1841, %v1849
        %v1852 = vpack.c.bf16 %v1850, %v1850
        %v1853 = vpack.c.bf16 %v1851, %v1851
        %1854 = vrot.lane.b32.xlu0 %v1068, 40
        %v1855 = vpop.permute.xlu0 %1854
        %v1857 = vsel %vm1073, %v1852, 0
        %v1860 = vsel %vm1198, %v1855, 0
        %1862 = vmatprep.subr.bf16.mxu0 0
        %1863 = vmatpush1.bf16.msra.mxu0 %v1860
        %1864 = vmatprep.subr.bf16.mxu0 0
        %1865 = vmatpush1.bf16.msra.mxu0 0
        %1866 = vmatprep.subr.bf16.mxu0 0
        %1867 = vmatpush1.bf16.msra.mxu0 0
        %1868 = vmatprep.subr.bf16.mxu0 0
        %1869 = vmatpush1.bf16.msra.mxu0 0
        %1870 = vmatprep.subr.bf16.mxu0 0
        %1871 = vmatpush1.bf16.msra.mxu0 0
        %1872 = vmatprep.subr.bf16.mxu0 0
        %1873 = vmatpush1.bf16.msra.mxu0 0
        %1874 = vmatprep.subr.bf16.mxu0 0
        %1875 = vmatpush1.bf16.msra.mxu0 0
        %1876 = vmatprep.subr.bf16.mxu0 0
        %1877 = vmatpush1.bf16.msra.mxu0 0
        %1878 = vmatprep.subr.bf16.mxu0 0
        %1879 = vmatpush1.bf16.msra.mxu0 0
        %1880 = vmatprep.subr.bf16.mxu0 0
        %1881 = vmatpush1.bf16.msra.mxu0 0
        %1882 = vmatprep.subr.bf16.mxu0 0
        %1883 = vmatpush1.bf16.msra.mxu0 0
        %1884 = vmatprep.subr.bf16.mxu0 0
        %1885 = vmatpush1.bf16.msra.mxu0 0
        %1886 = vmatprep.subr.bf16.mxu0 0
        %1887 = vmatpush1.bf16.msra.mxu0 0
        %1888 = vmatprep.subr.bf16.mxu0 0
        %1889 = vmatpush1.bf16.msra.mxu0 0
        %1890 = vmatprep.subr.bf16.mxu0 0
        %1891 = vmatpush1.bf16.msra.mxu0 0
        %1892 = vmatprep.subr.bf16.mxu0 0
        %1893 = vmatpush1.bf16.msra.mxu0 0
        %1894 = vmatprep.mubr.bf16.mxu0 0
        %1895 = vmatmul.mubr.bf16.gmra.mrb[0].mxu0 %v1857
        %v1896 = vpop.f32.mrb[0].mxu0
        %v1897 = vadd.f32 0.0, %v1896
        %v1898 = vpop.f32.mrb[0].mxu0
        %v1899 = vpop.f32.mrb[0].mxu0
        %v1900 = vpop.f32.mrb[0].mxu0
        %1901 = vdwg.mxu0
        %1902 = vrot.lane.b32.xlu0 %v1069, 40
        %v1903 = vpop.permute.xlu0 %1902
        %v1905 = vsel %vm1073, %v1853, 0
        %v1908 = vsel %vm1198, %v1903, 0
        %1910 = vmatprep.subr.bf16.mxu0 0
        %1911 = vmatpush1.bf16.msra.mxu0 %v1908
        %1912 = vmatprep.subr.bf16.mxu0 0
        %1913 = vmatpush1.bf16.msra.mxu0 0
        %1914 = vmatprep.subr.bf16.mxu0 0
        %1915 = vmatpush1.bf16.msra.mxu0 0
        %1916 = vmatprep.subr.bf16.mxu0 0
        %1917 = vmatpush1.bf16.msra.mxu0 0
        %1918 = vmatprep.subr.bf16.mxu0 0
        %1919 = vmatpush1.bf16.msra.mxu0 0
        %1920 = vmatprep.subr.bf16.mxu0 0
        %1921 = vmatpush1.bf16.msra.mxu0 0
        %1922 = vmatprep.subr.bf16.mxu0 0
        %1923 = vmatpush1.bf16.msra.mxu0 0
        %1924 = vmatprep.subr.bf16.mxu0 0
        %1925 = vmatpush1.bf16.msra.mxu0 0
        %1926 = vmatprep.subr.bf16.mxu0 0
        %1927 = vmatpush1.bf16.msra.mxu0 0
        %1928 = vmatprep.subr.bf16.mxu0 0
        %1929 = vmatpush1.bf16.msra.mxu0 0
        %1930 = vmatprep.subr.bf16.mxu0 0
        %1931 = vmatpush1.bf16.msra.mxu0 0
        %1932 = vmatprep.subr.bf16.mxu0 0
        %1933 = vmatpush1.bf16.msra.mxu0 0
        %1934 = vmatprep.subr.bf16.mxu0 0
        %1935 = vmatpush1.bf16.msra.mxu0 0
        %1936 = vmatprep.subr.bf16.mxu0 0
        %1937 = vmatpush1.bf16.msra.mxu0 0
        %1938 = vmatprep.subr.bf16.mxu0 0
        %1939 = vmatpush1.bf16.msra.mxu0 0
        %1940 = vmatprep.subr.bf16.mxu0 0
        %1941 = vmatpush1.bf16.msra.mxu0 0
        %1942 = vmatprep.mubr.bf16.mxu0 0
        %1943 = vmatmul.mubr.bf16.gmra.mrb[0].mxu0 %v1905
        %v1944 = vpop.f32.mrb[0].mxu0
        %v1945 = vadd.f32 0.0, %v1944
        %v1946 = vpop.f32.mrb[0].mxu0
        %v1947 = vpop.f32.mrb[0].mxu0
        %v1948 = vpop.f32.mrb[0].mxu0
        %1949 = vdwg.mxu0
        %1952 = vrot.lane.b32.xlu0 %v1457, 8
        %v1953 = vpop.permute.xlu0 %1952
        %1954 = vrot.lane.b32.xlu0 %v1505, 8
        %v1955 = vpop.permute.xlu0 %1954
        %1960 = vrot.lane.b32.xlu0 %v1677, 16
        %v1961 = vpop.permute.xlu0 %1960
        %1962 = vrot.lane.b32.xlu0 %v1725, 16
        %v1963 = vpop.permute.xlu0 %1962
        %1968 = vrot.lane.b32.xlu0 %v1897, 24
        %v1969 = vpop.permute.xlu0 %1968
        %1970 = vrot.lane.b32.xlu0 %v1945, 24
        %v1971 = vpop.permute.xlu0 %1970
        %v1974 = vsel %vm1073, %v1237, %v1953
        %v1975 = vsel %vm1073, %v1285, %v1955
        %vm1976 = vcmask 130048
        %v1977 = vsel %vm1976, %v1974, %v1961
        %v1978 = vsel %vm1976, %v1975, %v1963
        %vm1979 = vcmask 195584
        %v1980 = vsel %vm1979, %v1977, %v1969
        %v1981 = vsel %vm1979, %v1978, %v1971
        %v1982 = vpack.c.bf16 %v1981, %v1980
        %v1983 = vld [vmem:[%s955] sm:$0xf]
        %v1984 = vld [vmem:[%s955 + $0x4] sm:$0xf]
        %v1985 = vld [vmem:[%s955 + $0x8] sm:$0xf]
        %v1986 = vld [vmem:[%s955 + $0xc] sm:$0xf]
        %v1987 = vld [vmem:[%s808] sm:$0x1]
        %v1989 = vlaneseq
        %v1990 = vshrl.u32 %v1989, 7
        %v1991 = vsub.s32 0, %v1990
        %v1992 = vrot.slane %v1987, %v1991
        %v1998 = vunpack.c.l.b16 %v1983
        %v1999 = vunpack.c.l.b16 %v1984
        %v2000 = vunpack.c.l.b16 %v1985
        %v2001 = vunpack.c.l.b16 %v1986
        %v2002 = vpack.c.b16 %v1999, %v1998
        %v2003 = vpack.c.b16 %v2001, %v2000
        %v2007 = vsel %vm1006, %v1982, 0
        %2009 = vmatprep.subr.bf16.mxu0 0
        %2010 = vmatpush1.bf16.msra.mxu0 %v2002
        %2011 = vmatprep.subr.bf16.mxu0 0
        %2012 = vmatpush1.bf16.msra.mxu0 %v2003
        %2013 = vmatprep.subr.bf16.mxu0 0
        %2014 = vmatpush1.bf16.msra.mxu0 0
        %2015 = vmatprep.subr.bf16.mxu0 0
        %2016 = vmatpush1.bf16.msra.mxu0 0
        %2017 = vmatprep.subr.bf16.mxu0 0
        %2018 = vmatpush1.bf16.msra.mxu0 0
        %2019 = vmatprep.subr.bf16.mxu0 0
        %2020 = vmatpush1.bf16.msra.mxu0 0
        %2021 = vmatprep.subr.bf16.mxu0 0
        %2022 = vmatpush1.bf16.msra.mxu0 0
        %2023 = vmatprep.subr.bf16.mxu0 0
        %2024 = vmatpush1.bf16.msra.mxu0 0
        %2025 = vmatprep.subr.bf16.mxu0 0
        %2026 = vmatpush1.bf16.msra.mxu0 0
        %2027 = vmatprep.subr.bf16.mxu0 0
        %2028 = vmatpush1.bf16.msra.mxu0 0
        %2029 = vmatprep.subr.bf16.mxu0 0
        %2030 = vmatpush1.bf16.msra.mxu0 0
        %2031 = vmatprep.subr.bf16.mxu0 0
        %2032 = vmatpush1.bf16.msra.mxu0 0
        %2033 = vmatprep.subr.bf16.mxu0 0
        %2034 = vmatpush1.bf16.msra.mxu0 0
        %2035 = vmatprep.subr.bf16.mxu0 0
        %2036 = vmatpush1.bf16.msra.mxu0 0
        %2037 = vmatprep.subr.bf16.mxu0 0
        %2038 = vmatpush1.bf16.msra.mxu0 0
        %2039 = vmatprep.subr.bf16.mxu0 0
        %2040 = vmatpush1.bf16.msra.mxu0 0
        %2041 = vmatprep.mubr.bf16.mxu0 0
        %2042 = vmatmul.mubr.bf16.gmra.mrb[0].mxu0 %v2007
        %v2043 = vpop.f32.mrb[0].mxu0
        %v2044 = vadd.f32 %v1992, %v2043
        %v2045 = vpop.f32.mrb[0].mxu0
        %v2046 = vpop.f32.mrb[0].mxu0
        %v2047 = vadd.f32 %v1992, %v2046
        %v2048 = vpop.f32.mrb[0].mxu0
        %2049 = vdwg.mxu0
        %v2050 = vadd.f32 %v980, %v2044
        %v2051 = vadd.f32 %v981, %v2047
        %v2052 = vld [vmem:[%s816] sm:$0x1]
        %v2053 = vld [vmem:[%s824] sm:$0x1]
        %v2054 = vsel %vm1006, %v2050, 0.0
        %2055 = vadd.xlane.f32.xlu0 %v2054
        %v2056 = vpop.xlane.xlu0 %2055
        %v2057 = vsel %vm1006, %v2051, 0.0
        %2058 = vadd.xlane.f32.xlu0 %v2057
        %v2059 = vpop.xlane.xlu0 %2058
        %v2060 = vrcp.pop 32.0
        %v2061 = vmul.f32 %v2056, %v2060
        %v2062 = vmul.f32 %v2059, %v2060
        %v2063 = vsub.f32 %v2050, %v2061
        %v2064 = vsub.f32 %v2051, %v2062
        %v2065 = vmul.f32 %v2063, %v2063
        %v2066 = vmul.f32 %v2064, %v2064
        %v2067 = vsel %vm1006, %v2065, 0.0
        %2068 = vadd.xlane.f32.xlu0 %v2067
        %v2069 = vpop.xlane.xlu0 %2068
        %v2070 = vsel %vm1006, %v2066, 0.0
        %2071 = vadd.xlane.f32.xlu0 %v2070
        %v2072 = vpop.xlane.xlu0 %2071
        %v2073 = vmul.f32 %v2069, %v2060
        %v2074 = vmul.f32 %v2072, %v2060
        %v2075 = vadd.f32 %v2073, 1e-05
        %v2076 = vadd.f32 %v2074, 1e-05
        %v2077 = vrsqrt.pop %v2075
        %v2078 = vrsqrt.pop %v2076
        %v2079 = vmul.f32 %v2063, %v2077
        %v2080 = vmul.f32 %v2064, %v2078
        %v2082 = vlaneseq
        %v2083 = vshrl.u32 %v2082, 7
        %v2084 = vsub.s32 0, %v2083
        %v2085 = vrot.slane %v2052, %v2084
        %v2087 = vmul.f32 %v2079, %v2085
        %v2088 = vmul.f32 %v2080, %v2085
        %v2090 = vlaneseq
        %v2091 = vshrl.u32 %v2090, 7
        %v2092 = vsub.s32 0, %v2091
        %v2093 = vrot.slane %v2053, %v2092
        %v2095 = vadd.f32 %v2087, %v2093
        %v2096 = vadd.f32 %v2088, %v2093
        %v2097 = vpack.c.bf16 %v2096, %v2095
        %v2098 = vld [vmem:[%s960] sm:$0xf]
        %v2099 = vld [vmem:[%s960 + $0x4] sm:$0xf]
        %v2100 = vld [vmem:[%s960 + $0x8] sm:$0xf]
        %v2101 = vld [vmem:[%s960 + $0xc] sm:$0xf]
        %v2102 = vld [vmem:[%s848] sm:$0x1]
        %v2104 = vlaneseq
        %v2105 = vshrl.u32 %v2104, 7
        %v2106 = vsub.s32 0, %v2105
        %v2107 = vrot.slane %v2102, %v2106
        %v2113 = vunpack.c.l.b16 %v2098
        %v2114 = vunpack.c.l.b16 %v2099
        %v2115 = vunpack.c.l.b16 %v2100
        %v2116 = vunpack.c.l.b16 %v2101
        %v2117 = vpack.c.b16 %v2114, %v2113
        %v2118 = vpack.c.b16 %v2116, %v2115
        %v2122 = vsel %vm1006, %v2097, 0
        %2124 = vmatprep.subr.bf16.mxu0 0
        %2125 = vmatpush1.bf16.msra.mxu0 %v2117
        %2126 = vmatprep.subr.bf16.mxu0 0
        %2127 = vmatpush1.bf16.msra.mxu0 %v2118
        %2128 = vmatprep.subr.bf16.mxu0 0
        %2129 = vmatpush1.bf16.msra.mxu0 0
        %2130 = vmatprep.subr.bf16.mxu0 0
        %2131 = vmatpush1.bf16.msra.mxu0 0
        %2132 = vmatprep.subr.bf16.mxu0 0
        %2133 = vmatpush1.bf16.msra.mxu0 0
        %2134 = vmatprep.subr.bf16.mxu0 0
        %2135 = vmatpush1.bf16.msra.mxu0 0
        %2136 = vmatprep.subr.bf16.mxu0 0
        %2137 = vmatpush1.bf16.msra.mxu0 0
        %2138 = vmatprep.subr.bf16.mxu0 0
        %2139 = vmatpush1.bf16.msra.mxu0 0
        %2140 = vmatprep.subr.bf16.mxu0 0
        %2141 = vmatpush1.bf16.msra.mxu0 0
        %2142 = vmatprep.subr.bf16.mxu0 0
        %2143 = vmatpush1.bf16.msra.mxu0 0
        %2144 = vmatprep.subr.bf16.mxu0 0
        %2145 = vmatpush1.bf16.msra.mxu0 0
        %2146 = vmatprep.subr.bf16.mxu0 0
        %2147 = vmatpush1.bf16.msra.mxu0 0
        %2148 = vmatprep.subr.bf16.mxu0 0
        %2149 = vmatpush1.bf16.msra.mxu0 0
        %2150 = vmatprep.subr.bf16.mxu0 0
        %2151 = vmatpush1.bf16.msra.mxu0 0
        %2152 = vmatprep.subr.bf16.mxu0 0
        %2153 = vmatpush1.bf16.msra.mxu0 0
        %2154 = vmatprep.subr.bf16.mxu0 0
        %2155 = vmatpush1.bf16.msra.mxu0 0
        %2156 = vmatprep.mubr.bf16.mxu0 0
        %2157 = vmatmul.mubr.bf16.gmra.mrb[0].mxu0 %v2122
        %v2158 = vpop.f32.mrb[0].mxu0
        %v2159 = vadd.f32 %v2107, %v2158
        %v2160 = vpop.f32.mrb[0].mxu0
        %v2161 = vpop.f32.mrb[0].mxu0
        %v2162 = vadd.f32 %v2107, %v2161
        %v2163 = vpop.f32.mrb[0].mxu0
        %2164 = vdwg.mxu0
        %v2165 = vmax.f32 %v2159, 0.0
        %v2166 = vmax.f32 %v2162, 0.0
        %v2167 = vpack.c.bf16 %v2166, %v2165
        %v2168 = vld [vmem:[%s965] sm:$0xf]
        %v2169 = vld [vmem:[%s965 + $0x4] sm:$0xf]
        %v2170 = vld [vmem:[%s965 + $0x8] sm:$0xf]
        %v2171 = vld [vmem:[%s965 + $0xc] sm:$0xf]
        %v2172 = vld [vmem:[%s965 + $0x10] sm:$0xf]
        %v2173 = vld [vmem:[%s965 + $0x14] sm:$0xf]
        %v2174 = vld [vmem:[%s965 + $0x18] sm:$0xf]
        %v2175 = vld [vmem:[%s965 + $0x1c] sm:$0xf]
        %v2176 = vld [vmem:[%s968] sm:$0x1]
        %v2178 = vlaneseq
        %v2179 = vshrl.u32 %v2178, 7
        %v2180 = vsub.s32 0, %v2179
        %v2181 = vrot.slane %v2176, %v2180
        %v2191 = vunpack.c.l.b16 %v2168
        %v2192 = vunpack.c.l.b16 %v2169
        %v2193 = vunpack.c.l.b16 %v2170
        %v2194 = vunpack.c.l.b16 %v2171
        %v2195 = vunpack.c.l.b16 %v2172
        %v2196 = vunpack.c.l.b16 %v2173
        %v2197 = vunpack.c.l.b16 %v2174
        %v2198 = vunpack.c.l.b16 %v2175
        %v2199 = vpack.c.b16 %v2192, %v2191
        %v2200 = vpack.c.b16 %v2194, %v2193
        %v2201 = vpack.c.b16 %v2196, %v2195
        %v2202 = vpack.c.b16 %v2198, %v2197
        %vm2207 = vcmask 523264
        %v2209 = vsel %vm2207, %v2167, 0
        %2211 = vmatprep.subr.bf16.mxu0 0
        %2212 = vmatpush1.bf16.msra.mxu0 %v2199
        %2213 = vmatprep.subr.bf16.mxu0 0
        %2214 = vmatpush1.bf16.msra.mxu0 %v2200
        %2215 = vmatprep.subr.bf16.mxu0 0
        %2216 = vmatpush1.bf16.msra.mxu0 %v2201
        %2217 = vmatprep.subr.bf16.mxu0 0
        %2218 = vmatpush1.bf16.msra.mxu0 %v2202
        %2219 = vmatprep.subr.bf16.mxu0 0
        %2220 = vmatpush1.bf16.msra.mxu0 0
        %2221 = vmatprep.subr.bf16.mxu0 0
        %2222 = vmatpush1.bf16.msra.mxu0 0
        %2223 = vmatprep.subr.bf16.mxu0 0
        %2224 = vmatpush1.bf16.msra.mxu0 0
        %2225 = vmatprep.subr.bf16.mxu0 0
        %2226 = vmatpush1.bf16.msra.mxu0 0
        %2227 = vmatprep.subr.bf16.mxu0 0
        %2228 = vmatpush1.bf16.msra.mxu0 0
        %2229 = vmatprep.subr.bf16.mxu0 0
        %2230 = vmatpush1.bf16.msra.mxu0 0
        %2231 = vmatprep.subr.bf16.mxu0 0
        %2232 = vmatpush1.bf16.msra.mxu0 0
        %2233 = vmatprep.subr.bf16.mxu0 0
        %2234 = vmatpush1.bf16.msra.mxu0 0
        %2235 = vmatprep.subr.bf16.mxu0 0
        %2236 = vmatpush1.bf16.msra.mxu0 0
        %2237 = vmatprep.subr.bf16.mxu0 0
        %2238 = vmatpush1.bf16.msra.mxu0 0
        %2239 = vmatprep.subr.bf16.mxu0 0
        %2240 = vmatpush1.bf16.msra.mxu0 0
        %2241 = vmatprep.subr.bf16.mxu0 0
        %2242 = vmatpush1.bf16.msra.mxu0 0
        %2243 = vmatprep.mubr.bf16.mxu0 0
        %2244 = vmatmul.mubr.bf16.gmra.mrb[0].mxu0 %v2209
        %v2245 = vpop.f32.mrb[0].mxu0
        %v2246 = vadd.f32 %v2181, %v2245
        %v2247 = vpop.f32.mrb[0].mxu0
        %v2248 = vpop.f32.mrb[0].mxu0
        %v2249 = vadd.f32 %v2181, %v2248
        %v2250 = vpop.f32.mrb[0].mxu0
        %2251 = vdwg.mxu0
        %v2252 = vadd.f32 %v2095, %v2246
        %v2253 = vadd.f32 %v2096, %v2249
        %v2254 = vld [vmem:[%s832] sm:$0x1]
        %v2255 = vld [vmem:[%s840] sm:$0x1]
        %v2256 = vsel %vm1006, %v2252, 0.0
        %2257 = vadd.xlane.f32.xlu0 %v2256
        %v2258 = vpop.xlane.xlu0 %2257
        %v2259 = vsel %vm1006, %v2253, 0.0
        %2260 = vadd.xlane.f32.xlu0 %v2259
        %v2261 = vpop.xlane.xlu0 %2260
        %v2262 = vmul.f32 %v2258, %v2060
        %v2263 = vmul.f32 %v2261, %v2060
        %v2264 = vsub.f32 %v2252, %v2262
        %v2265 = vsub.f32 %v2253, %v2263
        %v2266 = vmul.f32 %v2264, %v2264
        %v2267 = vmul.f32 %v2265, %v2265
        %v2268 = vsel %vm1006, %v2266, 0.0
        %2269 = vadd.xlane.f32.xlu0 %v2268
        %v2270 = vpop.xlane.xlu0 %2269
        %v2271 = vsel %vm1006, %v2267, 0.0
        %2272 = vadd.xlane.f32.xlu0 %v2271
        %v2273 = vpop.xlane.xlu0 %2272
        %v2274 = vmul.f32 %v2270, %v2060
        %v2275 = vmul.f32 %v2273, %v2060
        %v2276 = vadd.f32 %v2274, 1e-05
        %v2277 = vadd.f32 %v2275, 1e-05
        %v2278 = vrsqrt.pop %v2276
        %v2279 = vrsqrt.pop %v2277
        %v2280 = vmul.f32 %v2264, %v2278
        %v2281 = vmul.f32 %v2265, %v2279
        %v2283 = vlaneseq
        %v2284 = vshrl.u32 %v2283, 7
        %v2285 = vsub.s32 0, %v2284
        %v2286 = vrot.slane %v2254, %v2285
        %v2288 = vmul.f32 %v2280, %v2286
        %v2289 = vmul.f32 %v2281, %v2286
        %v2291 = vlaneseq
        %v2292 = vshrl.u32 %v2291, 7
        %v2293 = vsub.s32 0, %v2292
        %v2294 = vrot.slane %v2255, %v2293
        %v2296 = vadd.f32 %v2288, %v2294
        %v2297 = vadd.f32 %v2289, %v2294
        %p2298 = scmp.lt.s32.totalorder %s50, 1
        // Predicated region
        $region141: #{tpu_custom_call.1} parent=95 // pred_check
          %p2299 = pneg %p2298
        $region142: #{tpu_custom_call.1} parent=95 // pred_check_branch
          %2301 = sbr.rel (%p2299) target = $region144
        $region143: #{tpu_custom_call.1} parent=95 // pred_region
          %2302 = vst.msk [vmem:[#allocation2] sm:$0xff] %vm1006, %v2296
          %2303 = vst.msk [vmem:[#allocation2 + $0x8] sm:$0xff] %vm1006, %v2297
        $region144: #{tpu_custom_call.1} parent=95 // pred_fallthru
          _
        %p2304 = scmp.eq.s32.totalorder %s50, 1
        // Predicated region
        $region145: #{tpu_custom_call.1} parent=95 // pred_check
          %p2305 = pneg %p2304
        $region146: #{tpu_custom_call.1} parent=95 // pred_check_branch
          %2307 = sbr.rel (%p2305) target = $region148
        $region147: #{tpu_custom_call.1} parent=95 // pred_region
          %v2308 = vld [vmem:[%s15] sm:$0x1]
          %v2309 = vld [vmem:[%s16] sm:$0x1]
          %v2310 = vsel %vm1006, %v2296, 0.0
          %2311 = vadd.xlane.f32.xlu0 %v2310
          %v2312 = vpop.xlane.xlu0 %2311
          %v2313 = vsel %vm1006, %v2297, 0.0
          %2314 = vadd.xlane.f32.xlu0 %v2313
          %v2315 = vpop.xlane.xlu0 %2314
          %v2316 = vmul.f32 %v2312, %v2060
          %v2317 = vmul.f32 %v2315, %v2060
          %v2318 = vsub.f32 %v2296, %v2316
          %v2319 = vsub.f32 %v2297, %v2317
          %v2320 = vmul.f32 %v2318, %v2318
          %v2321 = vmul.f32 %v2319, %v2319
          %v2322 = vsel %vm1006, %v2320, 0.0
          %2323 = vadd.xlane.f32.xlu0 %v2322
          %v2324 = vpop.xlane.xlu0 %2323
          %v2325 = vsel %vm1006, %v2321, 0.0
          %2326 = vadd.xlane.f32.xlu0 %v2325
          %v2327 = vpop.xlane.xlu0 %2326
          %v2328 = vmul.f32 %v2324, %v2060
          %v2329 = vmul.f32 %v2327, %v2060
          %v2330 = vadd.f32 %v2328, 1e-05
          %v2331 = vadd.f32 %v2329, 1e-05
          %v2332 = vrsqrt.pop %v2330
          %v2333 = vrsqrt.pop %v2331
          %v2334 = vmul.f32 %v2318, %v2332
          %v2335 = vmul.f32 %v2319, %v2333
          %v2337 = vlaneseq
          %v2338 = vshrl.u32 %v2337, 7
          %v2339 = vsub.s32 0, %v2338
          %v2340 = vrot.slane %v2308, %v2339
          %v2342 = vmul.f32 %v2334, %v2340
          %v2343 = vmul.f32 %v2335, %v2340
          %v2345 = vlaneseq
          %v2346 = vshrl.u32 %v2345, 7
          %v2347 = vsub.s32 0, %v2346
          %v2348 = vrot.slane %v2309, %v2347
          %v2350 = vadd.f32 %v2342, %v2348
          %v2351 = vadd.f32 %v2343, %v2348
          %v2352 = vpack.c.bf16 %v2351, %v2350
          %v2353 = vld [vmem:[%s17] sm:$0xf]
          %v2354 = vld [vmem:[%s17 + $0x4] sm:$0xf]
          %v2355 = vld [vmem:[%s17 + $0x8] sm:$0xf]
          %v2356 = vld [vmem:[%s17 + $0xc] sm:$0xf]
          %v2357 = vld [vmem:[%s18] sm:$0x1]
          %v2359 = vlaneseq
          %v2360 = vshrl.u32 %v2359, 7
          %v2361 = vsub.s32 0, %v2360
          %v2362 = vrot.slane %v2357, %v2361
          %v2368 = vunpack.c.l.b16 %v2353
          %v2369 = vunpack.c.l.b16 %v2354
          %v2370 = vunpack.c.l.b16 %v2355
          %v2371 = vunpack.c.l.b16 %v2356
          %v2372 = vpack.c.b16 %v2369, %v2368
          %v2373 = vpack.c.b16 %v2371, %v2370
          %v2377 = vsel %vm1006, %v2352, 0
          %2379 = vmatprep.subr.bf16.mxu0 0
          %2380 = vmatpush1.bf16.msra.mxu0 %v2372
          %2381 = vmatprep.subr.bf16.mxu0 0
          %2382 = vmatpush1.bf16.msra.mxu0 %v2373
          %2383 = vmatprep.subr.bf16.mxu0 0
          %2384 = vmatpush1.bf16.msra.mxu0 0
          %2385 = vmatprep.subr.bf16.mxu0 0
          %2386 = vmatpush1.bf16.msra.mxu0 0
          %2387 = vmatprep.subr.bf16.mxu0 0
          %2388 = vmatpush1.bf16.msra.mxu0 0
          %2389 = vmatprep.subr.bf16.mxu0 0
          %2390 = vmatpush1.bf16.msra.mxu0 0
          %2391 = vmatprep.subr.bf16.mxu0 0
          %2392 = vmatpush1.bf16.msra.mxu0 0
          %2393 = vmatprep.subr.bf16.mxu0 0
          %2394 = vmatpush1.bf16.msra.mxu0 0
          %2395 = vmatprep.subr.bf16.mxu0 0
          %2396 = vmatpush1.bf16.msra.mxu0 0
          %2397 = vmatprep.subr.bf16.mxu0 0
          %2398 = vmatpush1.bf16.msra.mxu0 0
          %2399 = vmatprep.subr.bf16.mxu0 0
          %2400 = vmatpush1.bf16.msra.mxu0 0
          %2401 = vmatprep.subr.bf16.mxu0 0
          %2402 = vmatpush1.bf16.msra.mxu0 0
          %2403 = vmatprep.subr.bf16.mxu0 0
          %2404 = vmatpush1.bf16.msra.mxu0 0
          %2405 = vmatprep.subr.bf16.mxu0 0
          %2406 = vmatpush1.bf16.msra.mxu0 0
          %2407 = vmatprep.subr.bf16.mxu0 0
          %2408 = vmatpush1.bf16.msra.mxu0 0
          %2409 = vmatprep.subr.bf16.mxu0 0
          %2410 = vmatpush1.bf16.msra.mxu0 0
          %2411 = vmatprep.mubr.bf16.mxu0 0
          %2412 = vmatmul.mubr.bf16.gmra.mrb[0].mxu0 %v2377
          %v2413 = vpop.f32.mrb[0].mxu0
          %v2414 = vadd.f32 %v2362, %v2413
          %v2415 = vpop.f32.mrb[0].mxu0
          %v2416 = vpop.f32.mrb[0].mxu0
          %v2417 = vadd.f32 %v2362, %v2416
          %v2418 = vpop.f32.mrb[0].mxu0
          %2419 = vdwg.mxu0
          %2420 = vst [vmem:[#allocation20] sm:$0xff] %v2414
          %2421 = vst [vmem:[#allocation20 + $0x8] sm:$0xff] %v2417
        $region148: #{tpu_custom_call.1} parent=95 // pred_fallthru
          _
        // Predicated region
        $region149: #{tpu_custom_call.1} parent=95 // pred_check
          %p2422 = pneg %p544
        $region150: #{tpu_custom_call.1} parent=95 // pred_check_branch
          %2424 = sbr.rel (%p2422) target = $region152
        $region151: #{tpu_custom_call.1} parent=95 // pred_region
          %s2425 = smul.u32 2, %s49
          %s2427 = ssub.s32 256, 256
          %2428 = vsyncadd [#allocation5], %s2427
          %s2429 = smul.addr %s2425, 128
          %s2430 = scalar_lea.hbm %s19, %s2429
          %s2431 = sshll.u32 [#allocation20], 4
          %s2432 = int_to_ptr.vmem [resolvable:$true] %s2431
          %2437 = dma.vmem_to_hbm [thread:$0]  %s2432, 256, %s2430, [#allocation5], 128, 128, 8
        $region152: #{tpu_custom_call.1} parent=95 // pred_fallthru
          _
        // Predicated region
        $region153: #{tpu_custom_call.1} parent=95 // pred_check
          %p2438 = pneg %p544
        $region154: #{tpu_custom_call.1} parent=95 // pred_check_branch
          %2440 = sbr.rel (%p2438) target = $region156
        $region155: #{tpu_custom_call.1} parent=95 // pred_region
          %2441 = dma.done [#allocation5], 256
        $region156: #{tpu_custom_call.1} parent=95 // pred_fallthru
          _
      $region96: #{tpu_custom_call.1} parent=5 // pred_fallthru
        _
      %p2442 = scmp.le.s32.totalorder 2, %s40
      // Predicated region
      $region157: #{tpu_custom_call.1} parent=5 // pred_check
        %p2443 = pneg %p2442
      $region158: #{tpu_custom_call.1} parent=5 // pred_check_branch
        %2445 = sbr.rel (%p2443) target = $region160
      $region159: #{tpu_custom_call.1} parent=5 // pred_region
        %s2446 = ssub.s32 %s40, 2
      $region160: #{tpu_custom_call.1} parent=5 // pred_fallthru
        _
    $region6: #{tpu_custom_call.1} parent=1 // loop_footer
      %s44 = sadd.s32 1, %s40
    $region7: #{tpu_custom_call.1} parent=1 // loop_footer_branch
      %39 = sbr.rel target = $region3
    $region8: #{tpu_custom_call.1} parent=1 // loop_exit
      _
    %2447 = vsyncpa [#allocation4], 1
    %s2448 = scalar_lea.sflag [#allocation4], 1
    %2449 = vsyncpa %s2448, 1
    %2450 = vsyncpa [#allocation7], 1
    %2451 = vsyncpa [#allocation10], 1
    %s2452 = scalar_lea.sflag [#allocation10], 1
    %2453 = vsyncpa %s2452, 1
    %2454 = vsyncpa [#allocation13], 1
    %s2455 = scalar_lea.sflag [#allocation13], 1
    %2456 = vsyncpa %s2455, 1
    %2457 = vsyncpa [#allocation16], 1
    %s2458 = scalar_lea.sflag [#allocation16], 1
    %2459 = vsyncpa %s2458, 1
    %2460 = vsyncpa [#allocation19], 1
    %s2461 = scalar_lea.sflag [#allocation19], 1
    %2462 = vsyncpa %s2461, 1
    %2463 = vsyncpa [#allocation5], 1
    %s2464 = scalar_lea.sflag [#allocation5], 1
    %2465 = vsyncpa %s2464, 1

</llo_original>
